<compile_context>
chip_gen: v6e
topology: v6e:2x2x1
jax: 0.10.0
libtpu: 0.0.40
codegen_flags: <defaults>
</compile_context>

<pallas_src>
import functools

import jax
import jax.numpy as jnp
from jax.experimental import pallas as pl
from jax.experimental.pallas import tpu as pltpu


def _choose_tile(n, max_tile, multiple):
    """Largest tile <= max_tile that divides n and is a multiple of `multiple`.
    Falls back to the full extent (a full-dim block is always legal)."""
    if n <= max_tile:
        return n
    t = (max_tile // multiple) * multiple
    while t >= multiple:
        if n % t == 0:
            return t
        t -= multiple
    return n


def _proj_kernel(x_ref, wall_ref, wl_ref, wr_ref, feat_ref, elt_ref, er_ref):
    x = x_ref[...]                                              # (T, F_in) f32
    # One wide projection for all heads (bf16 operands, f32 accumulation on the MXU).
    feat = jnp.dot(x.astype(jnp.bfloat16), wall_ref[...],
                   preferred_element_type=jnp.float32)          # (T, H*D)
    feat_ref[...] = feat.astype(jnp.bfloat16)
    # attn_l / attn_r folded into the projection: logits come out of tiny MXU matmuls
    # instead of per-head cross-lane reductions.  Kept in f32 for softmax precision.
    el = jnp.dot(x, wl_ref[...], preferred_element_type=jnp.float32)   # (T, H)
    er = jnp.dot(x, wr_ref[...], preferred_element_type=jnp.float32)   # (T, H)
    elt_ref[...] = jnp.transpose(el)                            # (H, T): lane-dense store
    er_ref[...] = er


def _attn_kernel(adj_ref, er_ref, elt_ref, feat_ref, bias_ref, out_ref, *,
                 num_heads, out_feats, negative_slope):
    # Edge mask for this dst tile (adjacency may be int8 / bf16 / f32).
    mask = adj_ref[...].astype(jnp.float32) > 0.0               # (T, N_src)
    er = er_ref[...]                                            # (T, H)   f32
    elt = elt_ref[...]                                          # (H, N)   f32
    feat = feat_ref[...]                                        # (N, H*D) bf16
    neg_big = jnp.float32(-1e30)
    slope = jnp.float32(negative_slope)

    outs = []
    for h in range(num_heads):                                  # H is small & static
        e = er[:, h:h + 1] + elt[h:h + 1, :]                    # (T, N) = er[v] + el[u]
        e = jnp.where(e >= 0.0, e, slope * e)                   # leaky_relu
        e = jnp.where(mask, e, neg_big)                         # mask non-edges
        m = jnp.max(e, axis=-1, keepdims=True)                  # (T, 1)
        p = jnp.exp(e - m)                                      # masked entries -> exactly 0
        s = jnp.sum(p, axis=-1, keepdims=True)                  # (T, 1)  (>= 1: self-loops)
        f_h = feat[:, h * out_feats:(h + 1) * out_feats]        # (N, D) bf16
        acc = jnp.dot(p.astype(jnp.bfloat16), f_h,
                      preferred_element_type=jnp.float32)       # (T, D)
        # Normalize AFTER the aggregation matmul; reciprocal on the EUP slot.
        outs.append(acc * pl.reciprocal(s, approx=True))
    out_ref[...] = jnp.concatenate(outs, axis=-1) + bias_ref[...]


def gat_conv_forward(x, adj, W, attn_l, attn_r, bias, *, num_heads, out_feats,
                     negative_slope=0.2):
    N, f_in = x.shape
    H, D = num_heads, out_feats
    assert W.shape == (H, f_in, D)
    assert adj.shape == (N, N)

    # --- parameter repack (tiny, one-time; a real module would cache these) ---
    w_all = jnp.transpose(W, (1, 0, 2)).reshape(f_in, H * D).astype(jnp.bfloat16)
    w_l = jnp.einsum("hfd,hd->fh", W, attn_l[:, 0, :]).astype(jnp.float32)   # (F_in, H)
    w_r = jnp.einsum("hfd,hd->fh", W, attn_r[:, 0, :]).astype(jnp.float32)   # (F_in, H)
    bias_flat = bias[:, 0, :].reshape(1, H * D).astype(jnp.float32)

    # tile_src also appears as a lane dim (el^T output) -> multiple of 128 (or full).
    tile_src = _choose_tile(N, 512, 128)
    # tile_dst is a sublane dim only; 32 also covers int8 adjacency packing.
    tile_dst = _choose_tile(N, 128, 32)

    cparams = pltpu.CompilerParams(
        dimension_semantics=("parallel",),
        vmem_limit_bytes=64 * 1024 * 1024)   # explicit limit (v7x has 64 MiB VMEM total)

    # ---- Kernel A: fused all-head projection + folded attention logits ----
    feat, el_t, er = pl.pallas_call(
        _proj_kernel,
        out_shape=(jax.ShapeDtypeStruct((N, H * D), jnp.bfloat16),
                   jax.ShapeDtypeStruct((H, N), jnp.float32),
                   jax.ShapeDtypeStruct((N, H), jnp.float32)),
        grid_spec=pltpu.PrefetchScalarGridSpec(
            num_scalar_prefetch=0,
            grid=(pl.cdiv(N, tile_src),),
            in_specs=[
                pl.BlockSpec((tile_src, f_in), lambda i: (i, 0)),   # x tile
                pl.BlockSpec((f_in, H * D), lambda i: (0, 0)),      # W_all (resident)
                pl.BlockSpec((f_in, H), lambda i: (0, 0)),          # w_l   (resident)
                pl.BlockSpec((f_in, H), lambda i: (0, 0)),          # w_r   (resident)
            ],
            out_specs=[
                pl.BlockSpec((tile_src, H * D), lambda i: (i, 0)),  # feat
                pl.BlockSpec((H, tile_src), lambda i: (0, i)),      # el^T (lane-dense)
                pl.BlockSpec((tile_src, H), lambda i: (i, 0)),      # er
            ]),
        compiler_params=cparams,
    )(x, w_all, w_l, w_r)

    # ---- Kernel B: masked edge softmax + aggregation, tiled over dst rows ----
    kernel_b = functools.partial(_attn_kernel, num_heads=H, out_feats=D,
                                 negative_slope=negative_slope)
    out = pl.pallas_call(
        kernel_b,
        out_shape=jax.ShapeDtypeStruct((N, H * D), jnp.float32),
        grid_spec=pltpu.PrefetchScalarGridSpec(
            num_scalar_prefetch=0,
            grid=(pl.cdiv(N, tile_dst),),
            in_specs=[
                pl.BlockSpec((tile_dst, N), lambda i: (i, 0)),      # adj (dst-tiled, int8)
                pl.BlockSpec((tile_dst, H), lambda i: (i, 0)),      # er  (dst-tiled)
                pl.BlockSpec((H, N), lambda i: (0, 0)),             # el^T (resident)
                pl.BlockSpec((N, H * D), lambda i: (0, 0)),         # feat (resident)
                pl.BlockSpec((1, H * D), lambda i: (0, 0)),         # bias
            ],
            out_specs=pl.BlockSpec((tile_dst, H * D), lambda i: (i, 0))),
        compiler_params=cparams,
    )(adj, er, el_t, feat, bias_flat)

    return out   # (N, H*D): concat_out=True layout, no wrapper transpose needed


def _reference(x, adj, W, attn_l, attn_r, bias, negative_slope=0.2):
    # Pure-JAX f32 reference of the same math (correctness check).
    H, f_in, D = W.shape
    N = x.shape[0]
    feat = jnp.einsum("nf,hfd->nhd", x, W)                      # (N, H, D)
    el = jnp.sum(feat * attn_l[:, 0][None], axis=-1)            # (N, H)
    er = jnp.sum(feat * attn_r[:, 0][None], axis=-1)            # (N, H)
    e = er[:, None, :] + el[None, :, :]                         # (N_dst, N_src, H)
    e = jnp.where(e >= 0, e, negative_slope * e)
    mask = adj[..., None] > 0
    e = jnp.where(mask, e, -1e30)
    m = jnp.max(e, axis=1, keepdims=True)
    p = jnp.exp(e - m) * adj[..., None]
    a = p / jnp.sum(p, axis=1, keepdims=True)
    rst = jnp.einsum("vuh,uhd->vhd", a, feat) + bias[:, 0][None]
    return rst.reshape(N, H * D)


if __name__ == "__main__":
    key = jax.random.PRNGKey(0)
    N, F_IN, OUT_FEATS, NUM_HEADS = 256, 32, 16, 4
    NEG_SLOPE = 0.2

    k_x, k_adj, k_w, k_al, k_ar = jax.random.split(key, 5)

    # Node features.
    x = jax.random.normal(k_x, (N, F_IN), dtype=jnp.float32)

    # Random sparse adjacency with self-loops (module raises on 0-in-degree nodes).
    adj_f = (jax.random.uniform(k_adj, (N, N)) < 0.05).astype(jnp.float32)
    adj_f = jnp.maximum(adj_f, jnp.eye(N, dtype=jnp.float32))
    adj_i8 = adj_f.astype(jnp.int8)          # int8 mask: 4x smaller N^2 HBM/VMEM stream

    # Deterministic parameter init (xavier_normal, gain = calculate_gain('relu') = sqrt(2)).
    gain = jnp.sqrt(2.0)
    std_fc = gain * jnp.sqrt(2.0 / (F_IN + NUM_HEADS * OUT_FEATS))
    W = std_fc * jax.random.normal(k_w, (NUM_HEADS, F_IN, OUT_FEATS), dtype=jnp.float32)
    std_attn = gain * jnp.sqrt(2.0 / (NUM_HEADS + OUT_FEATS))
    attn_l = std_attn * jax.random.normal(k_al, (NUM_HEADS, 1, OUT_FEATS), dtype=jnp.float32)
    attn_r = std_attn * jax.random.normal(k_ar, (NUM_HEADS, 1, OUT_FEATS), dtype=jnp.float32)
    bias = jnp.zeros((NUM_HEADS, 1, OUT_FEATS), dtype=jnp.float32)  # reset_parameters -> 0

    fwd = jax.jit(functools.partial(gat_conv_forward,
                                    num_heads=NUM_HEADS, out_feats=OUT_FEATS,
                                    negative_slope=NEG_SLOPE))
    out = jax.block_until_ready(fwd(x, adj_i8, W, attn_l, attn_r, bias))

    ref = _reference(x, adj_f, W, attn_l, attn_r, bias, NEG_SLOPE)
    assert out.shape == (N, NUM_HEADS * OUT_FEATS)
    max_err = float(jnp.max(jnp.abs(out - ref)))
    # bf16 MXU operands (f32 accumulation) -> small deviation vs the pure-f32 reference.
    assert jnp.allclose(out, ref, rtol=2e-2, atol=2e-2), f"max_abs_err={max_err}"

    print("KERNEL_OK")
</pallas_src>

<mosaic_0001>
module attributes {stable_mosaic.version = 11 : i64} {
  func.func @_proj_kernel(%arg0: i32, %arg1: memref<256x32xf32, #tpu.memory_space<vmem>>, %arg2: memref<32x64xbf16, #tpu.memory_space<vmem>>, %arg3: memref<32x4xf32, #tpu.memory_space<vmem>>, %arg4: memref<32x4xf32, #tpu.memory_space<vmem>>, %arg5: memref<256x64xbf16, #tpu.memory_space<vmem>>, %arg6: memref<4x256xf32, #tpu.memory_space<vmem>>, %arg7: memref<256x4xf32, #tpu.memory_space<vmem>>) attributes {dimension_semantics = [#tpu.dimension_semantics<parallel>], iteration_bounds = array<i64: 1>, scalar_prefetch = 0 : i64, scratch_operands = 0 : i64, tpu.core_type = #tpu.core_type<tc>, window_params = [{transform_indices = @transform_0, window_bounds = array<i64: 256, 32>}, {pipeline_mode = #tpu.pipeline_mode<synchronous>, transform_indices = @transform_1, window_bounds = array<i64: 32, 64>}, {pipeline_mode = #tpu.pipeline_mode<synchronous>, transform_indices = @transform_2, window_bounds = array<i64: 32, 4>}, {pipeline_mode = #tpu.pipeline_mode<synchronous>, transform_indices = @transform_3, window_bounds = array<i64: 32, 4>}, {transform_indices = @transform_4, window_bounds = array<i64: 256, 64>}, {transform_indices = @transform_5, window_bounds = array<i64: 4, 256>}, {transform_indices = @transform_6, window_bounds = array<i64: 256, 4>}]} {
    %c0 = arith.constant 0 : index
    %c0_0 = arith.constant 0 : index
    %0 = vector.load %arg1[%c0, %c0_0] : memref<256x32xf32, #tpu.memory_space<vmem>>, vector<256x32xf32>
    %1 = arith.truncf %0 : vector<256x32xf32> to vector<256x32xbf16>
    %c0_1 = arith.constant 0 : index
    %c0_2 = arith.constant 0 : index
    %2 = vector.load %arg2[%c0_1, %c0_2] : memref<32x64xbf16, #tpu.memory_space<vmem>>, vector<32x64xbf16>
    %cst = arith.constant dense<0.000000e+00> : vector<256x64xf32>
    %3 = tpu.matmul %1, %2, %cst {dimension_numbers = #tpu.dot_dimension_numbers<[1], [0], [0], [1], [0, 0, 1, 1], [], []>} : vector<256x32xbf16>, vector<32x64xbf16>, vector<256x64xf32> -> vector<256x64xf32>
    %4 = arith.truncf %3 : vector<256x64xf32> to vector<256x64xbf16>
    %c0_3 = arith.constant 0 : index
    %c0_4 = arith.constant 0 : index
    %5 = vector.load %arg5[%c0_3, %c0_4] : memref<256x64xbf16, #tpu.memory_space<vmem>>, vector<256x64xbf16>
    tpu.vector_store %arg5[%c0_3, %c0_4], %4 {strides = array<i32>} : memref<256x64xbf16, #tpu.memory_space<vmem>>, vector<256x64xbf16>,
    %c0_5 = arith.constant 0 : index
    %c0_6 = arith.constant 0 : index
    %6 = vector.load %arg3[%c0_5, %c0_6] : memref<32x4xf32, #tpu.memory_space<vmem>>, vector<32x4xf32>
    %cst_7 = arith.constant dense<0.000000e+00> : vector<256x4xf32>
    %7 = tpu.matmul %0, %6, %cst_7 {dimension_numbers = #tpu.dot_dimension_numbers<[1], [0], [0], [1], [0, 0, 1, 1], [], []>} : vector<256x32xf32>, vector<32x4xf32>, vector<256x4xf32> -> vector<256x4xf32>
    %c0_8 = arith.constant 0 : index
    %c0_9 = arith.constant 0 : index
    %8 = vector.load %arg4[%c0_8, %c0_9] : memref<32x4xf32, #tpu.memory_space<vmem>>, vector<32x4xf32>
    %cst_10 = arith.constant dense<0.000000e+00> : vector<256x4xf32>
    %9 = tpu.matmul %0, %8, %cst_10 {dimension_numbers = #tpu.dot_dimension_numbers<[1], [0], [0], [1], [0, 0, 1, 1], [], []>} : vector<256x32xf32>, vector<32x4xf32>, vector<256x4xf32> -> vector<256x4xf32>
    %10 = tpu.transpose %7, [1, 0] : vector<256x4xf32> -> vector<4x256xf32>
    %c0_11 = arith.constant 0 : index
    %c0_12 = arith.constant 0 : index
    %11 = vector.load %arg6[%c0_11, %c0_12] : memref<4x256xf32, #tpu.memory_space<vmem>>, vector<4x256xf32>
    tpu.vector_store %arg6[%c0_11, %c0_12], %10 {strides = array<i32>} : memref<4x256xf32, #tpu.memory_space<vmem>>, vector<4x256xf32>,
    %c0_13 = arith.constant 0 : index
    %c0_14 = arith.constant 0 : index
    %12 = vector.load %arg7[%c0_13, %c0_14] : memref<256x4xf32, #tpu.memory_space<vmem>>, vector<256x4xf32>
    tpu.vector_store %arg7[%c0_13, %c0_14], %9 {strides = array<i32>} : memref<256x4xf32, #tpu.memory_space<vmem>>, vector<256x4xf32>,
    return
  }
  func.func @transform_0(%arg0: i32) -> (i32, i32) {
    %c0_i32 = arith.constant 0 : i32
    %c0_i32_0 = arith.constant 0 : i32
    return %arg0, %c0_i32 : i32, i32
  }
  func.func @transform_1(%arg0: i32) -> (i32, i32) {
    %c0_i32 = arith.constant 0 : i32
    %c0_i32_0 = arith.constant 0 : i32
    %c0_i32_1 = arith.constant 0 : i32
    return %c0_i32, %c0_i32_0 : i32, i32
  }
  func.func @transform_2(%arg0: i32) -> (i32, i32) {
    %c0_i32 = arith.constant 0 : i32
    %c0_i32_0 = arith.constant 0 : i32
    %c0_i32_1 = arith.constant 0 : i32
    return %c0_i32, %c0_i32_0 : i32, i32
  }
  func.func @transform_3(%arg0: i32) -> (i32, i32) {
    %c0_i32 = arith.constant 0 : i32
    %c0_i32_0 = arith.constant 0 : i32
    %c0_i32_1 = arith.constant 0 : i32
    return %c0_i32, %c0_i32_0 : i32, i32
  }
  func.func @transform_4(%arg0: i32) -> (i32, i32) {
    %c0_i32 = arith.constant 0 : i32
    %c0_i32_0 = arith.constant 0 : i32
    return %arg0, %c0_i32 : i32, i32
  }
  func.func @transform_5(%arg0: i32) -> (i32, i32) {
    %c0_i32 = arith.constant 0 : i32
    %c0_i32_0 = arith.constant 0 : i32
    return %c0_i32, %arg0 : i32, i32
  }
  func.func @transform_6(%arg0: i32) -> (i32, i32) {
    %c0_i32 = arith.constant 0 : i32
    %c0_i32_0 = arith.constant 0 : i32
    return %arg0, %c0_i32 : i32, i32
  }
}

module attributes {stable_mosaic.version = 11 : i64} {
  func.func @_attn_kernel(%arg0: i32, %arg1: memref<128x256xi8, #tpu.memory_space<vmem>>, %arg2: memref<128x4xf32, #tpu.memory_space<vmem>>, %arg3: memref<4x256xf32, #tpu.memory_space<vmem>>, %arg4: memref<256x64xbf16, #tpu.memory_space<vmem>>, %arg5: memref<1x64xf32, #tpu.memory_space<vmem>>, %arg6: memref<128x64xf32, #tpu.memory_space<vmem>>) attributes {dimension_semantics = [#tpu.dimension_semantics<parallel>], iteration_bounds = array<i64: 2>, scalar_prefetch = 0 : i64, scratch_operands = 0 : i64, tpu.core_type = #tpu.core_type<tc>, window_params = [{transform_indices = @transform_0, window_bounds = array<i64: 128, 256>}, {transform_indices = @transform_1, window_bounds = array<i64: 128, 4>}, {pipeline_mode = #tpu.pipeline_mode<synchronous>, transform_indices = @transform_2, window_bounds = array<i64: 4, 256>}, {pipeline_mode = #tpu.pipeline_mode<synchronous>, transform_indices = @transform_3, window_bounds = array<i64: 256, 64>}, {pipeline_mode = #tpu.pipeline_mode<synchronous>, transform_indices = @transform_4, window_bounds = array<i64: 1, 64>}, {transform_indices = @transform_5, window_bounds = array<i64: 128, 64>}]} {
    %c0 = arith.constant 0 : index
    %c0_0 = arith.constant 0 : index
    %0 = vector.load %arg1[%c0, %c0_0] : memref<128x256xi8, #tpu.memory_space<vmem>>, vector<128x256xi8>
    %1 = arith.sitofp %0 : vector<128x256xi8> to vector<128x256xf32>
    %cst = arith.constant 0.000000e+00 : f32
    %2 = vector.broadcast %cst : f32 to vector<128x256xf32>
    %3 = arith.cmpf ogt, %1, %2 : vector<128x256xf32>
    %c0_1 = arith.constant 0 : index
    %c0_2 = arith.constant 0 : index
    %4 = vector.load %arg2[%c0_1, %c0_2] : memref<128x4xf32, #tpu.memory_space<vmem>>, vector<128x4xf32>
    %c0_3 = arith.constant 0 : index
    %c0_4 = arith.constant 0 : index
    %5 = vector.load %arg3[%c0_3, %c0_4] : memref<4x256xf32, #tpu.memory_space<vmem>>, vector<4x256xf32>
    %c0_5 = arith.constant 0 : index
    %c0_6 = arith.constant 0 : index
    %6 = vector.load %arg4[%c0_5, %c0_6] : memref<256x64xbf16, #tpu.memory_space<vmem>>, vector<256x64xbf16>
    %7 = vector.extract_strided_slice %4 {offsets = [0, 0], sizes = [128, 1], strides = [1, 1]} : vector<128x4xf32> to vector<128x1xf32>
    %8 = vector.extract_strided_slice %5 {offsets = [0, 0], sizes = [1, 256], strides = [1, 1]} : vector<4x256xf32> to vector<1x256xf32>
    %9 = vector.broadcast %7 : vector<128x1xf32> to vector<128x256xf32>
    %10 = vector.broadcast %8 : vector<1x256xf32> to vector<128x256xf32>
    %11 = arith.addf %9, %10 : vector<128x256xf32>
    %cst_7 = arith.constant 0.000000e+00 : f32
    %12 = vector.broadcast %cst_7 : f32 to vector<128x256xf32>
    %13 = arith.cmpf oge, %11, %12 : vector<128x256xf32>
    %cst_8 = arith.constant 2.000000e-01 : f32
    %14 = vector.broadcast %cst_8 : f32 to vector<128x256xf32>
    %15 = arith.mulf %14, %11 : vector<128x256xf32>
    %16 = arith.select %13, %11, %15 : vector<128x256xi1>, vector<128x256xf32>
    %cst_9 = arith.constant -1.000000e+30 : f32
    %17 = vector.broadcast %cst_9 : f32 to vector<128x256xf32>
    %18 = arith.select %3, %16, %17 : vector<128x256xi1>, vector<128x256xf32>
    %cst_10 = arith.constant dense<0xFF800000> : vector<128xf32>
    %19 = vector.multi_reduction <maximumf>, %18, %cst_10 [1] : vector<128x256xf32> to vector<128xf32>
    %20 = vector.shape_cast %19 : vector<128xf32> to vector<128x1xf32>
    %21 = vector.broadcast %20 : vector<128x1xf32> to vector<128x256xf32>
    %22 = arith.subf %18, %21 : vector<128x256xf32>
    %23 = math.exp %22 : vector<128x256xf32>
    %cst_11 = arith.constant dense<0.000000e+00> : vector<128xf32>
    %24 = vector.multi_reduction <add>, %23, %cst_11 [1] : vector<128x256xf32> to vector<128xf32>
    %25 = vector.shape_cast %24 : vector<128xf32> to vector<128x1xf32>
    %26 = vector.extract_strided_slice %6 {offsets = [0, 0], sizes = [256, 16], strides = [1, 1]} : vector<256x64xbf16> to vector<256x16xbf16>
    %27 = arith.truncf %23 : vector<128x256xf32> to vector<128x256xbf16>
    %cst_12 = arith.constant dense<0.000000e+00> : vector<128x16xf32>
    %28 = tpu.matmul %27, %26, %cst_12 {dimension_numbers = #tpu.dot_dimension_numbers<[1], [0], [0], [1], [0, 0, 1, 1], [], []>} : vector<128x256xbf16>, vector<256x16xbf16>, vector<128x16xf32> -> vector<128x16xf32>
    %29 = tpu.reciprocal %25 {approx = true} : vector<128x1xf32> -> vector<128x1xf32>
    %30 = vector.broadcast %29 : vector<128x1xf32> to vector<128x16xf32>
    %31 = arith.mulf %28, %30 : vector<128x16xf32>
    %32 = vector.extract_strided_slice %4 {offsets = [0, 1], sizes = [128, 1], strides = [1, 1]} : vector<128x4xf32> to vector<128x1xf32>
    %33 = vector.extract_strided_slice %5 {offsets = [1, 0], sizes = [1, 256], strides = [1, 1]} : vector<4x256xf32> to vector<1x256xf32>
    %34 = vector.broadcast %32 : vector<128x1xf32> to vector<128x256xf32>
    %35 = vector.broadcast %33 : vector<1x256xf32> to vector<128x256xf32>
    %36 = arith.addf %34, %35 : vector<128x256xf32>
    %cst_13 = arith.constant 0.000000e+00 : f32
    %37 = vector.broadcast %cst_13 : f32 to vector<128x256xf32>
    %38 = arith.cmpf oge, %36, %37 : vector<128x256xf32>
    %cst_14 = arith.constant 2.000000e-01 : f32
    %39 = vector.broadcast %cst_14 : f32 to vector<128x256xf32>
    %40 = arith.mulf %39, %36 : vector<128x256xf32>
    %41 = arith.select %38, %36, %40 : vector<128x256xi1>, vector<128x256xf32>
    %cst_15 = arith.constant -1.000000e+30 : f32
    %42 = vector.broadcast %cst_15 : f32 to vector<128x256xf32>
    %43 = arith.select %3, %41, %42 : vector<128x256xi1>, vector<128x256xf32>
    %cst_16 = arith.constant dense<0xFF800000> : vector<128xf32>
    %44 = vector.multi_reduction <maximumf>, %43, %cst_16 [1] : vector<128x256xf32> to vector<128xf32>
    %45 = vector.shape_cast %44 : vector<128xf32> to vector<128x1xf32>
    %46 = vector.broadcast %45 : vector<128x1xf32> to vector<128x256xf32>
    %47 = arith.subf %43, %46 : vector<128x256xf32>
    %48 = math.exp %47 : vector<128x256xf32>
    %cst_17 = arith.constant dense<0.000000e+00> : vector<128xf32>
    %49 = vector.multi_reduction <add>, %48, %cst_17 [1] : vector<128x256xf32> to vector<128xf32>
    %50 = vector.shape_cast %49 : vector<128xf32> to vector<128x1xf32>
    %51 = vector.extract_strided_slice %6 {offsets = [0, 16], sizes = [256, 16], strides = [1, 1]} : vector<256x64xbf16> to vector<256x16xbf16>
    %52 = arith.truncf %48 : vector<128x256xf32> to vector<128x256xbf16>
    %cst_18 = arith.constant dense<0.000000e+00> : vector<128x16xf32>
    %53 = tpu.matmul %52, %51, %cst_18 {dimension_numbers = #tpu.dot_dimension_numbers<[1], [0], [0], [1], [0, 0, 1, 1], [], []>} : vector<128x256xbf16>, vector<256x16xbf16>, vector<128x16xf32> -> vector<128x16xf32>
    %54 = tpu.reciprocal %50 {approx = true} : vector<128x1xf32> -> vector<128x1xf32>
    %55 = vector.broadcast %54 : vector<128x1xf32> to vector<128x16xf32>
    %56 = arith.mulf %53, %55 : vector<128x16xf32>
    %57 = vector.extract_strided_slice %4 {offsets = [0, 2], sizes = [128, 1], strides = [1, 1]} : vector<128x4xf32> to vector<128x1xf32>
    %58 = vector.extract_strided_slice %5 {offsets = [2, 0], sizes = [1, 256], strides = [1, 1]} : vector<4x256xf32> to vector<1x256xf32>
    %59 = vector.broadcast %57 : vector<128x1xf32> to vector<128x256xf32>
    %60 = vector.broadcast %58 : vector<1x256xf32> to vector<128x256xf32>
    %61 = arith.addf %59, %60 : vector<128x256xf32>
    %cst_19 = arith.constant 0.000000e+00 : f32
    %62 = vector.broadcast %cst_19 : f32 to vector<128x256xf32>
    %63 = arith.cmpf oge, %61, %62 : vector<128x256xf32>
    %cst_20 = arith.constant 2.000000e-01 : f32
    %64 = vector.broadcast %cst_20 : f32 to vector<128x256xf32>
    %65 = arith.mulf %64, %61 : vector<128x256xf32>
    %66 = arith.select %63, %61, %65 : vector<128x256xi1>, vector<128x256xf32>
    %cst_21 = arith.constant -1.000000e+30 : f32
    %67 = vector.broadcast %cst_21 : f32 to vector<128x256xf32>
    %68 = arith.select %3, %66, %67 : vector<128x256xi1>, vector<128x256xf32>
    %cst_22 = arith.constant dense<0xFF800000> : vector<128xf32>
    %69 = vector.multi_reduction <maximumf>, %68, %cst_22 [1] : vector<128x256xf32> to vector<128xf32>
    %70 = vector.shape_cast %69 : vector<128xf32> to vector<128x1xf32>
    %71 = vector.broadcast %70 : vector<128x1xf32> to vector<128x256xf32>
    %72 = arith.subf %68, %71 : vector<128x256xf32>
    %73 = math.exp %72 : vector<128x256xf32>
    %cst_23 = arith.constant dense<0.000000e+00> : vector<128xf32>
    %74 = vector.multi_reduction <add>, %73, %cst_23 [1] : vector<128x256xf32> to vector<128xf32>
    %75 = vector.shape_cast %74 : vector<128xf32> to vector<128x1xf32>
    %76 = vector.extract_strided_slice %6 {offsets = [0, 32], sizes = [256, 16], strides = [1, 1]} : vector<256x64xbf16> to vector<256x16xbf16>
    %77 = arith.truncf %73 : vector<128x256xf32> to vector<128x256xbf16>
    %cst_24 = arith.constant dense<0.000000e+00> : vector<128x16xf32>
    %78 = tpu.matmul %77, %76, %cst_24 {dimension_numbers = #tpu.dot_dimension_numbers<[1], [0], [0], [1], [0, 0, 1, 1], [], []>} : vector<128x256xbf16>, vector<256x16xbf16>, vector<128x16xf32> -> vector<128x16xf32>
    %79 = tpu.reciprocal %75 {approx = true} : vector<128x1xf32> -> vector<128x1xf32>
    %80 = vector.broadcast %79 : vector<128x1xf32> to vector<128x16xf32>
    %81 = arith.mulf %78, %80 : vector<128x16xf32>
    %82 = vector.extract_strided_slice %4 {offsets = [0, 3], sizes = [128, 1], strides = [1, 1]} : vector<128x4xf32> to vector<128x1xf32>
    %83 = vector.extract_strided_slice %5 {offsets = [3, 0], sizes = [1, 256], strides = [1, 1]} : vector<4x256xf32> to vector<1x256xf32>
    %84 = vector.broadcast %82 : vector<128x1xf32> to vector<128x256xf32>
    %85 = vector.broadcast %83 : vector<1x256xf32> to vector<128x256xf32>
    %86 = arith.addf %84, %85 : vector<128x256xf32>
    %cst_25 = arith.constant 0.000000e+00 : f32
    %87 = vector.broadcast %cst_25 : f32 to vector<128x256xf32>
    %88 = arith.cmpf oge, %86, %87 : vector<128x256xf32>
    %cst_26 = arith.constant 2.000000e-01 : f32
    %89 = vector.broadcast %cst_26 : f32 to vector<128x256xf32>
    %90 = arith.mulf %89, %86 : vector<128x256xf32>
    %91 = arith.select %88, %86, %90 : vector<128x256xi1>, vector<128x256xf32>
    %cst_27 = arith.constant -1.000000e+30 : f32
    %92 = vector.broadcast %cst_27 : f32 to vector<128x256xf32>
    %93 = arith.select %3, %91, %92 : vector<128x256xi1>, vector<128x256xf32>
    %cst_28 = arith.constant dense<0xFF800000> : vector<128xf32>
    %94 = vector.multi_reduction <maximumf>, %93, %cst_28 [1] : vector<128x256xf32> to vector<128xf32>
    %95 = vector.shape_cast %94 : vector<128xf32> to vector<128x1xf32>
    %96 = vector.broadcast %95 : vector<128x1xf32> to vector<128x256xf32>
    %97 = arith.subf %93, %96 : vector<128x256xf32>
    %98 = math.exp %97 : vector<128x256xf32>
    %cst_29 = arith.constant dense<0.000000e+00> : vector<128xf32>
    %99 = vector.multi_reduction <add>, %98, %cst_29 [1] : vector<128x256xf32> to vector<128xf32>
    %100 = vector.shape_cast %99 : vector<128xf32> to vector<128x1xf32>
    %101 = vector.extract_strided_slice %6 {offsets = [0, 48], sizes = [256, 16], strides = [1, 1]} : vector<256x64xbf16> to vector<256x16xbf16>
    %102 = arith.truncf %98 : vector<128x256xf32> to vector<128x256xbf16>
    %cst_30 = arith.constant dense<0.000000e+00> : vector<128x16xf32>
    %103 = tpu.matmul %102, %101, %cst_30 {dimension_numbers = #tpu.dot_dimension_numbers<[1], [0], [0], [1], [0, 0, 1, 1], [], []>} : vector<128x256xbf16>, vector<256x16xbf16>, vector<128x16xf32> -> vector<128x16xf32>
    %104 = tpu.reciprocal %100 {approx = true} : vector<128x1xf32> -> vector<128x1xf32>
    %105 = vector.broadcast %104 : vector<128x1xf32> to vector<128x16xf32>
    %106 = arith.mulf %103, %105 : vector<128x16xf32>
    %107 = tpu.concatenate %31, %56, %81, %106 in 1 : vector<128x16xf32>, vector<128x16xf32>, vector<128x16xf32>, vector<128x16xf32> -> vector<128x64xf32>
    %c0_31 = arith.constant 0 : index
    %c0_32 = arith.constant 0 : index
    %108 = vector.load %arg5[%c0_31, %c0_32] : memref<1x64xf32, #tpu.memory_space<vmem>>, vector<1x64xf32>
    %109 = vector.broadcast %108 : vector<1x64xf32> to vector<128x64xf32>
    %110 = arith.addf %107, %109 : vector<128x64xf32>
    %c0_33 = arith.constant 0 : index
    %c0_34 = arith.constant 0 : index
    %111 = vector.load %arg6[%c0_33, %c0_34] : memref<128x64xf32, #tpu.memory_space<vmem>>, vector<128x64xf32>
    tpu.vector_store %arg6[%c0_33, %c0_34], %110 {strides = array<i32>} : memref<128x64xf32, #tpu.memory_space<vmem>>, vector<128x64xf32>,
    return
  }
  func.func @transform_0(%arg0: i32) -> (i32, i32) {
    %c0_i32 = arith.constant 0 : i32
    %c0_i32_0 = arith.constant 0 : i32
    return %arg0, %c0_i32 : i32, i32
  }
  func.func @transform_1(%arg0: i32) -> (i32, i32) {
    %c0_i32 = arith.constant 0 : i32
    %c0_i32_0 = arith.constant 0 : i32
    return %arg0, %c0_i32 : i32, i32
  }
  func.func @transform_2(%arg0: i32) -> (i32, i32) {
    %c0_i32 = arith.constant 0 : i32
    %c0_i32_0 = arith.constant 0 : i32
    %c0_i32_1 = arith.constant 0 : i32
    return %c0_i32, %c0_i32_0 : i32, i32
  }
  func.func @transform_3(%arg0: i32) -> (i32, i32) {
    %c0_i32 = arith.constant 0 : i32
    %c0_i32_0 = arith.constant 0 : i32
    %c0_i32_1 = arith.constant 0 : i32
    return %c0_i32, %c0_i32_0 : i32, i32
  }
  func.func @transform_4(%arg0: i32) -> (i32, i32) {
    %c0_i32 = arith.constant 0 : i32
    %c0_i32_0 = arith.constant 0 : i32
    %c0_i32_1 = arith.constant 0 : i32
    return %c0_i32, %c0_i32_0 : i32, i32
  }
  func.func @transform_5(%arg0: i32) -> (i32, i32) {
    %c0_i32 = arith.constant 0 : i32
    %c0_i32_0 = arith.constant 0 : i32
    return %arg0, %c0_i32 : i32, i32
  }
}

</mosaic_0001>

<llo_original>
// kernel: squeeze.5
$region0: #{squeeze.5}
  %s0 = inlined_call_operand.vmem [shape: f32[4,16], index: 0, kind: input, shape index: {}]
  %s1 = inlined_call_operand.vmem [shape: f32[1,64], index: 1, kind: output, shape index: {}]
  $region1: #{squeeze.5} parent=0
    #allocation0 [shape = 'u8[4096]{0}', space=vmem, size = 0x1000, scoped, tag = 'scoped mem for output reshape']
    #allocation1 [shape = 'u8[4096]{0}', space=vmem, size = 0x1000, scoped, tag = 'scoped mem for input reshape']
    %s3 = sshll.u32 1, 4
    %s4 = ssub.s32 %s3, 1
    %v5 = vld [vmem:[%s0] sm:%s4]
    %6 = vst [vmem:[#allocation1] sm:%s4] %v5
    %v7 = vld [vmem:[#allocation1] sm:$0x1]
    %vm8 = vcmask 130048
    %9 = vst.msk [vmem:[#allocation0] sm:$0x1] %vm8, %v7
    %s10 = scalar_lea.vmem [#allocation1], 3
    %v11 = vld [vmem:[%s10] sm:$0x1]
    %12 = vrot.lane.b32.xlu0 %v11, 48
    %v13 = vpop.permute.xlu0 %12
    %vm14 = vcmask 523648
    %15 = vst.msk [vmem:[#allocation0] sm:$0x1] %vm14, %v13
    %s16 = scalar_lea.vmem [#allocation1], 2
    %v17 = vld [vmem:[%s16] sm:$0x1]
    %18 = vrot.lane.b32.xlu0 %v17, 32
    %v19 = vpop.permute.xlu0 %18
    %vm20 = vcmask 392448
    %21 = vst.msk [vmem:[#allocation0] sm:$0x1] %vm20, %v19
    %s22 = scalar_lea.vmem [#allocation1], 1
    %v23 = vld [vmem:[%s22] sm:$0x1]
    %24 = vrot.lane.b32.xlu0 %v23, 16
    %v25 = vpop.permute.xlu0 %24
    %vm26 = vcmask 261248
    %27 = vst.msk [vmem:[#allocation0] sm:$0x1] %vm26, %v25
    %s29 = sshll.u32 1, 1
    %s30 = ssub.s32 %s29, 1
    %v32 = vld [vmem:[#allocation0] sm:%s30]
    %s33 = sshll.u32 1, 1
    %s34 = ssub.s32 %s33, 1
    %35 = vst [vmem:[%s1] sm:%s34] %v32

// kernel: gat_conv_forward.2
$region0: #{gat_conv_forward.2}
  #allocation0 [shape = 'u32[]', space=smem, size = 0x4, offset = 0x4, fixed_abs, tag = 'smem constant byte address 0x4 - core index']
  #allocation1 [shape = 'u32[144,128]{1,0:T(1,128)}', space=vmem, size = 0x12000, scoped, tag = 'internal scratch']
  %s0 = inlined_call_operand.vmem [shape: f32[256,32], index: 0, kind: input, shape index: {}]
  %s1 = inlined_call_operand.vmem [shape: bf16[32,64], index: 1, kind: input, shape index: {}]
  %s2 = inlined_call_operand.vmem [shape: f32[32,4], index: 2, kind: input, shape index: {}]
  %s3 = inlined_call_operand.vmem [shape: f32[32,4], index: 3, kind: input, shape index: {}]
  %s4 = inlined_call_operand.vmem [shape: bf16[256,64], index: 4, kind: output, shape index: {0}]
  %s5 = inlined_call_operand.vmem [shape: f32[4,256], index: 5, kind: output, shape index: {1}]
  %s6 = inlined_call_operand.vmem [shape: f32[256,4], index: 6, kind: output, shape index: {2}]
  %7 = xla_tuple %s4, %s5, %s6
  %s8 = sld [smem:[#allocation0]]
  $region42: #{gat_conv_forward.2} parent=0
    _
  %s10 = ssub.s32 1, %s8
  %s11 = scalar_select 0, %s10, %s8
  // Predicated region
  $region2: #{gat_conv_forward.2} parent=0 // pred_check
    _
  $region3: #{gat_conv_forward.2} parent=0 // pred_check_branch
    %13 = sbr.rel (0) target = $region5
  $region4: #{gat_conv_forward.2} parent=0 // pred_region
    _
  $region5: #{gat_conv_forward.2} parent=0 // pred_fallthru
    _
  // Predicated region
  $region6: #{gat_conv_forward.2} parent=0 // pred_check
    _
  $region7: #{gat_conv_forward.2} parent=0 // pred_check_branch
    %15 = sbr.rel (0) target = $region9
  $region8: #{gat_conv_forward.2} parent=0 // pred_region
    _
  $region9: #{gat_conv_forward.2} parent=0 // pred_fallthru
    _
  // Predicated region
  $region10: #{gat_conv_forward.2} parent=0 // pred_check
    _
  $region11: #{gat_conv_forward.2} parent=0 // pred_check_branch
    %17 = sbr.rel (0) target = $region13
  $region12: #{gat_conv_forward.2} parent=0 // pred_region
    _
  $region13: #{gat_conv_forward.2} parent=0 // pred_fallthru
    _
  // Predicated region
  $region14: #{gat_conv_forward.2} parent=0 // pred_check
    _
  $region15: #{gat_conv_forward.2} parent=0 // pred_check_branch
    %19 = sbr.rel (0) target = $region17
  $region16: #{gat_conv_forward.2} parent=0 // pred_region
    _
  $region17: #{gat_conv_forward.2} parent=0 // pred_fallthru
    _
  %v21 = vld [vmem:[%s0] sm:$0xff]
  %v22 = vld [vmem:[%s0 + $0x8] sm:$0xff]
  %v23 = vld [vmem:[%s0 + $0x10] sm:$0xff]
  %v24 = vld [vmem:[%s0 + $0x18] sm:$0xff]
  %v25 = vld [vmem:[%s0 + $0x20] sm:$0xff]
  %v26 = vld [vmem:[%s0 + $0x28] sm:$0xff]
  %v27 = vld [vmem:[%s0 + $0x30] sm:$0xff]
  %v28 = vld [vmem:[%s0 + $0x38] sm:$0xff]
  %v29 = vld [vmem:[%s0 + $0x40] sm:$0xff]
  %v30 = vld [vmem:[%s0 + $0x48] sm:$0xff]
  %v31 = vld [vmem:[%s0 + $0x50] sm:$0xff]
  %v32 = vld [vmem:[%s0 + $0x58] sm:$0xff]
  %v33 = vld [vmem:[%s0 + $0x60] sm:$0xff]
  %v34 = vld [vmem:[%s0 + $0x68] sm:$0xff]
  %v35 = vld [vmem:[%s0 + $0x70] sm:$0xff]
  %v36 = vld [vmem:[%s0 + $0x78] sm:$0xff]
  %v37 = vld [vmem:[%s0 + $0x80] sm:$0xff]
  %v38 = vld [vmem:[%s0 + $0x88] sm:$0xff]
  %v39 = vld [vmem:[%s0 + $0x90] sm:$0xff]
  %v40 = vld [vmem:[%s0 + $0x98] sm:$0xff]
  %v41 = vld [vmem:[%s0 + $0xa0] sm:$0xff]
  %v42 = vld [vmem:[%s0 + $0xa8] sm:$0xff]
  %v43 = vld [vmem:[%s0 + $0xb0] sm:$0xff]
  %v44 = vld [vmem:[%s0 + $0xb8] sm:$0xff]
  %v45 = vld [vmem:[%s0 + $0xc0] sm:$0xff]
  %v46 = vld [vmem:[%s0 + $0xc8] sm:$0xff]
  %v47 = vld [vmem:[%s0 + $0xd0] sm:$0xff]
  %v48 = vld [vmem:[%s0 + $0xd8] sm:$0xff]
  %v49 = vld [vmem:[%s0 + $0xe0] sm:$0xff]
  %v50 = vld [vmem:[%s0 + $0xe8] sm:$0xff]
  %v51 = vld [vmem:[%s0 + $0xf0] sm:$0xff]
  %v52 = vld [vmem:[%s0 + $0xf8] sm:$0xff]
  %v53 = vpack.c.bf16 %v22, %v21
  %v54 = vpack.c.bf16 %v24, %v23
  %v55 = vpack.c.bf16 %v26, %v25
  %v56 = vpack.c.bf16 %v28, %v27
  %v57 = vpack.c.bf16 %v30, %v29
  %v58 = vpack.c.bf16 %v32, %v31
  %v59 = vpack.c.bf16 %v34, %v33
  %v60 = vpack.c.bf16 %v36, %v35
  %v61 = vpack.c.bf16 %v38, %v37
  %v62 = vpack.c.bf16 %v40, %v39
  %v63 = vpack.c.bf16 %v42, %v41
  %v64 = vpack.c.bf16 %v44, %v43
  %v65 = vpack.c.bf16 %v46, %v45
  %v66 = vpack.c.bf16 %v48, %v47
  %v67 = vpack.c.bf16 %v50, %v49
  %v68 = vpack.c.bf16 %v52, %v51
  %v69 = vld [vmem:[%s1] sm:$0xf]
  %v70 = vld [vmem:[%s1 + $0x4] sm:$0xf]
  %v71 = vld [vmem:[%s1 + $0x8] sm:$0xf]
  %v72 = vld [vmem:[%s1 + $0xc] sm:$0xf]
  %v77 = vunpack.c.l.b16 %v69
  %v78 = vunpack.c.l.b16 %v70
  %v79 = vunpack.c.l.b16 %v71
  %v80 = vunpack.c.l.b16 %v72
  %v81 = vpack.c.b16 %v78, %v77
  %v82 = vpack.c.b16 %v80, %v79
  %vm85 = vcmask 261120
  %v87 = vsel %vm85, %v53, 0
  %v90 = vsel %vm85, %v54, 0
  %v93 = vsel %vm85, %v55, 0
  %v96 = vsel %vm85, %v56, 0
  %v99 = vsel %vm85, %v57, 0
  %v102 = vsel %vm85, %v58, 0
  %v105 = vsel %vm85, %v59, 0
  %v108 = vsel %vm85, %v60, 0
  %v111 = vsel %vm85, %v61, 0
  %v114 = vsel %vm85, %v62, 0
  %v117 = vsel %vm85, %v63, 0
  %v120 = vsel %vm85, %v64, 0
  %v123 = vsel %vm85, %v65, 0
  %v126 = vsel %vm85, %v66, 0
  %v129 = vsel %vm85, %v67, 0
  %v132 = vsel %vm85, %v68, 0
  %134 = vmatprep.subr.bf16.mxu0 0
  %135 = vmatpush1.bf16.msra.mxu0 0
  %136 = vmatprep.subr.bf16.mxu0 0
  %137 = vmatpush1.bf16.msra.mxu0 0
  %138 = vmatprep.subr.bf16.mxu0 0
  %139 = vmatpush1.bf16.msra.mxu0 0
  %140 = vmatprep.subr.bf16.mxu0 0
  %141 = vmatpush1.bf16.msra.mxu0 0
  %142 = vmatprep.subr.bf16.mxu0 0
  %143 = vmatpush1.bf16.msra.mxu0 0
  %144 = vmatprep.subr.bf16.mxu0 0
  %145 = vmatpush1.bf16.msra.mxu0 0
  %146 = vmatprep.subr.bf16.mxu0 0
  %147 = vmatpush1.bf16.msra.mxu0 %v82
  %148 = vmatprep.subr.bf16.mxu0 0
  %149 = vmatpush1.bf16.msra.mxu0 %v81
  %150 = vmatprep.subr.bf16.mxu0 0
  %151 = vmatpush2.bf16.msra.mxu0 0
  %152 = vmatprep.subr.bf16.mxu0 0
  %153 = vmatpush2.bf16.msra.mxu0 0
  %154 = vmatprep.subr.bf16.mxu0 0
  %155 = vmatpush2.bf16.msra.mxu0 0
  %156 = vmatprep.subr.bf16.mxu0 0
  %157 = vmatpush2.bf16.msra.mxu0 0
  %158 = vmatprep.subr.bf16.mxu0 0
  %159 = vmatpush2.bf16.msra.mxu0 0
  %160 = vmatprep.subr.bf16.mxu0 0
  %161 = vmatpush2.bf16.msra.mxu0 0
  %162 = vmatprep.subr.bf16.mxu0 0
  %163 = vmatpush2.bf16.msra.mxu0 0
  %164 = vmatprep.subr.bf16.mxu0 0
  %165 = vmatpush2.bf16.msra.mxu0 0
  %166 = vmatprep.mubr.bf16.mxu0 0
  %167 = vmatmul.mubr.bf16.gmra.mxu0 %v87
  %v168 = vpop.f32.mrf.mxu0
  %v169 = vadd.f32 0.0, %v168
  %v170 = vpop.f32.mrf.mxu0
  %v171 = vpop.f32.mrf.mxu0
  %v172 = vadd.f32 0.0, %v171
  %v173 = vpop.f32.mrf.mxu0
  %174 = vmatprep.mubr.bf16.mxu0 0
  %175 = vmatmul.mubr.bf16.gmra.mxu0 %v90
  %v176 = vpop.f32.mrf.mxu0
  %v177 = vadd.f32 0.0, %v176
  %v178 = vpop.f32.mrf.mxu0
  %v179 = vpop.f32.mrf.mxu0
  %v180 = vadd.f32 0.0, %v179
  %v181 = vpop.f32.mrf.mxu0
  %182 = vmatprep.mubr.bf16.mxu0 0
  %183 = vmatmul.mubr.bf16.gmra.mxu0 %v93
  %v184 = vpop.f32.mrf.mxu0
  %v185 = vadd.f32 0.0, %v184
  %v186 = vpop.f32.mrf.mxu0
  %v187 = vpop.f32.mrf.mxu0
  %v188 = vadd.f32 0.0, %v187
  %v189 = vpop.f32.mrf.mxu0
  %190 = vmatprep.mubr.bf16.mxu0 0
  %191 = vmatmul.mubr.bf16.gmra.mxu0 %v96
  %v192 = vpop.f32.mrf.mxu0
  %v193 = vadd.f32 0.0, %v192
  %v194 = vpop.f32.mrf.mxu0
  %v195 = vpop.f32.mrf.mxu0
  %v196 = vadd.f32 0.0, %v195
  %v197 = vpop.f32.mrf.mxu0
  %198 = vmatprep.mubr.bf16.mxu0 0
  %199 = vmatmul.mubr.bf16.gmra.mxu0 %v99
  %v200 = vpop.f32.mrf.mxu0
  %v201 = vadd.f32 0.0, %v200
  %v202 = vpop.f32.mrf.mxu0
  %v203 = vpop.f32.mrf.mxu0
  %v204 = vadd.f32 0.0, %v203
  %v205 = vpop.f32.mrf.mxu0
  %206 = vmatprep.mubr.bf16.mxu0 0
  %207 = vmatmul.mubr.bf16.gmra.mxu0 %v102
  %v208 = vpop.f32.mrf.mxu0
  %v209 = vadd.f32 0.0, %v208
  %v210 = vpop.f32.mrf.mxu0
  %v211 = vpop.f32.mrf.mxu0
  %v212 = vadd.f32 0.0, %v211
  %v213 = vpop.f32.mrf.mxu0
  %214 = vmatprep.mubr.bf16.mxu0 0
  %215 = vmatmul.mubr.bf16.gmra.mxu0 %v105
  %v216 = vpop.f32.mrf.mxu0
  %v217 = vadd.f32 0.0, %v216
  %v218 = vpop.f32.mrf.mxu0
  %v219 = vpop.f32.mrf.mxu0
  %v220 = vadd.f32 0.0, %v219
  %v221 = vpop.f32.mrf.mxu0
  %222 = vmatprep.mubr.bf16.mxu0 0
  %223 = vmatmul.mubr.bf16.gmra.mxu0 %v108
  %v224 = vpop.f32.mrf.mxu0
  %v225 = vadd.f32 0.0, %v224
  %v226 = vpop.f32.mrf.mxu0
  %v227 = vpop.f32.mrf.mxu0
  %v228 = vadd.f32 0.0, %v227
  %v229 = vpop.f32.mrf.mxu0
  %230 = vmatprep.mubr.bf16.mxu0 0
  %231 = vmatmul.mubr.bf16.gmra.mxu0 %v111
  %v232 = vpop.f32.mrf.mxu0
  %v233 = vadd.f32 0.0, %v232
  %v234 = vpop.f32.mrf.mxu0
  %v235 = vpop.f32.mrf.mxu0
  %v236 = vadd.f32 0.0, %v235
  %v237 = vpop.f32.mrf.mxu0
  %238 = vmatprep.mubr.bf16.mxu0 0
  %239 = vmatmul.mubr.bf16.gmra.mxu0 %v114
  %v240 = vpop.f32.mrf.mxu0
  %v241 = vadd.f32 0.0, %v240
  %v242 = vpop.f32.mrf.mxu0
  %v243 = vpop.f32.mrf.mxu0
  %v244 = vadd.f32 0.0, %v243
  %v245 = vpop.f32.mrf.mxu0
  %246 = vmatprep.mubr.bf16.mxu0 0
  %247 = vmatmul.mubr.bf16.gmra.mxu0 %v117
  %v248 = vpop.f32.mrf.mxu0
  %v249 = vadd.f32 0.0, %v248
  %v250 = vpop.f32.mrf.mxu0
  %v251 = vpop.f32.mrf.mxu0
  %v252 = vadd.f32 0.0, %v251
  %v253 = vpop.f32.mrf.mxu0
  %254 = vmatprep.mubr.bf16.mxu0 0
  %255 = vmatmul.mubr.bf16.gmra.mxu0 %v120
  %v256 = vpop.f32.mrf.mxu0
  %v257 = vadd.f32 0.0, %v256
  %v258 = vpop.f32.mrf.mxu0
  %v259 = vpop.f32.mrf.mxu0
  %v260 = vadd.f32 0.0, %v259
  %v261 = vpop.f32.mrf.mxu0
  %262 = vmatprep.mubr.bf16.mxu0 0
  %263 = vmatmul.mubr.bf16.gmra.mxu0 %v123
  %v264 = vpop.f32.mrf.mxu0
  %v265 = vadd.f32 0.0, %v264
  %v266 = vpop.f32.mrf.mxu0
  %v267 = vpop.f32.mrf.mxu0
  %v268 = vadd.f32 0.0, %v267
  %v269 = vpop.f32.mrf.mxu0
  %270 = vmatprep.mubr.bf16.mxu0 0
  %271 = vmatmul.mubr.bf16.gmra.mxu0 %v126
  %v272 = vpop.f32.mrf.mxu0
  %v273 = vadd.f32 0.0, %v272
  %v274 = vpop.f32.mrf.mxu0
  %v275 = vpop.f32.mrf.mxu0
  %v276 = vadd.f32 0.0, %v275
  %v277 = vpop.f32.mrf.mxu0
  %278 = vmatprep.mubr.bf16.mxu0 0
  %279 = vmatmul.mubr.bf16.gmra.mxu0 %v129
  %v280 = vpop.f32.mrf.mxu0
  %v281 = vadd.f32 0.0, %v280
  %v282 = vpop.f32.mrf.mxu0
  %v283 = vpop.f32.mrf.mxu0
  %v284 = vadd.f32 0.0, %v283
  %v285 = vpop.f32.mrf.mxu0
  %286 = vmatprep.mubr.bf16.mxu0 0
  %287 = vmatmul.mubr.bf16.gmra.mxu0 %v132
  %v288 = vpop.f32.mrf.mxu0
  %v289 = vadd.f32 0.0, %v288
  %v290 = vpop.f32.mrf.mxu0
  %v291 = vpop.f32.mrf.mxu0
  %v292 = vadd.f32 0.0, %v291
  %v293 = vpop.f32.mrf.mxu0
  %294 = vdwg.mxu0
  %v295 = vpack.c.bf16 %v172, %v169
  %v296 = vpack.c.bf16 %v180, %v177
  %v297 = vpack.c.bf16 %v188, %v185
  %v298 = vpack.c.bf16 %v196, %v193
  %v299 = vpack.c.bf16 %v204, %v201
  %v300 = vpack.c.bf16 %v212, %v209
  %v301 = vpack.c.bf16 %v220, %v217
  %v302 = vpack.c.bf16 %v228, %v225
  %v303 = vpack.c.bf16 %v236, %v233
  %v304 = vpack.c.bf16 %v244, %v241
  %v305 = vpack.c.bf16 %v252, %v249
  %v306 = vpack.c.bf16 %v260, %v257
  %v307 = vpack.c.bf16 %v268, %v265
  %v308 = vpack.c.bf16 %v276, %v273
  %v309 = vpack.c.bf16 %v284, %v281
  %v310 = vpack.c.bf16 %v292, %v289
  %v327 = vunpack.c.l.b16 %v295
  %v328 = vunpack.c.h.b16 %v295
  %v329 = vunpack.c.l.b16 %v296
  %v330 = vunpack.c.h.b16 %v296
  %v331 = vunpack.c.l.b16 %v297
  %v332 = vunpack.c.h.b16 %v297
  %v333 = vunpack.c.l.b16 %v298
  %v334 = vunpack.c.h.b16 %v298
  %v335 = vunpack.c.l.b16 %v299
  %v336 = vunpack.c.h.b16 %v299
  %v337 = vunpack.c.l.b16 %v300
  %v338 = vunpack.c.h.b16 %v300
  %v339 = vunpack.c.l.b16 %v301
  %v340 = vunpack.c.h.b16 %v301
  %v341 = vunpack.c.l.b16 %v302
  %v342 = vunpack.c.h.b16 %v302
  %v343 = vunpack.c.l.b16 %v303
  %v344 = vunpack.c.h.b16 %v303
  %v345 = vunpack.c.l.b16 %v304
  %v346 = vunpack.c.h.b16 %v304
  %v347 = vunpack.c.l.b16 %v305
  %v348 = vunpack.c.h.b16 %v305
  %v349 = vunpack.c.l.b16 %v306
  %v350 = vunpack.c.h.b16 %v306
  %v351 = vunpack.c.l.b16 %v307
  %v352 = vunpack.c.h.b16 %v307
  %v353 = vunpack.c.l.b16 %v308
  %v354 = vunpack.c.h.b16 %v308
  %v355 = vunpack.c.l.b16 %v309
  %v356 = vunpack.c.h.b16 %v309
  %v357 = vunpack.c.l.b16 %v310
  %v358 = vunpack.c.h.b16 %v310
  %v359 = vpack.c.b16 %v327, %v327
  %v360 = vpack.c.b16 %v328, %v328
  %v361 = vpack.c.b16 %v329, %v329
  %v362 = vpack.c.b16 %v330, %v330
  %v363 = vpack.c.b16 %v331, %v331
  %v364 = vpack.c.b16 %v332, %v332
  %v365 = vpack.c.b16 %v333, %v333
  %v366 = vpack.c.b16 %v334, %v334
  %v367 = vpack.c.b16 %v335, %v335
  %v368 = vpack.c.b16 %v336, %v336
  %v369 = vpack.c.b16 %v337, %v337
  %v370 = vpack.c.b16 %v338, %v338
  %v371 = vpack.c.b16 %v339, %v339
  %v372 = vpack.c.b16 %v340, %v340
  %v373 = vpack.c.b16 %v341, %v341
  %v374 = vpack.c.b16 %v342, %v342
  %v375 = vpack.c.b16 %v343, %v343
  %v376 = vpack.c.b16 %v344, %v344
  %v377 = vpack.c.b16 %v345, %v345
  %v378 = vpack.c.b16 %v346, %v346
  %v379 = vpack.c.b16 %v347, %v347
  %v380 = vpack.c.b16 %v348, %v348
  %v381 = vpack.c.b16 %v349, %v349
  %v382 = vpack.c.b16 %v350, %v350
  %v383 = vpack.c.b16 %v351, %v351
  %v384 = vpack.c.b16 %v352, %v352
  %v385 = vpack.c.b16 %v353, %v353
  %v386 = vpack.c.b16 %v354, %v354
  %v387 = vpack.c.b16 %v355, %v355
  %v388 = vpack.c.b16 %v356, %v356
  %v389 = vpack.c.b16 %v357, %v357
  %v390 = vpack.c.b16 %v358, %v358
  %vm423 = vcmask 519168
  %424 = vst.msk [vmem:[%s4] sm:$0xf] %vm423, %v359
  %425 = vst.msk [vmem:[%s4 + $0x4] sm:$0xf] %vm423, %v360
  %426 = vst.msk [vmem:[%s4 + $0x8] sm:$0xf] %vm423, %v361
  %427 = vst.msk [vmem:[%s4 + $0xc] sm:$0xf] %vm423, %v362
  %428 = vst.msk [vmem:[%s4 + $0x10] sm:$0xf] %vm423, %v363
  %429 = vst.msk [vmem:[%s4 + $0x14] sm:$0xf] %vm423, %v364
  %430 = vst.msk [vmem:[%s4 + $0x18] sm:$0xf] %vm423, %v365
  %431 = vst.msk [vmem:[%s4 + $0x1c] sm:$0xf] %vm423, %v366
  %432 = vst.msk [vmem:[%s4 + $0x20] sm:$0xf] %vm423, %v367
  %433 = vst.msk [vmem:[%s4 + $0x24] sm:$0xf] %vm423, %v368
  %434 = vst.msk [vmem:[%s4 + $0x28] sm:$0xf] %vm423, %v369
  %435 = vst.msk [vmem:[%s4 + $0x2c] sm:$0xf] %vm423, %v370
  %436 = vst.msk [vmem:[%s4 + $0x30] sm:$0xf] %vm423, %v371
  %437 = vst.msk [vmem:[%s4 + $0x34] sm:$0xf] %vm423, %v372
  %438 = vst.msk [vmem:[%s4 + $0x38] sm:$0xf] %vm423, %v373
  %439 = vst.msk [vmem:[%s4 + $0x3c] sm:$0xf] %vm423, %v374
  %440 = vst.msk [vmem:[%s4 + $0x40] sm:$0xf] %vm423, %v375
  %441 = vst.msk [vmem:[%s4 + $0x44] sm:$0xf] %vm423, %v376
  %442 = vst.msk [vmem:[%s4 + $0x48] sm:$0xf] %vm423, %v377
  %443 = vst.msk [vmem:[%s4 + $0x4c] sm:$0xf] %vm423, %v378
  %444 = vst.msk [vmem:[%s4 + $0x50] sm:$0xf] %vm423, %v379
  %445 = vst.msk [vmem:[%s4 + $0x54] sm:$0xf] %vm423, %v380
  %446 = vst.msk [vmem:[%s4 + $0x58] sm:$0xf] %vm423, %v381
  %447 = vst.msk [vmem:[%s4 + $0x5c] sm:$0xf] %vm423, %v382
  %448 = vst.msk [vmem:[%s4 + $0x60] sm:$0xf] %vm423, %v383
  %449 = vst.msk [vmem:[%s4 + $0x64] sm:$0xf] %vm423, %v384
  %450 = vst.msk [vmem:[%s4 + $0x68] sm:$0xf] %vm423, %v385
  %451 = vst.msk [vmem:[%s4 + $0x6c] sm:$0xf] %vm423, %v386
  %452 = vst.msk [vmem:[%s4 + $0x70] sm:$0xf] %vm423, %v387
  %453 = vst.msk [vmem:[%s4 + $0x74] sm:$0xf] %vm423, %v388
  %454 = vst.msk [vmem:[%s4 + $0x78] sm:$0xf] %vm423, %v389
  %455 = vst.msk [vmem:[%s4 + $0x7c] sm:$0xf] %vm423, %v390
  %v456 = vld [vmem:[%s2] sm:$0xff]
  %v457 = vld [vmem:[%s2 + $0x8] sm:$0xff]
  %v458 = vld [vmem:[%s2 + $0x10] sm:$0xff]
  %v459 = vld [vmem:[%s2 + $0x18] sm:$0xff]
  %v461 = vsel %vm85, %v21, 0
  %v464 = vsel %vm85, %v22, 0
  %v467 = vsel %vm85, %v23, 0
  %v470 = vsel %vm85, %v24, 0
  %v473 = vsel %vm85, %v25, 0
  %v476 = vsel %vm85, %v26, 0
  %v479 = vsel %vm85, %v27, 0
  %v482 = vsel %vm85, %v28, 0
  %v485 = vsel %vm85, %v29, 0
  %v488 = vsel %vm85, %v30, 0
  %v491 = vsel %vm85, %v31, 0
  %v494 = vsel %vm85, %v32, 0
  %v497 = vsel %vm85, %v33, 0
  %v500 = vsel %vm85, %v34, 0
  %v503 = vsel %vm85, %v35, 0
  %v506 = vsel %vm85, %v36, 0
  %v509 = vsel %vm85, %v37, 0
  %v512 = vsel %vm85, %v38, 0
  %v515 = vsel %vm85, %v39, 0
  %v518 = vsel %vm85, %v40, 0
  %v521 = vsel %vm85, %v41, 0
  %v524 = vsel %vm85, %v42, 0
  %v527 = vsel %vm85, %v43, 0
  %v530 = vsel %vm85, %v44, 0
  %v533 = vsel %vm85, %v45, 0
  %v536 = vsel %vm85, %v46, 0
  %v539 = vsel %vm85, %v47, 0
  %v542 = vsel %vm85, %v48, 0
  %v545 = vsel %vm85, %v49, 0
  %v548 = vsel %vm85, %v50, 0
  %v551 = vsel %vm85, %v51, 0
  %v554 = vsel %vm85, %v52, 0
  %556 = vmatprep.subr.mxu0 0.0
  %557 = vmatpush1.msra.mxu0 0.0
  %558 = vmatprep.subr.mxu0 0.0
  %559 = vmatpush1.msra.mxu0 0.0
  %560 = vmatprep.subr.mxu0 0.0
  %561 = vmatpush1.msra.mxu0 0.0
  %562 = vmatprep.subr.mxu0 0.0
  %563 = vmatpush1.msra.mxu0 0.0
  %564 = vmatprep.subr.mxu0 0.0
  %565 = vmatpush1.msra.mxu0 0.0
  %566 = vmatprep.subr.mxu0 0.0
  %567 = vmatpush1.msra.mxu0 0.0
  %568 = vmatprep.subr.mxu0 0.0
  %569 = vmatpush1.msra.mxu0 0.0
  %570 = vmatprep.subr.mxu0 0.0
  %571 = vmatpush1.msra.mxu0 0.0
  %572 = vmatprep.subr.mxu0 0.0
  %573 = vmatpush1.msra.mxu0 0.0
  %574 = vmatprep.subr.mxu0 0.0
  %575 = vmatpush1.msra.mxu0 0.0
  %576 = vmatprep.subr.mxu0 0.0
  %577 = vmatpush1.msra.mxu0 0.0
  %578 = vmatprep.subr.mxu0 0.0
  %579 = vmatpush1.msra.mxu0 0.0
  %580 = vmatprep.subr.mxu0 0.0
  %581 = vmatpush1.msra.mxu0 %v459
  %582 = vmatprep.subr.mxu0 0.0
  %583 = vmatpush1.msra.mxu0 %v458
  %584 = vmatprep.subr.mxu0 0.0
  %585 = vmatpush1.msra.mxu0 %v457
  %586 = vmatprep.subr.mxu0 0.0
  %587 = vmatpush1.msra.mxu0 %v456
  %588 = vmatprep.subr.mxu0 0.0
  %589 = vmatpush2.msra.mxu0 0.0
  %590 = vmatprep.subr.mxu0 0.0
  %591 = vmatpush2.msra.mxu0 0.0
  %592 = vmatprep.subr.mxu0 0.0
  %593 = vmatpush2.msra.mxu0 0.0
  %594 = vmatprep.subr.mxu0 0.0
  %595 = vmatpush2.msra.mxu0 0.0
  %596 = vmatprep.subr.mxu0 0.0
  %597 = vmatpush2.msra.mxu0 0.0
  %598 = vmatprep.subr.mxu0 0.0
  %599 = vmatpush2.msra.mxu0 0.0
  %600 = vmatprep.subr.mxu0 0.0
  %601 = vmatpush2.msra.mxu0 0.0
  %602 = vmatprep.subr.mxu0 0.0
  %603 = vmatpush2.msra.mxu0 0.0
  %604 = vmatprep.subr.mxu0 0.0
  %605 = vmatpush2.msra.mxu0 0.0
  %606 = vmatprep.subr.mxu0 0.0
  %607 = vmatpush2.msra.mxu0 0.0
  %608 = vmatprep.subr.mxu0 0.0
  %609 = vmatpush2.msra.mxu0 0.0
  %610 = vmatprep.subr.mxu0 0.0
  %611 = vmatpush2.msra.mxu0 0.0
  %612 = vmatprep.subr.mxu0 0.0
  %613 = vmatpush2.msra.mxu0 0.0
  %614 = vmatprep.subr.mxu0 0.0
  %615 = vmatpush2.msra.mxu0 0.0
  %616 = vmatprep.subr.mxu0 0.0
  %617 = vmatpush2.msra.mxu0 0.0
  %618 = vmatprep.subr.mxu0 0.0
  %619 = vmatpush2.msra.mxu0 0.0
  %620 = vmatprep.mubr.f32.mxu0 0.0
  %621 = vmatmul.mubr.f32.gmra.mxu0 %v461
  %v622 = vpop.f32.mrf.mxu0
  %v623 = vadd.f32 0.0, %v622
  %v624 = vpop.f32.mrf.mxu0
  %625 = vmatprep.mubr.f32.mxu0 0.0
  %626 = vmatmul.mubr.f32.gmra.mxu0 %v464
  %v627 = vpop.f32.mrf.mxu0
  %v628 = vadd.f32 0.0, %v627
  %v629 = vpop.f32.mrf.mxu0
  %630 = vmatprep.mubr.f32.mxu0 0.0
  %631 = vmatmul.mubr.f32.gmra.mxu0 %v467
  %v632 = vpop.f32.mrf.mxu0
  %v633 = vadd.f32 0.0, %v632
  %v634 = vpop.f32.mrf.mxu0
  %635 = vmatprep.mubr.f32.mxu0 0.0
  %636 = vmatmul.mubr.f32.gmra.mxu0 %v470
  %v637 = vpop.f32.mrf.mxu0
  %v638 = vadd.f32 0.0, %v637
  %v639 = vpop.f32.mrf.mxu0
  %640 = vmatprep.mubr.f32.mxu0 0.0
  %641 = vmatmul.mubr.f32.gmra.mxu0 %v473
  %v642 = vpop.f32.mrf.mxu0
  %v643 = vadd.f32 0.0, %v642
  %v644 = vpop.f32.mrf.mxu0
  %645 = vmatprep.mubr.f32.mxu0 0.0
  %646 = vmatmul.mubr.f32.gmra.mxu0 %v476
  %v647 = vpop.f32.mrf.mxu0
  %v648 = vadd.f32 0.0, %v647
  %v649 = vpop.f32.mrf.mxu0
  %650 = vmatprep.mubr.f32.mxu0 0.0
  %651 = vmatmul.mubr.f32.gmra.mxu0 %v479
  %v652 = vpop.f32.mrf.mxu0
  %v653 = vadd.f32 0.0, %v652
  %v654 = vpop.f32.mrf.mxu0
  %655 = vmatprep.mubr.f32.mxu0 0.0
  %656 = vmatmul.mubr.f32.gmra.mxu0 %v482
  %v657 = vpop.f32.mrf.mxu0
  %v658 = vadd.f32 0.0, %v657
  %v659 = vpop.f32.mrf.mxu0
  %660 = vmatprep.mubr.f32.mxu0 0.0
  %661 = vmatmul.mubr.f32.gmra.mxu0 %v485
  %v662 = vpop.f32.mrf.mxu0
  %v663 = vadd.f32 0.0, %v662
  %v664 = vpop.f32.mrf.mxu0
  %665 = vmatprep.mubr.f32.mxu0 0.0
  %666 = vmatmul.mubr.f32.gmra.mxu0 %v488
  %v667 = vpop.f32.mrf.mxu0
  %v668 = vadd.f32 0.0, %v667
  %v669 = vpop.f32.mrf.mxu0
  %670 = vmatprep.mubr.f32.mxu0 0.0
  %671 = vmatmul.mubr.f32.gmra.mxu0 %v491
  %v672 = vpop.f32.mrf.mxu0
  %v673 = vadd.f32 0.0, %v672
  %v674 = vpop.f32.mrf.mxu0
  %675 = vmatprep.mubr.f32.mxu0 0.0
  %676 = vmatmul.mubr.f32.gmra.mxu0 %v494
  %v677 = vpop.f32.mrf.mxu0
  %v678 = vadd.f32 0.0, %v677
  %v679 = vpop.f32.mrf.mxu0
  %680 = vmatprep.mubr.f32.mxu0 0.0
  %681 = vmatmul.mubr.f32.gmra.mxu0 %v497
  %v682 = vpop.f32.mrf.mxu0
  %v683 = vadd.f32 0.0, %v682
  %v684 = vpop.f32.mrf.mxu0
  %685 = vmatprep.mubr.f32.mxu0 0.0
  %686 = vmatmul.mubr.f32.gmra.mxu0 %v500
  %v687 = vpop.f32.mrf.mxu0
  %v688 = vadd.f32 0.0, %v687
  %v689 = vpop.f32.mrf.mxu0
  %690 = vmatprep.mubr.f32.mxu0 0.0
  %691 = vmatmul.mubr.f32.gmra.mxu0 %v503
  %v692 = vpop.f32.mrf.mxu0
  %v693 = vadd.f32 0.0, %v692
  %v694 = vpop.f32.mrf.mxu0
  %695 = vmatprep.mubr.f32.mxu0 0.0
  %696 = vmatmul.mubr.f32.gmra.mxu0 %v506
  %v697 = vpop.f32.mrf.mxu0
  %v698 = vadd.f32 0.0, %v697
  %v699 = vpop.f32.mrf.mxu0
  %700 = vmatprep.mubr.f32.mxu0 0.0
  %701 = vmatmul.mubr.f32.gmra.mxu0 %v509
  %v702 = vpop.f32.mrf.mxu0
  %v703 = vadd.f32 0.0, %v702
  %v704 = vpop.f32.mrf.mxu0
  %705 = vmatprep.mubr.f32.mxu0 0.0
  %706 = vmatmul.mubr.f32.gmra.mxu0 %v512
  %v707 = vpop.f32.mrf.mxu0
  %v708 = vadd.f32 0.0, %v707
  %v709 = vpop.f32.mrf.mxu0
  %710 = vmatprep.mubr.f32.mxu0 0.0
  %711 = vmatmul.mubr.f32.gmra.mxu0 %v515
  %v712 = vpop.f32.mrf.mxu0
  %v713 = vadd.f32 0.0, %v712
  %v714 = vpop.f32.mrf.mxu0
  %715 = vmatprep.mubr.f32.mxu0 0.0
  %716 = vmatmul.mubr.f32.gmra.mxu0 %v518
  %v717 = vpop.f32.mrf.mxu0
  %v718 = vadd.f32 0.0, %v717
  %v719 = vpop.f32.mrf.mxu0
  %720 = vmatprep.mubr.f32.mxu0 0.0
  %721 = vmatmul.mubr.f32.gmra.mxu0 %v521
  %v722 = vpop.f32.mrf.mxu0
  %v723 = vadd.f32 0.0, %v722
  %v724 = vpop.f32.mrf.mxu0
  %725 = vmatprep.mubr.f32.mxu0 0.0
  %726 = vmatmul.mubr.f32.gmra.mxu0 %v524
  %v727 = vpop.f32.mrf.mxu0
  %v728 = vadd.f32 0.0, %v727
  %v729 = vpop.f32.mrf.mxu0
  %730 = vmatprep.mubr.f32.mxu0 0.0
  %731 = vmatmul.mubr.f32.gmra.mxu0 %v527
  %v732 = vpop.f32.mrf.mxu0
  %v733 = vadd.f32 0.0, %v732
  %v734 = vpop.f32.mrf.mxu0
  %735 = vmatprep.mubr.f32.mxu0 0.0
  %736 = vmatmul.mubr.f32.gmra.mxu0 %v530
  %v737 = vpop.f32.mrf.mxu0
  %v738 = vadd.f32 0.0, %v737
  %v739 = vpop.f32.mrf.mxu0
  %740 = vmatprep.mubr.f32.mxu0 0.0
  %741 = vmatmul.mubr.f32.gmra.mxu0 %v533
  %v742 = vpop.f32.mrf.mxu0
  %v743 = vadd.f32 0.0, %v742
  %v744 = vpop.f32.mrf.mxu0
  %745 = vmatprep.mubr.f32.mxu0 0.0
  %746 = vmatmul.mubr.f32.gmra.mxu0 %v536
  %v747 = vpop.f32.mrf.mxu0
  %v748 = vadd.f32 0.0, %v747
  %v749 = vpop.f32.mrf.mxu0
  %750 = vmatprep.mubr.f32.mxu0 0.0
  %751 = vmatmul.mubr.f32.gmra.mxu0 %v539
  %v752 = vpop.f32.mrf.mxu0
  %v753 = vadd.f32 0.0, %v752
  %v754 = vpop.f32.mrf.mxu0
  %755 = vmatprep.mubr.f32.mxu0 0.0
  %756 = vmatmul.mubr.f32.gmra.mxu0 %v542
  %v757 = vpop.f32.mrf.mxu0
  %v758 = vadd.f32 0.0, %v757
  %v759 = vpop.f32.mrf.mxu0
  %760 = vmatprep.mubr.f32.mxu0 0.0
  %761 = vmatmul.mubr.f32.gmra.mxu0 %v545
  %v762 = vpop.f32.mrf.mxu0
  %v763 = vadd.f32 0.0, %v762
  %v764 = vpop.f32.mrf.mxu0
  %765 = vmatprep.mubr.f32.mxu0 0.0
  %766 = vmatmul.mubr.f32.gmra.mxu0 %v548
  %v767 = vpop.f32.mrf.mxu0
  %v768 = vadd.f32 0.0, %v767
  %v769 = vpop.f32.mrf.mxu0
  %770 = vmatprep.mubr.f32.mxu0 0.0
  %771 = vmatmul.mubr.f32.gmra.mxu0 %v551
  %v772 = vpop.f32.mrf.mxu0
  %v773 = vadd.f32 0.0, %v772
  %v774 = vpop.f32.mrf.mxu0
  %775 = vmatprep.mubr.f32.mxu0 0.0
  %776 = vmatmul.mubr.f32.gmra.mxu0 %v554
  %v777 = vpop.f32.mrf.mxu0
  %v778 = vadd.f32 0.0, %v777
  %v779 = vpop.f32.mrf.mxu0
  %780 = vdwg.mxu0
  %v781 = vld [vmem:[%s3] sm:$0xff]
  %v782 = vld [vmem:[%s3 + $0x8] sm:$0xff]
  %v783 = vld [vmem:[%s3 + $0x10] sm:$0xff]
  %v784 = vld [vmem:[%s3 + $0x18] sm:$0xff]
  %785 = vmatprep.subr.mxu0 0.0
  %786 = vmatpush1.msra.mxu0 0.0
  %787 = vmatprep.subr.mxu0 0.0
  %788 = vmatpush1.msra.mxu0 0.0
  %789 = vmatprep.subr.mxu0 0.0
  %790 = vmatpush1.msra.mxu0 0.0
  %791 = vmatprep.subr.mxu0 0.0
  %792 = vmatpush1.msra.mxu0 0.0
  %793 = vmatprep.subr.mxu0 0.0
  %794 = vmatpush1.msra.mxu0 0.0
  %795 = vmatprep.subr.mxu0 0.0
  %796 = vmatpush1.msra.mxu0 0.0
  %797 = vmatprep.subr.mxu0 0.0
  %798 = vmatpush1.msra.mxu0 0.0
  %799 = vmatprep.subr.mxu0 0.0
  %800 = vmatpush1.msra.mxu0 0.0
  %801 = vmatprep.subr.mxu0 0.0
  %802 = vmatpush1.msra.mxu0 0.0
  %803 = vmatprep.subr.mxu0 0.0
  %804 = vmatpush1.msra.mxu0 0.0
  %805 = vmatprep.subr.mxu0 0.0
  %806 = vmatpush1.msra.mxu0 0.0
  %807 = vmatprep.subr.mxu0 0.0
  %808 = vmatpush1.msra.mxu0 0.0
  %809 = vmatprep.subr.mxu0 0.0
  %810 = vmatpush1.msra.mxu0 %v784
  %811 = vmatprep.subr.mxu0 0.0
  %812 = vmatpush1.msra.mxu0 %v783
  %813 = vmatprep.subr.mxu0 0.0
  %814 = vmatpush1.msra.mxu0 %v782
  %815 = vmatprep.subr.mxu0 0.0
  %816 = vmatpush1.msra.mxu0 %v781
  %817 = vmatprep.subr.mxu0 0.0
  %818 = vmatpush2.msra.mxu0 0.0
  %819 = vmatprep.subr.mxu0 0.0
  %820 = vmatpush2.msra.mxu0 0.0
  %821 = vmatprep.subr.mxu0 0.0
  %822 = vmatpush2.msra.mxu0 0.0
  %823 = vmatprep.subr.mxu0 0.0
  %824 = vmatpush2.msra.mxu0 0.0
  %825 = vmatprep.subr.mxu0 0.0
  %826 = vmatpush2.msra.mxu0 0.0
  %827 = vmatprep.subr.mxu0 0.0
  %828 = vmatpush2.msra.mxu0 0.0
  %829 = vmatprep.subr.mxu0 0.0
  %830 = vmatpush2.msra.mxu0 0.0
  %831 = vmatprep.subr.mxu0 0.0
  %832 = vmatpush2.msra.mxu0 0.0
  %833 = vmatprep.subr.mxu0 0.0
  %834 = vmatpush2.msra.mxu0 0.0
  %835 = vmatprep.subr.mxu0 0.0
  %836 = vmatpush2.msra.mxu0 0.0
  %837 = vmatprep.subr.mxu0 0.0
  %838 = vmatpush2.msra.mxu0 0.0
  %839 = vmatprep.subr.mxu0 0.0
  %840 = vmatpush2.msra.mxu0 0.0
  %841 = vmatprep.subr.mxu0 0.0
  %842 = vmatpush2.msra.mxu0 0.0
  %843 = vmatprep.subr.mxu0 0.0
  %844 = vmatpush2.msra.mxu0 0.0
  %845 = vmatprep.subr.mxu0 0.0
  %846 = vmatpush2.msra.mxu0 0.0
  %847 = vmatprep.subr.mxu0 0.0
  %848 = vmatpush2.msra.mxu0 0.0
  %849 = vmatprep.mubr.f32.mxu0 0.0
  %850 = vmatmul.mubr.f32.gmra.mxu0 %v461
  %v851 = vpop.f32.mrf.mxu0
  %v852 = vadd.f32 0.0, %v851
  %v853 = vpop.f32.mrf.mxu0
  %854 = vmatprep.mubr.f32.mxu0 0.0
  %855 = vmatmul.mubr.f32.gmra.mxu0 %v464
  %v856 = vpop.f32.mrf.mxu0
  %v857 = vadd.f32 0.0, %v856
  %v858 = vpop.f32.mrf.mxu0
  %859 = vmatprep.mubr.f32.mxu0 0.0
  %860 = vmatmul.mubr.f32.gmra.mxu0 %v467
  %v861 = vpop.f32.mrf.mxu0
  %v862 = vadd.f32 0.0, %v861
  %v863 = vpop.f32.mrf.mxu0
  %864 = vmatprep.mubr.f32.mxu0 0.0
  %865 = vmatmul.mubr.f32.gmra.mxu0 %v470
  %v866 = vpop.f32.mrf.mxu0
  %v867 = vadd.f32 0.0, %v866
  %v868 = vpop.f32.mrf.mxu0
  %869 = vmatprep.mubr.f32.mxu0 0.0
  %870 = vmatmul.mubr.f32.gmra.mxu0 %v473
  %v871 = vpop.f32.mrf.mxu0
  %v872 = vadd.f32 0.0, %v871
  %v873 = vpop.f32.mrf.mxu0
  %874 = vmatprep.mubr.f32.mxu0 0.0
  %875 = vmatmul.mubr.f32.gmra.mxu0 %v476
  %v876 = vpop.f32.mrf.mxu0
  %v877 = vadd.f32 0.0, %v876
  %v878 = vpop.f32.mrf.mxu0
  %879 = vmatprep.mubr.f32.mxu0 0.0
  %880 = vmatmul.mubr.f32.gmra.mxu0 %v479
  %v881 = vpop.f32.mrf.mxu0
  %v882 = vadd.f32 0.0, %v881
  %v883 = vpop.f32.mrf.mxu0
  %884 = vmatprep.mubr.f32.mxu0 0.0
  %885 = vmatmul.mubr.f32.gmra.mxu0 %v482
  %v886 = vpop.f32.mrf.mxu0
  %v887 = vadd.f32 0.0, %v886
  %v888 = vpop.f32.mrf.mxu0
  %889 = vmatprep.mubr.f32.mxu0 0.0
  %890 = vmatmul.mubr.f32.gmra.mxu0 %v485
  %v891 = vpop.f32.mrf.mxu0
  %v892 = vadd.f32 0.0, %v891
  %v893 = vpop.f32.mrf.mxu0
  %894 = vmatprep.mubr.f32.mxu0 0.0
  %895 = vmatmul.mubr.f32.gmra.mxu0 %v488
  %v896 = vpop.f32.mrf.mxu0
  %v897 = vadd.f32 0.0, %v896
  %v898 = vpop.f32.mrf.mxu0
  %899 = vmatprep.mubr.f32.mxu0 0.0
  %900 = vmatmul.mubr.f32.gmra.mxu0 %v491
  %v901 = vpop.f32.mrf.mxu0
  %v902 = vadd.f32 0.0, %v901
  %v903 = vpop.f32.mrf.mxu0
  %904 = vmatprep.mubr.f32.mxu0 0.0
  %905 = vmatmul.mubr.f32.gmra.mxu0 %v494
  %v906 = vpop.f32.mrf.mxu0
  %v907 = vadd.f32 0.0, %v906
  %v908 = vpop.f32.mrf.mxu0
  %909 = vmatprep.mubr.f32.mxu0 0.0
  %910 = vmatmul.mubr.f32.gmra.mxu0 %v497
  %v911 = vpop.f32.mrf.mxu0
  %v912 = vadd.f32 0.0, %v911
  %v913 = vpop.f32.mrf.mxu0
  %914 = vmatprep.mubr.f32.mxu0 0.0
  %915 = vmatmul.mubr.f32.gmra.mxu0 %v500
  %v916 = vpop.f32.mrf.mxu0
  %v917 = vadd.f32 0.0, %v916
  %v918 = vpop.f32.mrf.mxu0
  %919 = vmatprep.mubr.f32.mxu0 0.0
  %920 = vmatmul.mubr.f32.gmra.mxu0 %v503
  %v921 = vpop.f32.mrf.mxu0
  %v922 = vadd.f32 0.0, %v921
  %v923 = vpop.f32.mrf.mxu0
  %924 = vmatprep.mubr.f32.mxu0 0.0
  %925 = vmatmul.mubr.f32.gmra.mxu0 %v506
  %v926 = vpop.f32.mrf.mxu0
  %v927 = vadd.f32 0.0, %v926
  %v928 = vpop.f32.mrf.mxu0
  %929 = vmatprep.mubr.f32.mxu0 0.0
  %930 = vmatmul.mubr.f32.gmra.mxu0 %v509
  %v931 = vpop.f32.mrf.mxu0
  %v932 = vadd.f32 0.0, %v931
  %v933 = vpop.f32.mrf.mxu0
  %934 = vmatprep.mubr.f32.mxu0 0.0
  %935 = vmatmul.mubr.f32.gmra.mxu0 %v512
  %v936 = vpop.f32.mrf.mxu0
  %v937 = vadd.f32 0.0, %v936
  %v938 = vpop.f32.mrf.mxu0
  %939 = vmatprep.mubr.f32.mxu0 0.0
  %940 = vmatmul.mubr.f32.gmra.mxu0 %v515
  %v941 = vpop.f32.mrf.mxu0
  %v942 = vadd.f32 0.0, %v941
  %v943 = vpop.f32.mrf.mxu0
  %944 = vmatprep.mubr.f32.mxu0 0.0
  %945 = vmatmul.mubr.f32.gmra.mxu0 %v518
  %v946 = vpop.f32.mrf.mxu0
  %v947 = vadd.f32 0.0, %v946
  %v948 = vpop.f32.mrf.mxu0
  %949 = vmatprep.mubr.f32.mxu0 0.0
  %950 = vmatmul.mubr.f32.gmra.mxu0 %v521
  %v951 = vpop.f32.mrf.mxu0
  %v952 = vadd.f32 0.0, %v951
  %v953 = vpop.f32.mrf.mxu0
  %954 = vmatprep.mubr.f32.mxu0 0.0
  %955 = vmatmul.mubr.f32.gmra.mxu0 %v524
  %v956 = vpop.f32.mrf.mxu0
  %v957 = vadd.f32 0.0, %v956
  %v958 = vpop.f32.mrf.mxu0
  %959 = vmatprep.mubr.f32.mxu0 0.0
  %960 = vmatmul.mubr.f32.gmra.mxu0 %v527
  %v961 = vpop.f32.mrf.mxu0
  %v962 = vadd.f32 0.0, %v961
  %v963 = vpop.f32.mrf.mxu0
  %964 = vmatprep.mubr.f32.mxu0 0.0
  %965 = vmatmul.mubr.f32.gmra.mxu0 %v530
  %v966 = vpop.f32.mrf.mxu0
  %v967 = vadd.f32 0.0, %v966
  %v968 = vpop.f32.mrf.mxu0
  %969 = vmatprep.mubr.f32.mxu0 0.0
  %970 = vmatmul.mubr.f32.gmra.mxu0 %v533
  %v971 = vpop.f32.mrf.mxu0
  %v972 = vadd.f32 0.0, %v971
  %v973 = vpop.f32.mrf.mxu0
  %974 = vmatprep.mubr.f32.mxu0 0.0
  %975 = vmatmul.mubr.f32.gmra.mxu0 %v536
  %v976 = vpop.f32.mrf.mxu0
  %v977 = vadd.f32 0.0, %v976
  %v978 = vpop.f32.mrf.mxu0
  %979 = vmatprep.mubr.f32.mxu0 0.0
  %980 = vmatmul.mubr.f32.gmra.mxu0 %v539
  %v981 = vpop.f32.mrf.mxu0
  %v982 = vadd.f32 0.0, %v981
  %v983 = vpop.f32.mrf.mxu0
  %984 = vmatprep.mubr.f32.mxu0 0.0
  %985 = vmatmul.mubr.f32.gmra.mxu0 %v542
  %v986 = vpop.f32.mrf.mxu0
  %v987 = vadd.f32 0.0, %v986
  %v988 = vpop.f32.mrf.mxu0
  %989 = vmatprep.mubr.f32.mxu0 0.0
  %990 = vmatmul.mubr.f32.gmra.mxu0 %v545
  %v991 = vpop.f32.mrf.mxu0
  %v992 = vadd.f32 0.0, %v991
  %v993 = vpop.f32.mrf.mxu0
  %994 = vmatprep.mubr.f32.mxu0 0.0
  %995 = vmatmul.mubr.f32.gmra.mxu0 %v548
  %v996 = vpop.f32.mrf.mxu0
  %v997 = vadd.f32 0.0, %v996
  %v998 = vpop.f32.mrf.mxu0
  %999 = vmatprep.mubr.f32.mxu0 0.0
  %1000 = vmatmul.mubr.f32.gmra.mxu0 %v551
  %v1001 = vpop.f32.mrf.mxu0
  %v1002 = vadd.f32 0.0, %v1001
  %v1003 = vpop.f32.mrf.mxu0
  %1004 = vmatprep.mubr.f32.mxu0 0.0
  %1005 = vmatmul.mubr.f32.gmra.mxu0 %v554
  %v1006 = vpop.f32.mrf.mxu0
  %v1007 = vadd.f32 0.0, %v1006
  %v1008 = vpop.f32.mrf.mxu0
  %1009 = vdwg.mxu0
  %1010 = vxpose.xlu0.b32.start [1/16] %v623, 128
  %1011 = vxpose.xlu0.b32.cont [2/16] %v628, 128
  %1012 = vxpose.xlu0.b32.cont [3/16] %v633, 128
  %1013 = vxpose.xlu0.b32.cont [4/16] %v638, 128
  %1014 = vxpose.xlu0.b32.cont [5/16] %v643, 128
  %1015 = vxpose.xlu0.b32.cont [6/16] %v648, 128
  %1016 = vxpose.xlu0.b32.cont [7/16] %v653, 128
  %1017 = vxpose.xlu0.b32.cont [8/16] %v658, 128
  %1018 = vxpose.xlu0.b32.cont [9/16] %v663, 128
  %1019 = vxpose.xlu0.b32.cont [10/16] %v668, 128
  %1020 = vxpose.xlu0.b32.cont [11/16] %v673, 128
  %1021 = vxpose.xlu0.b32.cont [12/16] %v678, 128
  %1022 = vxpose.xlu0.b32.cont [13/16] %v683, 128
  %1023 = vxpose.xlu0.b32.cont [14/16] %v688, 128
  %1024 = vxpose.xlu0.b32.cont [15/16] %v693, 128
  %1025 = vxpose.xlu0.b32.end [16/16] %v698, 128
  %v1026 = vpop.trf.xlu0
  %v1027 = vpop.trf.xlu0
  %v1028 = vpop.trf.xlu0
  %v1029 = vpop.trf.xlu0
  %v1030 = vpop.trf.xlu0
  %v1031 = vpop.trf.xlu0
  %v1032 = vpop.trf.xlu0
  %v1033 = vpop.trf.xlu0
  %v1034 = vpop.trf.xlu0
  %v1035 = vpop.trf.xlu0
  %v1036 = vpop.trf.xlu0
  %v1037 = vpop.trf.xlu0
  %v1038 = vpop.trf.xlu0
  %v1039 = vpop.trf.xlu0
  %v1040 = vpop.trf.xlu0
  %v1041 = vpop.trf.xlu0
  %1042 = vxpose.xlu0.b32.start [1/16] %v703, 128
  %1043 = vxpose.xlu0.b32.cont [2/16] %v708, 128
  %1044 = vxpose.xlu0.b32.cont [3/16] %v713, 128
  %1045 = vxpose.xlu0.b32.cont [4/16] %v718, 128
  %1046 = vxpose.xlu0.b32.cont [5/16] %v723, 128
  %1047 = vxpose.xlu0.b32.cont [6/16] %v728, 128
  %1048 = vxpose.xlu0.b32.cont [7/16] %v733, 128
  %1049 = vxpose.xlu0.b32.cont [8/16] %v738, 128
  %1050 = vxpose.xlu0.b32.cont [9/16] %v743, 128
  %1051 = vxpose.xlu0.b32.cont [10/16] %v748, 128
  %1052 = vxpose.xlu0.b32.cont [11/16] %v753, 128
  %1053 = vxpose.xlu0.b32.cont [12/16] %v758, 128
  %1054 = vxpose.xlu0.b32.cont [13/16] %v763, 128
  %1055 = vxpose.xlu0.b32.cont [14/16] %v768, 128
  %1056 = vxpose.xlu0.b32.cont [15/16] %v773, 128
  %1057 = vxpose.xlu0.b32.end [16/16] %v778, 128
  %v1058 = vpop.trf.xlu0
  %v1059 = vpop.trf.xlu0
  %v1060 = vpop.trf.xlu0
  %v1061 = vpop.trf.xlu0
  %v1062 = vpop.trf.xlu0
  %v1063 = vpop.trf.xlu0
  %v1064 = vpop.trf.xlu0
  %v1065 = vpop.trf.xlu0
  %v1066 = vpop.trf.xlu0
  %v1067 = vpop.trf.xlu0
  %v1068 = vpop.trf.xlu0
  %v1069 = vpop.trf.xlu0
  %v1070 = vpop.trf.xlu0
  %v1071 = vpop.trf.xlu0
  %v1072 = vpop.trf.xlu0
  %v1073 = vpop.trf.xlu0
  %v1076 = vcombine.low %v1026, %v1058
  %1078 = vst [vmem:[%s5] sm:$0xff] %v1076
  %vm1079 = vcmask 31744
  %1080 = vst.msk [vmem:[%s6] sm:$0xff] %vm1079, %v852
  %1081 = vst.msk [vmem:[%s6 + $0x8] sm:$0xff] %vm1079, %v857
  %1082 = vst.msk [vmem:[%s6 + $0x10] sm:$0xff] %vm1079, %v862
  %1083 = vst.msk [vmem:[%s6 + $0x18] sm:$0xff] %vm1079, %v867
  %1084 = vst.msk [vmem:[%s6 + $0x20] sm:$0xff] %vm1079, %v872
  %1085 = vst.msk [vmem:[%s6 + $0x28] sm:$0xff] %vm1079, %v877
  %1086 = vst.msk [vmem:[%s6 + $0x30] sm:$0xff] %vm1079, %v882
  %1087 = vst.msk [vmem:[%s6 + $0x38] sm:$0xff] %vm1079, %v887
  %1088 = vst.msk [vmem:[%s6 + $0x40] sm:$0xff] %vm1079, %v892
  %1089 = vst.msk [vmem:[%s6 + $0x48] sm:$0xff] %vm1079, %v897
  %1090 = vst.msk [vmem:[%s6 + $0x50] sm:$0xff] %vm1079, %v902
  %1091 = vst.msk [vmem:[%s6 + $0x58] sm:$0xff] %vm1079, %v907
  %1092 = vst.msk [vmem:[%s6 + $0x60] sm:$0xff] %vm1079, %v912
  %1093 = vst.msk [vmem:[%s6 + $0x68] sm:$0xff] %vm1079, %v917
  %1094 = vst.msk [vmem:[%s6 + $0x70] sm:$0xff] %vm1079, %v922
  %1095 = vst.msk [vmem:[%s6 + $0x78] sm:$0xff] %vm1079, %v927
  %1096 = vst.msk [vmem:[%s6 + $0x80] sm:$0xff] %vm1079, %v932
  %1097 = vst.msk [vmem:[%s6 + $0x88] sm:$0xff] %vm1079, %v937
  %1098 = vst.msk [vmem:[%s6 + $0x90] sm:$0xff] %vm1079, %v942
  %1099 = vst.msk [vmem:[%s6 + $0x98] sm:$0xff] %vm1079, %v947
  %1100 = vst.msk [vmem:[%s6 + $0xa0] sm:$0xff] %vm1079, %v952
  %1101 = vst.msk [vmem:[%s6 + $0xa8] sm:$0xff] %vm1079, %v957
  %1102 = vst.msk [vmem:[%s6 + $0xb0] sm:$0xff] %vm1079, %v962
  %1103 = vst.msk [vmem:[%s6 + $0xb8] sm:$0xff] %vm1079, %v967
  %1104 = vst.msk [vmem:[%s6 + $0xc0] sm:$0xff] %vm1079, %v972
  %1105 = vst.msk [vmem:[%s6 + $0xc8] sm:$0xff] %vm1079, %v977
  %1106 = vst.msk [vmem:[%s6 + $0xd0] sm:$0xff] %vm1079, %v982
  %1107 = vst.msk [vmem:[%s6 + $0xd8] sm:$0xff] %vm1079, %v987
  %1108 = vst.msk [vmem:[%s6 + $0xe0] sm:$0xff] %vm1079, %v992
  %1109 = vst.msk [vmem:[%s6 + $0xe8] sm:$0xff] %vm1079, %v997
  %1110 = vst.msk [vmem:[%s6 + $0xf0] sm:$0xff] %vm1079, %v1002
  %1111 = vst.msk [vmem:[%s6 + $0xf8] sm:$0xff] %vm1079, %v1007
  // Predicated region
  $region18: #{gat_conv_forward.2} parent=0 // pred_check
    _
  $region19: #{gat_conv_forward.2} parent=0 // pred_check_branch
    %1113 = sbr.rel (0) target = $region21
  $region20: #{gat_conv_forward.2} parent=0 // pred_region
    _
  $region21: #{gat_conv_forward.2} parent=0 // pred_fallthru
    _
  // Predicated region
  $region22: #{gat_conv_forward.2} parent=0 // pred_check
    _
  $region23: #{gat_conv_forward.2} parent=0 // pred_check_branch
    %1115 = sbr.rel (0) target = $region25
  $region24: #{gat_conv_forward.2} parent=0 // pred_region
    _
  $region25: #{gat_conv_forward.2} parent=0 // pred_fallthru
    _
  // Predicated region
  $region26: #{gat_conv_forward.2} parent=0 // pred_check
    _
  $region27: #{gat_conv_forward.2} parent=0 // pred_check_branch
    %1117 = sbr.rel (0) target = $region29
  $region28: #{gat_conv_forward.2} parent=0 // pred_region
    _
  $region29: #{gat_conv_forward.2} parent=0 // pred_fallthru
    _
  // Predicated region
  $region30: #{gat_conv_forward.2} parent=0 // pred_check
    _
  $region31: #{gat_conv_forward.2} parent=0 // pred_check_branch
    %1119 = sbr.rel (0) target = $region33
  $region32: #{gat_conv_forward.2} parent=0 // pred_region
    _
  $region33: #{gat_conv_forward.2} parent=0 // pred_fallthru
    _
  // Predicated region
  $region34: #{gat_conv_forward.2} parent=0 // pred_check
    _
  $region35: #{gat_conv_forward.2} parent=0 // pred_check_branch
    %1121 = sbr.rel (0) target = $region37
  $region36: #{gat_conv_forward.2} parent=0 // pred_region
    _
  $region37: #{gat_conv_forward.2} parent=0 // pred_fallthru
    _
  // Predicated region
  $region38: #{gat_conv_forward.2} parent=0 // pred_check
    _
  $region39: #{gat_conv_forward.2} parent=0 // pred_check_branch
    %1123 = sbr.rel (0) target = $region41
  $region40: #{gat_conv_forward.2} parent=0 // pred_region
    _
  $region41: #{gat_conv_forward.2} parent=0 // pred_fallthru
    _

// kernel: gat_conv_forward.3
$region0: #{gat_conv_forward.3}
  #allocation0 [shape = 'u32[]', space=smem, size = 0x4, offset = 0x4, fixed_abs, tag = 'smem constant byte address 0x4 - core index']
  #allocation1 [shape = 'u32[144,128]{1,0:T(1,128)}', space=vmem, size = 0x12000, scoped, tag = 'internal scratch']
  %s0 = inlined_call_operand.vmem [shape: s8[256,256], index: 0, kind: input, shape index: {}]
  %s1 = inlined_call_operand.vmem [shape: f32[256,4], index: 1, kind: input, shape index: {}]
  %s2 = inlined_call_operand.vmem [shape: f32[4,256], index: 2, kind: input, shape index: {}]
  %s3 = inlined_call_operand.vmem [shape: bf16[256,64], index: 3, kind: input, shape index: {}]
  %s4 = inlined_call_operand.vmem [shape: f32[1,64], index: 4, kind: input, shape index: {}]
  %s5 = inlined_call_operand.vmem [shape: f32[256,64], index: 5, kind: output, shape index: {}]
  %s6 = sld [smem:[#allocation0]]
  $region53: #{gat_conv_forward.3} parent=0
    _
  %s8 = ssub.s32 1, %s6
  %s9 = scalar_select 0, %s8, %s6
  loop: start=0, step=1, limit=4
  $region2: #{gat_conv_forward.3} parent=0 // loop_pre_header
    _
  $region3: #{gat_conv_forward.3} parent=0 // loop_header
    %s11 = sphi 0, %s15
    %p12 = scmp.ge.s32.totalorder %s11, 4
    %s21 = sphi 0, %s23
    %s24 = sphi 0, %s21
    %s25 = sphi 0, %s24
    %s41 = sphi 0, %s25
    %s47 = sphi 0, %s49
    %s50 = sphi 0, %s47
    %s51 = sphi 0, %s50
    %s67 = sphi 0, %s51
    %s71 = sphi 0, %s71
    %s73 = sphi 0, %s71
    %s74 = sphi 0, %s73
    %s88 = sphi 0, %s74
    %s92 = sphi 0, %s92
    %s94 = sphi 0, %s92
    %s95 = sphi 0, %s94
    %s109 = sphi 0, %s95
    %s113 = sphi 0, %s113
    %s115 = sphi 0, %s113
    %s116 = sphi 0, %s115
    %s130 = sphi 0, %s116
    %s136 = sphi 0, %s138
    %s139 = sphi 0, %s136
    %s140 = sphi 0, %s139
    %s156 = sphi 0, %s140
  $region4: #{gat_conv_forward.3} parent=0 // loop_header_branch
    %14 = sbr.rel (%p12) target = $region8
  $region5: #{gat_conv_forward.3} parent=0 // loop_body
    %s16 = ssub.s32 %s11, 1
    %s17 = ssub.s32 %s11, 2
    %s18 = sadd.s32 %s11, 1
    %s19 = ssub.s32 %s11, %s18
    %p20 = scmp.eq.s32.totalorder %s19, 0
    %s22 = sadd.s32 %s21, 1
    %s23 = scalar_select %p20, %s21, %s22
    %p26 = pneg %p20
    %p27 = scmp.eq.s32.totalorder %s11, 1
    %p28 = por %p26, %p27
    %p29 = scmp.ne.s32.totalorder %s21, %s24
    %p30 = scmp.eq.s32.totalorder %s11, 0
    %p31 = por %p29, %p30
    %p32 = scmp.ne.s32.totalorder %s21, %s24
    %p33 = scmp.eq.s32.totalorder %s16, 1
    %p34 = por %p32, %p33
    %p35 = scmp.ne.s32.totalorder %s24, %s25
    %p36 = scmp.eq.s32.totalorder %s16, 0
    %p37 = por %p35, %p36
    %p38 = scmp.ne.s32.totalorder %s24, %s25
    %p39 = scmp.eq.s32.totalorder %s17, 1
    %p40 = por %p38, %p39
    %p42 = scmp.ne.s32.totalorder %s25, %s41
    %p43 = scmp.eq.s32.totalorder %s17, 0
    %p44 = por %p42, %p43
    %s45 = ssub.s32 %s11, %s18
    %p46 = scmp.eq.s32.totalorder %s45, 0
    %s48 = sadd.s32 %s47, 1
    %s49 = scalar_select %p46, %s47, %s48
    %p52 = pneg %p46
    %p53 = scmp.eq.s32.totalorder %s11, 1
    %p54 = por %p52, %p53
    %p55 = scmp.ne.s32.totalorder %s47, %s50
    %p56 = scmp.eq.s32.totalorder %s11, 0
    %p57 = por %p55, %p56
    %p58 = scmp.ne.s32.totalorder %s47, %s50
    %p59 = scmp.eq.s32.totalorder %s16, 1
    %p60 = por %p58, %p59
    %p61 = scmp.ne.s32.totalorder %s50, %s51
    %p62 = scmp.eq.s32.totalorder %s16, 0
    %p63 = por %p61, %p62
    %p64 = scmp.ne.s32.totalorder %s50, %s51
    %p65 = scmp.eq.s32.totalorder %s17, 1
    %p66 = por %p64, %p65
    %p68 = scmp.ne.s32.totalorder %s51, %s67
    %p69 = scmp.eq.s32.totalorder %s17, 0
    %p70 = por %p68, %p69
    %s72 = sadd.s32 %s71, 1
    %p75 = scmp.eq.s32.totalorder %s11, 1
    %p76 = scmp.ne.s32.totalorder %s71, %s73
    %p77 = scmp.eq.s32.totalorder %s11, 0
    %p78 = por %p76, %p77
    %p79 = scmp.ne.s32.totalorder %s71, %s73
    %p80 = scmp.eq.s32.totalorder %s16, 1
    %p81 = por %p79, %p80
    %p82 = scmp.ne.s32.totalorder %s73, %s74
    %p83 = scmp.eq.s32.totalorder %s16, 0
    %p84 = por %p82, %p83
    %p85 = scmp.ne.s32.totalorder %s73, %s74
    %p86 = scmp.eq.s32.totalorder %s17, 1
    %p87 = por %p85, %p86
    %p89 = scmp.ne.s32.totalorder %s74, %s88
    %p90 = scmp.eq.s32.totalorder %s17, 0
    %p91 = por %p89, %p90
    %s93 = sadd.s32 %s92, 1
    %p96 = scmp.eq.s32.totalorder %s11, 1
    %p97 = scmp.ne.s32.totalorder %s92, %s94
    %p98 = scmp.eq.s32.totalorder %s11, 0
    %p99 = por %p97, %p98
    %p100 = scmp.ne.s32.totalorder %s92, %s94
    %p101 = scmp.eq.s32.totalorder %s16, 1
    %p102 = por %p100, %p101
    %p103 = scmp.ne.s32.totalorder %s94, %s95
    %p104 = scmp.eq.s32.totalorder %s16, 0
    %p105 = por %p103, %p104
    %p106 = scmp.ne.s32.totalorder %s94, %s95
    %p107 = scmp.eq.s32.totalorder %s17, 1
    %p108 = por %p106, %p107
    %p110 = scmp.ne.s32.totalorder %s95, %s109
    %p111 = scmp.eq.s32.totalorder %s17, 0
    %p112 = por %p110, %p111
    %s114 = sadd.s32 %s113, 1
    %p117 = scmp.eq.s32.totalorder %s11, 1
    %p118 = scmp.ne.s32.totalorder %s113, %s115
    %p119 = scmp.eq.s32.totalorder %s11, 0
    %p120 = por %p118, %p119
    %p121 = scmp.ne.s32.totalorder %s113, %s115
    %p122 = scmp.eq.s32.totalorder %s16, 1
    %p123 = por %p121, %p122
    %p124 = scmp.ne.s32.totalorder %s115, %s116
    %p125 = scmp.eq.s32.totalorder %s16, 0
    %p126 = por %p124, %p125
    %p127 = scmp.ne.s32.totalorder %s115, %s116
    %p128 = scmp.eq.s32.totalorder %s17, 1
    %p129 = por %p127, %p128
    %p131 = scmp.ne.s32.totalorder %s116, %s130
    %p132 = scmp.eq.s32.totalorder %s17, 0
    %p133 = por %p131, %p132
    %s134 = ssub.s32 %s11, %s18
    %p135 = scmp.eq.s32.totalorder %s134, 0
    %s137 = sadd.s32 %s136, 1
    %s138 = scalar_select %p135, %s136, %s137
    %p141 = pneg %p135
    %p142 = scmp.eq.s32.totalorder %s11, 1
    %p143 = por %p141, %p142
    %p144 = scmp.ne.s32.totalorder %s136, %s139
    %p145 = scmp.eq.s32.totalorder %s11, 0
    %p146 = por %p144, %p145
    %p147 = scmp.ne.s32.totalorder %s136, %s139
    %p148 = scmp.eq.s32.totalorder %s16, 1
    %p149 = por %p147, %p148
    %p150 = scmp.ne.s32.totalorder %s139, %s140
    %p151 = scmp.eq.s32.totalorder %s16, 0
    %p152 = por %p150, %p151
    %p153 = scmp.ne.s32.totalorder %s139, %s140
    %p154 = scmp.eq.s32.totalorder %s17, 1
    %p155 = por %p153, %p154
    %p157 = scmp.ne.s32.totalorder %s140, %s156
    %p158 = scmp.eq.s32.totalorder %s17, 0
    %p159 = por %p157, %p158
    %p160 = scmp.le.s32.totalorder 1, %s11
    %p161 = scmp.lt.s32.totalorder %s11, 3
    %p162 = pnand %p160, %p161
    %p163 = pneg %p162
    // Predicated region
    $region9: #{gat_conv_forward.3} parent=5 // pred_check
      _
    $region10: #{gat_conv_forward.3} parent=5 // pred_check_branch
      %165 = sbr.rel (%p162) target = $region12
    $region11: #{gat_conv_forward.3} parent=5 // pred_region
      %s166 = ssub.s32 %s11, 1
      // Predicated region
      $region13: #{gat_conv_forward.3} parent=11 // pred_check
        %p167 = pneg %p84
      $region14: #{gat_conv_forward.3} parent=11 // pred_check_branch
        %169 = sbr.rel (%p167) target = $region16
      $region15: #{gat_conv_forward.3} parent=11 // pred_region
        _
      $region16: #{gat_conv_forward.3} parent=11 // pred_fallthru
        _
      // Predicated region
      $region17: #{gat_conv_forward.3} parent=11 // pred_check
        %p170 = pneg %p105
      $region18: #{gat_conv_forward.3} parent=11 // pred_check_branch
        %172 = sbr.rel (%p170) target = $region20
      $region19: #{gat_conv_forward.3} parent=11 // pred_region
        _
      $region20: #{gat_conv_forward.3} parent=11 // pred_fallthru
        _
      // Predicated region
      $region21: #{gat_conv_forward.3} parent=11 // pred_check
        %p173 = pneg %p126
      $region22: #{gat_conv_forward.3} parent=11 // pred_check_branch
        %175 = sbr.rel (%p173) target = $region24
      $region23: #{gat_conv_forward.3} parent=11 // pred_region
        _
      $region24: #{gat_conv_forward.3} parent=11 // pred_fallthru
        _
    $region12: #{gat_conv_forward.3} parent=5 // pred_fallthru
      _
    %p176 = scmp.lt.s32.totalorder %s11, 2
    // Predicated region
    $region25: #{gat_conv_forward.3} parent=5 // pred_check
      %p177 = pneg %p176
    $region26: #{gat_conv_forward.3} parent=5 // pred_check_branch
      %179 = sbr.rel (%p177) target = $region28
    $region27: #{gat_conv_forward.3} parent=5 // pred_region
      // Predicated region
      $region29: #{gat_conv_forward.3} parent=27 // pred_check
        %p180 = pneg %p31
      $region30: #{gat_conv_forward.3} parent=27 // pred_check_branch
        %182 = sbr.rel (%p180) target = $region32
      $region31: #{gat_conv_forward.3} parent=27 // pred_region
        %s183 = smul.u32 4, %s11
        %p184 = scmp.lt.s32.totalorder %s183, 7
        %s185 = scalar_select %p184, %s183, 7
        %s186 = smul.addr %s185, 2
        %s187 = smul.addr %s186, 8
        %s188 = scalar_lea.vmem %s0, %s187
        %s189 = smul.u32 4, %s11
      $region32: #{gat_conv_forward.3} parent=27 // pred_fallthru
        _
      // Predicated region
      $region33: #{gat_conv_forward.3} parent=27 // pred_check
        %p190 = pneg %p57
      $region34: #{gat_conv_forward.3} parent=27 // pred_check_branch
        %192 = sbr.rel (%p190) target = $region36
      $region35: #{gat_conv_forward.3} parent=27 // pred_region
        %s193 = smul.u32 16, %s11
        %p194 = scmp.lt.s32.totalorder %s193, 31
        %s195 = scalar_select %p194, %s193, 31
        %s196 = smul.addr %s195, 8
        %s197 = scalar_lea.vmem %s1, %s196
        %s198 = smul.u32 16, %s11
      $region36: #{gat_conv_forward.3} parent=27 // pred_fallthru
        _
    $region28: #{gat_conv_forward.3} parent=5 // pred_fallthru
      _
    %p199 = scmp.le.s32.totalorder 1, %s11
    %p200 = scmp.lt.s32.totalorder %s11, 3
    %p201 = pnand %p199, %p200
    %p202 = pneg %p201
    // Predicated region
    $region37: #{gat_conv_forward.3} parent=5 // pred_check
      _
    $region38: #{gat_conv_forward.3} parent=5 // pred_check_branch
      %204 = sbr.rel (%p201) target = $region40
    $region39: #{gat_conv_forward.3} parent=5 // pred_region
      %s205 = ssub.s32 %s11, 1
      %s206 = smul.u32 4, %s16
      %p207 = scmp.lt.s32.totalorder %s206, 7
      %s208 = scalar_select %p207, %s206, 7
      %s209 = smul.addr %s208, 2
      %s210 = smul.addr %s209, 8
      %s211 = scalar_lea.vmem %s0, %s210
      %p212 = pneg %p37
      %p213 = pneg %p34
      %s214 = smul.u32 16, %s16
      %p215 = scmp.lt.s32.totalorder %s214, 31
      %s216 = scalar_select %p215, %s214, 31
      %s217 = smul.addr %s216, 8
      %s218 = scalar_lea.vmem %s1, %s217
      %p219 = pneg %p63
      %p220 = pneg %p60
      %p221 = pneg %p84
      %p222 = pneg %p81
      %p223 = pneg %p105
      %p224 = pneg %p102
      %p225 = pneg %p126
      %p226 = pneg %p123
      %p227 = pneg %p152
      %p228 = pneg %p149
      %s229 = smul.u32 16, %s16
      %p230 = scmp.lt.s32.totalorder %s229, 31
      %s231 = scalar_select %p230, %s229, 31
      %s232 = smul.addr %s231, 8
      %s233 = scalar_lea.vmem %s5, %s232
      %s234 = smul.u32 4, %s16
      %p235 = scmp.lt.s32.totalorder %s234, 7
      %s236 = scalar_select %p235, %s234, 7
      %s237 = smul.addr %s236, 2
      %s238 = smul.addr %s237, 8
      %s239 = scalar_lea.vmem %s0, %s238
      %s240 = smul.u32 4, %s16
      %s241 = smul.u32 16, %s16
      %p242 = scmp.lt.s32.totalorder %s241, 31
      %s243 = scalar_select %p242, %s241, 31
      %s244 = smul.addr %s243, 8
      %s245 = scalar_lea.vmem %s1, %s244
      %s246 = smul.u32 16, %s16
      %s247 = smul.u32 16, %s16
      %p248 = scmp.lt.s32.totalorder %s247, 31
      %s249 = scalar_select %p248, %s247, 31
      %s250 = smul.addr %s249, 8
      %s251 = scalar_lea.vmem %s5, %s250
      %s252 = smul.u32 16, %s16
      %v254 = vld [vmem:[%s239] sm:$0xff]
      %v255 = vld [vmem:[%s239 + $0x8] sm:$0xff]
      %v256 = vld [vmem:[%s239 + $0x10] sm:$0xff]
      %v257 = vld [vmem:[%s239 + $0x18] sm:$0xff]
      %v258 = vld [vmem:[%s239 + $0x20] sm:$0xff]
      %v259 = vld [vmem:[%s239 + $0x28] sm:$0xff]
      %v260 = vld [vmem:[%s239 + $0x30] sm:$0xff]
      %v261 = vld [vmem:[%s239 + $0x38] sm:$0xff]
      %v262 = vunpack.c.0.s8 %v254
      %v263 = vunpack.c.0.s8 %v255
      %v264 = vunpack.c.1.s8 %v254
      %v265 = vunpack.c.1.s8 %v255
      %v266 = vunpack.c.2.s8 %v254
      %v267 = vunpack.c.2.s8 %v255
      %v268 = vunpack.c.3.s8 %v254
      %v269 = vunpack.c.3.s8 %v255
      %v270 = vunpack.c.0.s8 %v256
      %v271 = vunpack.c.0.s8 %v257
      %v272 = vunpack.c.1.s8 %v256
      %v273 = vunpack.c.1.s8 %v257
      %v274 = vunpack.c.2.s8 %v256
      %v275 = vunpack.c.2.s8 %v257
      %v276 = vunpack.c.3.s8 %v256
      %v277 = vunpack.c.3.s8 %v257
      %v278 = vunpack.c.0.s8 %v258
      %v279 = vunpack.c.0.s8 %v259
      %v280 = vunpack.c.1.s8 %v258
      %v281 = vunpack.c.1.s8 %v259
      %v282 = vunpack.c.2.s8 %v258
      %v283 = vunpack.c.2.s8 %v259
      %v284 = vunpack.c.3.s8 %v258
      %v285 = vunpack.c.3.s8 %v259
      %v286 = vunpack.c.0.s8 %v260
      %v287 = vunpack.c.0.s8 %v261
      %v288 = vunpack.c.1.s8 %v260
      %v289 = vunpack.c.1.s8 %v261
      %v290 = vunpack.c.2.s8 %v260
      %v291 = vunpack.c.2.s8 %v261
      %v292 = vunpack.c.3.s8 %v260
      %v293 = vunpack.c.3.s8 %v261
      %v294 = vcvt.s32.f32 %v262
      %v295 = vcvt.s32.f32 %v263
      %v296 = vcvt.s32.f32 %v264
      %v297 = vcvt.s32.f32 %v265
      %v298 = vcvt.s32.f32 %v266
      %v299 = vcvt.s32.f32 %v267
      %v300 = vcvt.s32.f32 %v268
      %v301 = vcvt.s32.f32 %v269
      %v302 = vcvt.s32.f32 %v270
      %v303 = vcvt.s32.f32 %v271
      %v304 = vcvt.s32.f32 %v272
      %v305 = vcvt.s32.f32 %v273
      %v306 = vcvt.s32.f32 %v274
      %v307 = vcvt.s32.f32 %v275
      %v308 = vcvt.s32.f32 %v276
      %v309 = vcvt.s32.f32 %v277
      %v310 = vcvt.s32.f32 %v278
      %v311 = vcvt.s32.f32 %v279
      %v312 = vcvt.s32.f32 %v280
      %v313 = vcvt.s32.f32 %v281
      %v314 = vcvt.s32.f32 %v282
      %v315 = vcvt.s32.f32 %v283
      %v316 = vcvt.s32.f32 %v284
      %v317 = vcvt.s32.f32 %v285
      %v318 = vcvt.s32.f32 %v286
      %v319 = vcvt.s32.f32 %v287
      %v320 = vcvt.s32.f32 %v288
      %v321 = vcvt.s32.f32 %v289
      %v322 = vcvt.s32.f32 %v290
      %v323 = vcvt.s32.f32 %v291
      %v324 = vcvt.s32.f32 %v292
      %v325 = vcvt.s32.f32 %v293
      %vm326 = vcmp.gt.f32.partialorder %v294, 0.0
      %vm327 = vcmp.gt.f32.partialorder %v295, 0.0
      %vm328 = vcmp.gt.f32.partialorder %v296, 0.0
      %vm329 = vcmp.gt.f32.partialorder %v297, 0.0
      %vm330 = vcmp.gt.f32.partialorder %v298, 0.0
      %vm331 = vcmp.gt.f32.partialorder %v299, 0.0
      %vm332 = vcmp.gt.f32.partialorder %v300, 0.0
      %vm333 = vcmp.gt.f32.partialorder %v301, 0.0
      %vm334 = vcmp.gt.f32.partialorder %v302, 0.0
      %vm335 = vcmp.gt.f32.partialorder %v303, 0.0
      %vm336 = vcmp.gt.f32.partialorder %v304, 0.0
      %vm337 = vcmp.gt.f32.partialorder %v305, 0.0
      %vm338 = vcmp.gt.f32.partialorder %v306, 0.0
      %vm339 = vcmp.gt.f32.partialorder %v307, 0.0
      %vm340 = vcmp.gt.f32.partialorder %v308, 0.0
      %vm341 = vcmp.gt.f32.partialorder %v309, 0.0
      %vm342 = vcmp.gt.f32.partialorder %v310, 0.0
      %vm343 = vcmp.gt.f32.partialorder %v311, 0.0
      %vm344 = vcmp.gt.f32.partialorder %v312, 0.0
      %vm345 = vcmp.gt.f32.partialorder %v313, 0.0
      %vm346 = vcmp.gt.f32.partialorder %v314, 0.0
      %vm347 = vcmp.gt.f32.partialorder %v315, 0.0
      %vm348 = vcmp.gt.f32.partialorder %v316, 0.0
      %vm349 = vcmp.gt.f32.partialorder %v317, 0.0
      %vm350 = vcmp.gt.f32.partialorder %v318, 0.0
      %vm351 = vcmp.gt.f32.partialorder %v319, 0.0
      %vm352 = vcmp.gt.f32.partialorder %v320, 0.0
      %vm353 = vcmp.gt.f32.partialorder %v321, 0.0
      %vm354 = vcmp.gt.f32.partialorder %v322, 0.0
      %vm355 = vcmp.gt.f32.partialorder %v323, 0.0
      %vm356 = vcmp.gt.f32.partialorder %v324, 0.0
      %vm357 = vcmp.gt.f32.partialorder %v325, 0.0
      %v358 = vld [vmem:[%s245] sm:$0xff]
      %v359 = vld [vmem:[%s245 + $0x8] sm:$0xff]
      %v360 = vld [vmem:[%s245 + $0x10] sm:$0xff]
      %v361 = vld [vmem:[%s245 + $0x18] sm:$0xff]
      %v362 = vld [vmem:[%s245 + $0x20] sm:$0xff]
      %v363 = vld [vmem:[%s245 + $0x28] sm:$0xff]
      %v364 = vld [vmem:[%s245 + $0x30] sm:$0xff]
      %v365 = vld [vmem:[%s245 + $0x38] sm:$0xff]
      %v366 = vld [vmem:[%s245 + $0x40] sm:$0xff]
      %v367 = vld [vmem:[%s245 + $0x48] sm:$0xff]
      %v368 = vld [vmem:[%s245 + $0x50] sm:$0xff]
      %v369 = vld [vmem:[%s245 + $0x58] sm:$0xff]
      %v370 = vld [vmem:[%s245 + $0x60] sm:$0xff]
      %v371 = vld [vmem:[%s245 + $0x68] sm:$0xff]
      %v372 = vld [vmem:[%s245 + $0x70] sm:$0xff]
      %v373 = vld [vmem:[%s245 + $0x78] sm:$0xff]
      %v374 = vld [vmem:[%s2] sm:$0xff]
      %v375 = vld [vmem:[%s3] sm:$0xf]
      %v376 = vld [vmem:[%s3 + $0x4] sm:$0xf]
      %v377 = vld [vmem:[%s3 + $0x8] sm:$0xf]
      %v378 = vld [vmem:[%s3 + $0xc] sm:$0xf]
      %v379 = vld [vmem:[%s3 + $0x10] sm:$0xf]
      %v380 = vld [vmem:[%s3 + $0x14] sm:$0xf]
      %v381 = vld [vmem:[%s3 + $0x18] sm:$0xf]
      %v382 = vld [vmem:[%s3 + $0x1c] sm:$0xf]
      %v383 = vld [vmem:[%s3 + $0x20] sm:$0xf]
      %v384 = vld [vmem:[%s3 + $0x24] sm:$0xf]
      %v385 = vld [vmem:[%s3 + $0x28] sm:$0xf]
      %v386 = vld [vmem:[%s3 + $0x2c] sm:$0xf]
      %v387 = vld [vmem:[%s3 + $0x30] sm:$0xf]
      %v388 = vld [vmem:[%s3 + $0x34] sm:$0xf]
      %v389 = vld [vmem:[%s3 + $0x38] sm:$0xf]
      %v390 = vld [vmem:[%s3 + $0x3c] sm:$0xf]
      %v391 = vld [vmem:[%s3 + $0x40] sm:$0xf]
      %v392 = vld [vmem:[%s3 + $0x44] sm:$0xf]
      %v393 = vld [vmem:[%s3 + $0x48] sm:$0xf]
      %v394 = vld [vmem:[%s3 + $0x4c] sm:$0xf]
      %v395 = vld [vmem:[%s3 + $0x50] sm:$0xf]
      %v396 = vld [vmem:[%s3 + $0x54] sm:$0xf]
      %v397 = vld [vmem:[%s3 + $0x58] sm:$0xf]
      %v398 = vld [vmem:[%s3 + $0x5c] sm:$0xf]
      %v399 = vld [vmem:[%s3 + $0x60] sm:$0xf]
      %v400 = vld [vmem:[%s3 + $0x64] sm:$0xf]
      %v401 = vld [vmem:[%s3 + $0x68] sm:$0xf]
      %v402 = vld [vmem:[%s3 + $0x6c] sm:$0xf]
      %v403 = vld [vmem:[%s3 + $0x70] sm:$0xf]
      %v404 = vld [vmem:[%s3 + $0x74] sm:$0xf]
      %v405 = vld [vmem:[%s3 + $0x78] sm:$0xf]
      %v406 = vld [vmem:[%s3 + $0x7c] sm:$0xf]
      %408 = vset.pattern.permute.xlu0 0
      %409 = vperm.xlu0 %408, %v358
      %v410 = vpop.permute.xlu0 %409
      %413 = vset.pattern.permute.xlu0 0
      %414 = vperm.xlu0 %413, %v359
      %v415 = vpop.permute.xlu0 %414
      %418 = vset.pattern.permute.xlu0 0
      %419 = vperm.xlu0 %418, %v360
      %v420 = vpop.permute.xlu0 %419
      %423 = vset.pattern.permute.xlu0 0
      %424 = vperm.xlu0 %423, %v361
      %v425 = vpop.permute.xlu0 %424
      %428 = vset.pattern.permute.xlu0 0
      %429 = vperm.xlu0 %428, %v362
      %v430 = vpop.permute.xlu0 %429
      %433 = vset.pattern.permute.xlu0 0
      %434 = vperm.xlu0 %433, %v363
      %v435 = vpop.permute.xlu0 %434
      %438 = vset.pattern.permute.xlu0 0
      %439 = vperm.xlu0 %438, %v364
      %v440 = vpop.permute.xlu0 %439
      %443 = vset.pattern.permute.xlu0 0
      %444 = vperm.xlu0 %443, %v365
      %v445 = vpop.permute.xlu0 %444
      %448 = vset.pattern.permute.xlu0 0
      %449 = vperm.xlu0 %448, %v366
      %v450 = vpop.permute.xlu0 %449
      %453 = vset.pattern.permute.xlu0 0
      %454 = vperm.xlu0 %453, %v367
      %v455 = vpop.permute.xlu0 %454
      %458 = vset.pattern.permute.xlu0 0
      %459 = vperm.xlu0 %458, %v368
      %v460 = vpop.permute.xlu0 %459
      %463 = vset.pattern.permute.xlu0 0
      %464 = vperm.xlu0 %463, %v369
      %v465 = vpop.permute.xlu0 %464
      %468 = vset.pattern.permute.xlu0 0
      %469 = vperm.xlu0 %468, %v370
      %v470 = vpop.permute.xlu0 %469
      %473 = vset.pattern.permute.xlu0 0
      %474 = vperm.xlu0 %473, %v371
      %v475 = vpop.permute.xlu0 %474
      %478 = vset.pattern.permute.xlu0 0
      %479 = vperm.xlu0 %478, %v372
      %v480 = vpop.permute.xlu0 %479
      %483 = vset.pattern.permute.xlu0 0
      %484 = vperm.xlu0 %483, %v373
      %v485 = vpop.permute.xlu0 %484
      %v488 = vlaneseq
      %v489 = vshrl.u32 %v488, 7
      %v490 = vsub.s32 0, %v489
      %v491 = vrot.slane %v374, %v490
      %v492 = vlaneseq
      %v493 = vshrl.u32 %v492, 7
      %v494 = vsub.s32 4, %v493
      %v495 = vrot.slane %v374, %v494
      %v498 = vlaneseq
      %v499 = vshrl.u32 %v498, 7
      %v500 = vsub.s32 0, %v499
      %v501 = vrot.slane %v491, %v500
      %v502 = vlaneseq
      %v503 = vshrl.u32 %v502, 7
      %v504 = vsub.s32 0, %v503
      %v505 = vrot.slane %v495, %v504
      %v506 = vadd.f32 %v410, %v501
      %v507 = vadd.f32 %v410, %v505
      %v508 = vadd.f32 %v415, %v501
      %v509 = vadd.f32 %v415, %v505
      %v510 = vadd.f32 %v420, %v501
      %v511 = vadd.f32 %v420, %v505
      %v512 = vadd.f32 %v425, %v501
      %v513 = vadd.f32 %v425, %v505
      %v514 = vadd.f32 %v430, %v501
      %v515 = vadd.f32 %v430, %v505
      %v516 = vadd.f32 %v435, %v501
      %v517 = vadd.f32 %v435, %v505
      %v518 = vadd.f32 %v440, %v501
      %v519 = vadd.f32 %v440, %v505
      %v520 = vadd.f32 %v445, %v501
      %v521 = vadd.f32 %v445, %v505
      %v522 = vadd.f32 %v450, %v501
      %v523 = vadd.f32 %v450, %v505
      %v524 = vadd.f32 %v455, %v501
      %v525 = vadd.f32 %v455, %v505
      %v526 = vadd.f32 %v460, %v501
      %v527 = vadd.f32 %v460, %v505
      %v528 = vadd.f32 %v465, %v501
      %v529 = vadd.f32 %v465, %v505
      %v530 = vadd.f32 %v470, %v501
      %v531 = vadd.f32 %v470, %v505
      %v532 = vadd.f32 %v475, %v501
      %v533 = vadd.f32 %v475, %v505
      %v534 = vadd.f32 %v480, %v501
      %v535 = vadd.f32 %v480, %v505
      %v536 = vadd.f32 %v485, %v501
      %v537 = vadd.f32 %v485, %v505
      %vm538 = vcmp.ge.f32.partialorder %v506, 0.0
      %vm539 = vcmp.ge.f32.partialorder %v507, 0.0
      %vm540 = vcmp.ge.f32.partialorder %v508, 0.0
      %vm541 = vcmp.ge.f32.partialorder %v509, 0.0
      %vm542 = vcmp.ge.f32.partialorder %v510, 0.0
      %vm543 = vcmp.ge.f32.partialorder %v511, 0.0
      %vm544 = vcmp.ge.f32.partialorder %v512, 0.0
      %vm545 = vcmp.ge.f32.partialorder %v513, 0.0
      %vm546 = vcmp.ge.f32.partialorder %v514, 0.0
      %vm547 = vcmp.ge.f32.partialorder %v515, 0.0
      %vm548 = vcmp.ge.f32.partialorder %v516, 0.0
      %vm549 = vcmp.ge.f32.partialorder %v517, 0.0
      %vm550 = vcmp.ge.f32.partialorder %v518, 0.0
      %vm551 = vcmp.ge.f32.partialorder %v519, 0.0
      %vm552 = vcmp.ge.f32.partialorder %v520, 0.0
      %vm553 = vcmp.ge.f32.partialorder %v521, 0.0
      %vm554 = vcmp.ge.f32.partialorder %v522, 0.0
      %vm555 = vcmp.ge.f32.partialorder %v523, 0.0
      %vm556 = vcmp.ge.f32.partialorder %v524, 0.0
      %vm557 = vcmp.ge.f32.partialorder %v525, 0.0
      %vm558 = vcmp.ge.f32.partialorder %v526, 0.0
      %vm559 = vcmp.ge.f32.partialorder %v527, 0.0
      %vm560 = vcmp.ge.f32.partialorder %v528, 0.0
      %vm561 = vcmp.ge.f32.partialorder %v529, 0.0
      %vm562 = vcmp.ge.f32.partialorder %v530, 0.0
      %vm563 = vcmp.ge.f32.partialorder %v531, 0.0
      %vm564 = vcmp.ge.f32.partialorder %v532, 0.0
      %vm565 = vcmp.ge.f32.partialorder %v533, 0.0
      %vm566 = vcmp.ge.f32.partialorder %v534, 0.0
      %vm567 = vcmp.ge.f32.partialorder %v535, 0.0
      %vm568 = vcmp.ge.f32.partialorder %v536, 0.0
      %vm569 = vcmp.ge.f32.partialorder %v537, 0.0
      %v570 = vmul.f32 %v506, 0.2
      %v571 = vmul.f32 %v507, 0.2
      %v572 = vmul.f32 %v508, 0.2
      %v573 = vmul.f32 %v509, 0.2
      %v574 = vmul.f32 %v510, 0.2
      %v575 = vmul.f32 %v511, 0.2
      %v576 = vmul.f32 %v512, 0.2
      %v577 = vmul.f32 %v513, 0.2
      %v578 = vmul.f32 %v514, 0.2
      %v579 = vmul.f32 %v515, 0.2
      %v580 = vmul.f32 %v516, 0.2
      %v581 = vmul.f32 %v517, 0.2
      %v582 = vmul.f32 %v518, 0.2
      %v583 = vmul.f32 %v519, 0.2
      %v584 = vmul.f32 %v520, 0.2
      %v585 = vmul.f32 %v521, 0.2
      %v586 = vmul.f32 %v522, 0.2
      %v587 = vmul.f32 %v523, 0.2
      %v588 = vmul.f32 %v524, 0.2
      %v589 = vmul.f32 %v525, 0.2
      %v590 = vmul.f32 %v526, 0.2
      %v591 = vmul.f32 %v527, 0.2
      %v592 = vmul.f32 %v528, 0.2
      %v593 = vmul.f32 %v529, 0.2
      %v594 = vmul.f32 %v530, 0.2
      %v595 = vmul.f32 %v531, 0.2
      %v596 = vmul.f32 %v532, 0.2
      %v597 = vmul.f32 %v533, 0.2
      %v598 = vmul.f32 %v534, 0.2
      %v599 = vmul.f32 %v535, 0.2
      %v600 = vmul.f32 %v536, 0.2
      %v601 = vmul.f32 %v537, 0.2
      %v602 = vsel %vm538, %v506, %v570
      %v603 = vsel %vm539, %v507, %v571
      %v604 = vsel %vm540, %v508, %v572
      %v605 = vsel %vm541, %v509, %v573
      %v606 = vsel %vm542, %v510, %v574
      %v607 = vsel %vm543, %v511, %v575
      %v608 = vsel %vm544, %v512, %v576
      %v609 = vsel %vm545, %v513, %v577
      %v610 = vsel %vm546, %v514, %v578
      %v611 = vsel %vm547, %v515, %v579
      %v612 = vsel %vm548, %v516, %v580
      %v613 = vsel %vm549, %v517, %v581
      %v614 = vsel %vm550, %v518, %v582
      %v615 = vsel %vm551, %v519, %v583
      %v616 = vsel %vm552, %v520, %v584
      %v617 = vsel %vm553, %v521, %v585
      %v618 = vsel %vm554, %v522, %v586
      %v619 = vsel %vm555, %v523, %v587
      %v620 = vsel %vm556, %v524, %v588
      %v621 = vsel %vm557, %v525, %v589
      %v622 = vsel %vm558, %v526, %v590
      %v623 = vsel %vm559, %v527, %v591
      %v624 = vsel %vm560, %v528, %v592
      %v625 = vsel %vm561, %v529, %v593
      %v626 = vsel %vm562, %v530, %v594
      %v627 = vsel %vm563, %v531, %v595
      %v628 = vsel %vm564, %v532, %v596
      %v629 = vsel %vm565, %v533, %v597
      %v630 = vsel %vm566, %v534, %v598
      %v631 = vsel %vm567, %v535, %v599
      %v632 = vsel %vm568, %v536, %v600
      %v633 = vsel %vm569, %v537, %v601
      %v634 = vsel %vm326, %v602, -1e+30
      %v635 = vsel %vm327, %v603, -1e+30
      %v636 = vsel %vm328, %v604, -1e+30
      %v637 = vsel %vm329, %v605, -1e+30
      %v638 = vsel %vm330, %v606, -1e+30
      %v639 = vsel %vm331, %v607, -1e+30
      %v640 = vsel %vm332, %v608, -1e+30
      %v641 = vsel %vm333, %v609, -1e+30
      %v642 = vsel %vm334, %v610, -1e+30
      %v643 = vsel %vm335, %v611, -1e+30
      %v644 = vsel %vm336, %v612, -1e+30
      %v645 = vsel %vm337, %v613, -1e+30
      %v646 = vsel %vm338, %v614, -1e+30
      %v647 = vsel %vm339, %v615, -1e+30
      %v648 = vsel %vm340, %v616, -1e+30
      %v649 = vsel %vm341, %v617, -1e+30
      %v650 = vsel %vm342, %v618, -1e+30
      %v651 = vsel %vm343, %v619, -1e+30
      %v652 = vsel %vm344, %v620, -1e+30
      %v653 = vsel %vm345, %v621, -1e+30
      %v654 = vsel %vm346, %v622, -1e+30
      %v655 = vsel %vm347, %v623, -1e+30
      %v656 = vsel %vm348, %v624, -1e+30
      %v657 = vsel %vm349, %v625, -1e+30
      %v658 = vsel %vm350, %v626, -1e+30
      %v659 = vsel %vm351, %v627, -1e+30
      %v660 = vsel %vm352, %v628, -1e+30
      %v661 = vsel %vm353, %v629, -1e+30
      %v662 = vsel %vm354, %v630, -1e+30
      %v663 = vsel %vm355, %v631, -1e+30
      %v664 = vsel %vm356, %v632, -1e+30
      %v665 = vsel %vm357, %v633, -1e+30
      %v666 = vmax.f32 %v634, %v635
      %667 = vmax.xlane.f32.xlu0 %v666
      %v668 = vpop.xlane.xlu0 %667
      %v669 = vmax.f32 %v636, %v637
      %670 = vmax.xlane.f32.xlu0 %v669
      %v671 = vpop.xlane.xlu0 %670
      %v672 = vmax.f32 %v638, %v639
      %673 = vmax.xlane.f32.xlu0 %v672
      %v674 = vpop.xlane.xlu0 %673
      %v675 = vmax.f32 %v640, %v641
      %676 = vmax.xlane.f32.xlu0 %v675
      %v677 = vpop.xlane.xlu0 %676
      %v678 = vmax.f32 %v642, %v643
      %679 = vmax.xlane.f32.xlu0 %v678
      %v680 = vpop.xlane.xlu0 %679
      %v681 = vmax.f32 %v644, %v645
      %682 = vmax.xlane.f32.xlu0 %v681
      %v683 = vpop.xlane.xlu0 %682
      %v684 = vmax.f32 %v646, %v647
      %685 = vmax.xlane.f32.xlu0 %v684
      %v686 = vpop.xlane.xlu0 %685
      %v687 = vmax.f32 %v648, %v649
      %688 = vmax.xlane.f32.xlu0 %v687
      %v689 = vpop.xlane.xlu0 %688
      %v690 = vmax.f32 %v650, %v651
      %691 = vmax.xlane.f32.xlu0 %v690
      %v692 = vpop.xlane.xlu0 %691
      %v693 = vmax.f32 %v652, %v653
      %694 = vmax.xlane.f32.xlu0 %v693
      %v695 = vpop.xlane.xlu0 %694
      %v696 = vmax.f32 %v654, %v655
      %697 = vmax.xlane.f32.xlu0 %v696
      %v698 = vpop.xlane.xlu0 %697
      %v699 = vmax.f32 %v656, %v657
      %700 = vmax.xlane.f32.xlu0 %v699
      %v701 = vpop.xlane.xlu0 %700
      %v702 = vmax.f32 %v658, %v659
      %703 = vmax.xlane.f32.xlu0 %v702
      %v704 = vpop.xlane.xlu0 %703
      %v705 = vmax.f32 %v660, %v661
      %706 = vmax.xlane.f32.xlu0 %v705
      %v707 = vpop.xlane.xlu0 %706
      %v708 = vmax.f32 %v662, %v663
      %709 = vmax.xlane.f32.xlu0 %v708
      %v710 = vpop.xlane.xlu0 %709
      %v711 = vmax.f32 %v664, %v665
      %712 = vmax.xlane.f32.xlu0 %v711
      %v713 = vpop.xlane.xlu0 %712
      %v714 = vsub.f32 %v634, %v668
      %v715 = vsub.f32 %v635, %v668
      %v716 = vsub.f32 %v636, %v671
      %v717 = vsub.f32 %v637, %v671
      %v718 = vsub.f32 %v638, %v674
      %v719 = vsub.f32 %v639, %v674
      %v720 = vsub.f32 %v640, %v677
      %v721 = vsub.f32 %v641, %v677
      %v722 = vsub.f32 %v642, %v680
      %v723 = vsub.f32 %v643, %v680
      %v724 = vsub.f32 %v644, %v683
      %v725 = vsub.f32 %v645, %v683
      %v726 = vsub.f32 %v646, %v686
      %v727 = vsub.f32 %v647, %v686
      %v728 = vsub.f32 %v648, %v689
      %v729 = vsub.f32 %v649, %v689
      %v730 = vsub.f32 %v650, %v692
      %v731 = vsub.f32 %v651, %v692
      %v732 = vsub.f32 %v652, %v695
      %v733 = vsub.f32 %v653, %v695
      %v734 = vsub.f32 %v654, %v698
      %v735 = vsub.f32 %v655, %v698
      %v736 = vsub.f32 %v656, %v701
      %v737 = vsub.f32 %v657, %v701
      %v738 = vsub.f32 %v658, %v704
      %v739 = vsub.f32 %v659, %v704
      %v740 = vsub.f32 %v660, %v707
      %v741 = vsub.f32 %v661, %v707
      %v742 = vsub.f32 %v662, %v710
      %v743 = vsub.f32 %v663, %v710
      %v744 = vsub.f32 %v664, %v713
      %v745 = vsub.f32 %v665, %v713
      %v746 = vmul.f32 %v714, 1.442695
      %v747 = vpow.pop %v746
      %v748 = vmul.f32 %v715, 1.442695
      %v749 = vpow.pop %v748
      %v750 = vmul.f32 %v716, 1.442695
      %v751 = vpow.pop %v750
      %v752 = vmul.f32 %v717, 1.442695
      %v753 = vpow.pop %v752
      %v754 = vmul.f32 %v718, 1.442695
      %v755 = vpow.pop %v754
      %v756 = vmul.f32 %v719, 1.442695
      %v757 = vpow.pop %v756
      %v758 = vmul.f32 %v720, 1.442695
      %v759 = vpow.pop %v758
      %v760 = vmul.f32 %v721, 1.442695
      %v761 = vpow.pop %v760
      %v762 = vmul.f32 %v722, 1.442695
      %v763 = vpow.pop %v762
      %v764 = vmul.f32 %v723, 1.442695
      %v765 = vpow.pop %v764
      %v766 = vmul.f32 %v724, 1.442695
      %v767 = vpow.pop %v766
      %v768 = vmul.f32 %v725, 1.442695
      %v769 = vpow.pop %v768
      %v770 = vmul.f32 %v726, 1.442695
      %v771 = vpow.pop %v770
      %v772 = vmul.f32 %v727, 1.442695
      %v773 = vpow.pop %v772
      %v774 = vmul.f32 %v728, 1.442695
      %v775 = vpow.pop %v774
      %v776 = vmul.f32 %v729, 1.442695
      %v777 = vpow.pop %v776
      %v778 = vmul.f32 %v730, 1.442695
      %v779 = vpow.pop %v778
      %v780 = vmul.f32 %v731, 1.442695
      %v781 = vpow.pop %v780
      %v782 = vmul.f32 %v732, 1.442695
      %v783 = vpow.pop %v782
      %v784 = vmul.f32 %v733, 1.442695
      %v785 = vpow.pop %v784
      %v786 = vmul.f32 %v734, 1.442695
      %v787 = vpow.pop %v786
      %v788 = vmul.f32 %v735, 1.442695
      %v789 = vpow.pop %v788
      %v790 = vmul.f32 %v736, 1.442695
      %v791 = vpow.pop %v790
      %v792 = vmul.f32 %v737, 1.442695
      %v793 = vpow.pop %v792
      %v794 = vmul.f32 %v738, 1.442695
      %v795 = vpow.pop %v794
      %v796 = vmul.f32 %v739, 1.442695
      %v797 = vpow.pop %v796
      %v798 = vmul.f32 %v740, 1.442695
      %v799 = vpow.pop %v798
      %v800 = vmul.f32 %v741, 1.442695
      %v801 = vpow.pop %v800
      %v802 = vmul.f32 %v742, 1.442695
      %v803 = vpow.pop %v802
      %v804 = vmul.f32 %v743, 1.442695
      %v805 = vpow.pop %v804
      %v806 = vmul.f32 %v744, 1.442695
      %v807 = vpow.pop %v806
      %v808 = vmul.f32 %v745, 1.442695
      %v809 = vpow.pop %v808
      %v810 = vadd.f32 %v747, %v749
      %811 = vadd.xlane.f32.xlu0 %v810
      %v812 = vpop.xlane.xlu0 %811
      %v813 = vadd.f32 %v751, %v753
      %814 = vadd.xlane.f32.xlu0 %v813
      %v815 = vpop.xlane.xlu0 %814
      %v816 = vadd.f32 %v755, %v757
      %817 = vadd.xlane.f32.xlu0 %v816
      %v818 = vpop.xlane.xlu0 %817
      %v819 = vadd.f32 %v759, %v761
      %820 = vadd.xlane.f32.xlu0 %v819
      %v821 = vpop.xlane.xlu0 %820
      %v822 = vadd.f32 %v763, %v765
      %823 = vadd.xlane.f32.xlu0 %v822
      %v824 = vpop.xlane.xlu0 %823
      %v825 = vadd.f32 %v767, %v769
      %826 = vadd.xlane.f32.xlu0 %v825
      %v827 = vpop.xlane.xlu0 %826
      %v828 = vadd.f32 %v771, %v773
      %829 = vadd.xlane.f32.xlu0 %v828
      %v830 = vpop.xlane.xlu0 %829
      %v831 = vadd.f32 %v775, %v777
      %832 = vadd.xlane.f32.xlu0 %v831
      %v833 = vpop.xlane.xlu0 %832
      %v834 = vadd.f32 %v779, %v781
      %835 = vadd.xlane.f32.xlu0 %v834
      %v836 = vpop.xlane.xlu0 %835
      %v837 = vadd.f32 %v783, %v785
      %838 = vadd.xlane.f32.xlu0 %v837
      %v839 = vpop.xlane.xlu0 %838
      %v840 = vadd.f32 %v787, %v789
      %841 = vadd.xlane.f32.xlu0 %v840
      %v842 = vpop.xlane.xlu0 %841
      %v843 = vadd.f32 %v791, %v793
      %844 = vadd.xlane.f32.xlu0 %v843
      %v845 = vpop.xlane.xlu0 %844
      %v846 = vadd.f32 %v795, %v797
      %847 = vadd.xlane.f32.xlu0 %v846
      %v848 = vpop.xlane.xlu0 %847
      %v849 = vadd.f32 %v799, %v801
      %850 = vadd.xlane.f32.xlu0 %v849
      %v851 = vpop.xlane.xlu0 %850
      %v852 = vadd.f32 %v803, %v805
      %853 = vadd.xlane.f32.xlu0 %v852
      %v854 = vpop.xlane.xlu0 %853
      %v855 = vadd.f32 %v807, %v809
      %856 = vadd.xlane.f32.xlu0 %v855
      %v857 = vpop.xlane.xlu0 %856
      %v858 = vpack.c.bf16 %v751, %v747
      %v859 = vpack.c.bf16 %v753, %v749
      %v860 = vpack.c.bf16 %v759, %v755
      %v861 = vpack.c.bf16 %v761, %v757
      %v862 = vpack.c.bf16 %v767, %v763
      %v863 = vpack.c.bf16 %v769, %v765
      %v864 = vpack.c.bf16 %v775, %v771
      %v865 = vpack.c.bf16 %v777, %v773
      %v866 = vpack.c.bf16 %v783, %v779
      %v867 = vpack.c.bf16 %v785, %v781
      %v868 = vpack.c.bf16 %v791, %v787
      %v869 = vpack.c.bf16 %v793, %v789
      %v870 = vpack.c.bf16 %v799, %v795
      %v871 = vpack.c.bf16 %v801, %v797
      %v872 = vpack.c.bf16 %v807, %v803
      %v873 = vpack.c.bf16 %v809, %v805
      %v906 = vunpack.c.l.b16 %v375
      %v907 = vunpack.c.l.b16 %v376
      %v908 = vunpack.c.l.b16 %v377
      %v909 = vunpack.c.l.b16 %v378
      %v910 = vunpack.c.l.b16 %v379
      %v911 = vunpack.c.l.b16 %v380
      %v912 = vunpack.c.l.b16 %v381
      %v913 = vunpack.c.l.b16 %v382
      %v914 = vunpack.c.l.b16 %v383
      %v915 = vunpack.c.l.b16 %v384
      %v916 = vunpack.c.l.b16 %v385
      %v917 = vunpack.c.l.b16 %v386
      %v918 = vunpack.c.l.b16 %v387
      %v919 = vunpack.c.l.b16 %v388
      %v920 = vunpack.c.l.b16 %v389
      %v921 = vunpack.c.l.b16 %v390
      %v922 = vunpack.c.l.b16 %v391
      %v923 = vunpack.c.l.b16 %v392
      %v924 = vunpack.c.l.b16 %v393
      %v925 = vunpack.c.l.b16 %v394
      %v926 = vunpack.c.l.b16 %v395
      %v927 = vunpack.c.l.b16 %v396
      %v928 = vunpack.c.l.b16 %v397
      %v929 = vunpack.c.l.b16 %v398
      %v930 = vunpack.c.l.b16 %v399
      %v931 = vunpack.c.l.b16 %v400
      %v932 = vunpack.c.l.b16 %v401
      %v933 = vunpack.c.l.b16 %v402
      %v934 = vunpack.c.l.b16 %v403
      %v935 = vunpack.c.l.b16 %v404
      %v936 = vunpack.c.l.b16 %v405
      %v937 = vunpack.c.l.b16 %v406
      %v938 = vpack.c.b16 %v907, %v906
      %v939 = vpack.c.b16 %v909, %v908
      %v940 = vpack.c.b16 %v911, %v910
      %v941 = vpack.c.b16 %v913, %v912
      %v942 = vpack.c.b16 %v915, %v914
      %v943 = vpack.c.b16 %v917, %v916
      %v944 = vpack.c.b16 %v919, %v918
      %v945 = vpack.c.b16 %v921, %v920
      %v946 = vpack.c.b16 %v923, %v922
      %v947 = vpack.c.b16 %v925, %v924
      %v948 = vpack.c.b16 %v927, %v926
      %v949 = vpack.c.b16 %v929, %v928
      %v950 = vpack.c.b16 %v931, %v930
      %v951 = vpack.c.b16 %v933, %v932
      %v952 = vpack.c.b16 %v935, %v934
      %v953 = vpack.c.b16 %v937, %v936
      %970 = vmatprep.subr.bf16.mxu0 0
      %971 = vmatpush1.bf16.msra.mxu0 %v945
      %972 = vmatprep.subr.bf16.mxu0 0
      %973 = vmatpush1.bf16.msra.mxu0 %v944
      %974 = vmatprep.subr.bf16.mxu0 0
      %975 = vmatpush1.bf16.msra.mxu0 %v943
      %976 = vmatprep.subr.bf16.mxu0 0
      %977 = vmatpush1.bf16.msra.mxu0 %v942
      %978 = vmatprep.subr.bf16.mxu0 0
      %979 = vmatpush1.bf16.msra.mxu0 %v941
      %980 = vmatprep.subr.bf16.mxu0 0
      %981 = vmatpush1.bf16.msra.mxu0 %v940
      %982 = vmatprep.subr.bf16.mxu0 0
      %983 = vmatpush1.bf16.msra.mxu0 %v939
      %984 = vmatprep.subr.bf16.mxu0 0
      %985 = vmatpush1.bf16.msra.mxu0 %v938
      %986 = vmatprep.subr.bf16.mxu0 0
      %987 = vmatpush2.bf16.msra.mxu0 %v953
      %988 = vmatprep.subr.bf16.mxu0 0
      %989 = vmatpush2.bf16.msra.mxu0 %v952
      %990 = vmatprep.subr.bf16.mxu0 0
      %991 = vmatpush2.bf16.msra.mxu0 %v951
      %992 = vmatprep.subr.bf16.mxu0 0
      %993 = vmatpush2.bf16.msra.mxu0 %v950
      %994 = vmatprep.subr.bf16.mxu0 0
      %995 = vmatpush2.bf16.msra.mxu0 %v949
      %996 = vmatprep.subr.bf16.mxu0 0
      %997 = vmatpush2.bf16.msra.mxu0 %v948
      %998 = vmatprep.subr.bf16.mxu0 0
      %999 = vmatpush2.bf16.msra.mxu0 %v947
      %1000 = vmatprep.subr.bf16.mxu0 0
      %1001 = vmatpush2.bf16.msra.mxu0 %v946
      %1002 = vmatprep.mubr.bf16.mxu0 %v859
      %1003 = vmatmul.mubr.bf16.gmra.mxu0 %v858
      %v1004 = vpop.f32.mrf.mxu0
      %v1005 = vadd.f32 0.0, %v1004
      %v1006 = vpop.f32.mrf.mxu0
      %v1007 = vpop.f32.mrf.mxu0
      %v1008 = vadd.f32 0.0, %v1007
      %v1009 = vpop.f32.mrf.mxu0
      %1010 = vmatprep.mubr.bf16.mxu0 %v861
      %1011 = vmatmul.mubr.bf16.gmra.mxu0 %v860
      %v1012 = vpop.f32.mrf.mxu0
      %v1013 = vadd.f32 0.0, %v1012
      %v1014 = vpop.f32.mrf.mxu0
      %v1015 = vpop.f32.mrf.mxu0
      %v1016 = vadd.f32 0.0, %v1015
      %v1017 = vpop.f32.mrf.mxu0
      %1018 = vmatprep.mubr.bf16.mxu0 %v863
      %1019 = vmatmul.mubr.bf16.gmra.mxu0 %v862
      %v1020 = vpop.f32.mrf.mxu0
      %v1021 = vadd.f32 0.0, %v1020
      %v1022 = vpop.f32.mrf.mxu0
      %v1023 = vpop.f32.mrf.mxu0
      %v1024 = vadd.f32 0.0, %v1023
      %v1025 = vpop.f32.mrf.mxu0
      %1026 = vmatprep.mubr.bf16.mxu0 %v865
      %1027 = vmatmul.mubr.bf16.gmra.mxu0 %v864
      %v1028 = vpop.f32.mrf.mxu0
      %v1029 = vadd.f32 0.0, %v1028
      %v1030 = vpop.f32.mrf.mxu0
      %v1031 = vpop.f32.mrf.mxu0
      %v1032 = vadd.f32 0.0, %v1031
      %v1033 = vpop.f32.mrf.mxu0
      %1034 = vmatprep.mubr.bf16.mxu0 %v867
      %1035 = vmatmul.mubr.bf16.gmra.mxu0 %v866
      %v1036 = vpop.f32.mrf.mxu0
      %v1037 = vadd.f32 0.0, %v1036
      %v1038 = vpop.f32.mrf.mxu0
      %v1039 = vpop.f32.mrf.mxu0
      %v1040 = vadd.f32 0.0, %v1039
      %v1041 = vpop.f32.mrf.mxu0
      %1042 = vmatprep.mubr.bf16.mxu0 %v869
      %1043 = vmatmul.mubr.bf16.gmra.mxu0 %v868
      %v1044 = vpop.f32.mrf.mxu0
      %v1045 = vadd.f32 0.0, %v1044
      %v1046 = vpop.f32.mrf.mxu0
      %v1047 = vpop.f32.mrf.mxu0
      %v1048 = vadd.f32 0.0, %v1047
      %v1049 = vpop.f32.mrf.mxu0
      %1050 = vmatprep.mubr.bf16.mxu0 %v871
      %1051 = vmatmul.mubr.bf16.gmra.mxu0 %v870
      %v1052 = vpop.f32.mrf.mxu0
      %v1053 = vadd.f32 0.0, %v1052
      %v1054 = vpop.f32.mrf.mxu0
      %v1055 = vpop.f32.mrf.mxu0
      %v1056 = vadd.f32 0.0, %v1055
      %v1057 = vpop.f32.mrf.mxu0
      %1058 = vmatprep.mubr.bf16.mxu0 %v873
      %1059 = vmatmul.mubr.bf16.gmra.mxu0 %v872
      %v1060 = vpop.f32.mrf.mxu0
      %v1061 = vadd.f32 0.0, %v1060
      %v1062 = vpop.f32.mrf.mxu0
      %v1063 = vpop.f32.mrf.mxu0
      %v1064 = vadd.f32 0.0, %v1063
      %v1065 = vpop.f32.mrf.mxu0
      %1066 = vdwg.mxu0
      %v1067 = vrcp.pop %v812
      %v1068 = vrcp.pop %v815
      %v1069 = vrcp.pop %v818
      %v1070 = vrcp.pop %v821
      %v1071 = vrcp.pop %v824
      %v1072 = vrcp.pop %v827
      %v1073 = vrcp.pop %v830
      %v1074 = vrcp.pop %v833
      %v1075 = vrcp.pop %v836
      %v1076 = vrcp.pop %v839
      %v1077 = vrcp.pop %v842
      %v1078 = vrcp.pop %v845
      %v1079 = vrcp.pop %v848
      %v1080 = vrcp.pop %v851
      %v1081 = vrcp.pop %v854
      %v1082 = vrcp.pop %v857
      %v1083 = vmul.f32 %v1005, %v1067
      %v1084 = vmul.f32 %v1008, %v1068
      %v1085 = vmul.f32 %v1013, %v1069
      %v1086 = vmul.f32 %v1016, %v1070
      %v1087 = vmul.f32 %v1021, %v1071
      %v1088 = vmul.f32 %v1024, %v1072
      %v1089 = vmul.f32 %v1029, %v1073
      %v1090 = vmul.f32 %v1032, %v1074
      %v1091 = vmul.f32 %v1037, %v1075
      %v1092 = vmul.f32 %v1040, %v1076
      %v1093 = vmul.f32 %v1045, %v1077
      %v1094 = vmul.f32 %v1048, %v1078
      %v1095 = vmul.f32 %v1053, %v1079
      %v1096 = vmul.f32 %v1056, %v1080
      %v1097 = vmul.f32 %v1061, %v1081
      %v1098 = vmul.f32 %v1064, %v1082
      %1099 = vset.pattern.permute.xlu0 1
      %1100 = vperm.xlu0 %1099, %v358
      %v1101 = vpop.permute.xlu0 %1100
      %1103 = vset.pattern.permute.xlu0 1
      %1104 = vperm.xlu0 %1103, %v359
      %v1105 = vpop.permute.xlu0 %1104
      %1107 = vset.pattern.permute.xlu0 1
      %1108 = vperm.xlu0 %1107, %v360
      %v1109 = vpop.permute.xlu0 %1108
      %1111 = vset.pattern.permute.xlu0 1
      %1112 = vperm.xlu0 %1111, %v361
      %v1113 = vpop.permute.xlu0 %1112
      %1115 = vset.pattern.permute.xlu0 1
      %1116 = vperm.xlu0 %1115, %v362
      %v1117 = vpop.permute.xlu0 %1116
      %1119 = vset.pattern.permute.xlu0 1
      %1120 = vperm.xlu0 %1119, %v363
      %v1121 = vpop.permute.xlu0 %1120
      %1123 = vset.pattern.permute.xlu0 1
      %1124 = vperm.xlu0 %1123, %v364
      %v1125 = vpop.permute.xlu0 %1124
      %1127 = vset.pattern.permute.xlu0 1
      %1128 = vperm.xlu0 %1127, %v365
      %v1129 = vpop.permute.xlu0 %1128
      %1131 = vset.pattern.permute.xlu0 1
      %1132 = vperm.xlu0 %1131, %v366
      %v1133 = vpop.permute.xlu0 %1132
      %1135 = vset.pattern.permute.xlu0 1
      %1136 = vperm.xlu0 %1135, %v367
      %v1137 = vpop.permute.xlu0 %1136
      %1139 = vset.pattern.permute.xlu0 1
      %1140 = vperm.xlu0 %1139, %v368
      %v1141 = vpop.permute.xlu0 %1140
      %1143 = vset.pattern.permute.xlu0 1
      %1144 = vperm.xlu0 %1143, %v369
      %v1145 = vpop.permute.xlu0 %1144
      %1147 = vset.pattern.permute.xlu0 1
      %1148 = vperm.xlu0 %1147, %v370
      %v1149 = vpop.permute.xlu0 %1148
      %1151 = vset.pattern.permute.xlu0 1
      %1152 = vperm.xlu0 %1151, %v371
      %v1153 = vpop.permute.xlu0 %1152
      %1155 = vset.pattern.permute.xlu0 1
      %1156 = vperm.xlu0 %1155, %v372
      %v1157 = vpop.permute.xlu0 %1156
      %1159 = vset.pattern.permute.xlu0 1
      %1160 = vperm.xlu0 %1159, %v373
      %v1161 = vpop.permute.xlu0 %1160
      %v1163 = vlaneseq
      %v1164 = vshrl.u32 %v1163, 7
      %v1165 = vsub.s32 1, %v1164
      %v1166 = vrot.slane %v374, %v1165
      %v1167 = vlaneseq
      %v1168 = vshrl.u32 %v1167, 7
      %v1169 = vsub.s32 5, %v1168
      %v1170 = vrot.slane %v374, %v1169
      %v1173 = vlaneseq
      %v1174 = vshrl.u32 %v1173, 7
      %v1175 = vsub.s32 1, %v1174
      %v1176 = vrot.slane %v1166, %v1175
      %v1177 = vlaneseq
      %v1178 = vshrl.u32 %v1177, 7
      %v1179 = vsub.s32 1, %v1178
      %v1180 = vrot.slane %v1170, %v1179
      %v1181 = vadd.f32 %v1101, %v1176
      %v1182 = vadd.f32 %v1101, %v1180
      %v1183 = vadd.f32 %v1105, %v1176
      %v1184 = vadd.f32 %v1105, %v1180
      %v1185 = vadd.f32 %v1109, %v1176
      %v1186 = vadd.f32 %v1109, %v1180
      %v1187 = vadd.f32 %v1113, %v1176
      %v1188 = vadd.f32 %v1113, %v1180
      %v1189 = vadd.f32 %v1117, %v1176
      %v1190 = vadd.f32 %v1117, %v1180
      %v1191 = vadd.f32 %v1121, %v1176
      %v1192 = vadd.f32 %v1121, %v1180
      %v1193 = vadd.f32 %v1125, %v1176
      %v1194 = vadd.f32 %v1125, %v1180
      %v1195 = vadd.f32 %v1129, %v1176
      %v1196 = vadd.f32 %v1129, %v1180
      %v1197 = vadd.f32 %v1133, %v1176
      %v1198 = vadd.f32 %v1133, %v1180
      %v1199 = vadd.f32 %v1137, %v1176
      %v1200 = vadd.f32 %v1137, %v1180
      %v1201 = vadd.f32 %v1141, %v1176
      %v1202 = vadd.f32 %v1141, %v1180
      %v1203 = vadd.f32 %v1145, %v1176
      %v1204 = vadd.f32 %v1145, %v1180
      %v1205 = vadd.f32 %v1149, %v1176
      %v1206 = vadd.f32 %v1149, %v1180
      %v1207 = vadd.f32 %v1153, %v1176
      %v1208 = vadd.f32 %v1153, %v1180
      %v1209 = vadd.f32 %v1157, %v1176
      %v1210 = vadd.f32 %v1157, %v1180
      %v1211 = vadd.f32 %v1161, %v1176
      %v1212 = vadd.f32 %v1161, %v1180
      %vm1213 = vcmp.ge.f32.partialorder %v1181, 0.0
      %vm1214 = vcmp.ge.f32.partialorder %v1182, 0.0
      %vm1215 = vcmp.ge.f32.partialorder %v1183, 0.0
      %vm1216 = vcmp.ge.f32.partialorder %v1184, 0.0
      %vm1217 = vcmp.ge.f32.partialorder %v1185, 0.0
      %vm1218 = vcmp.ge.f32.partialorder %v1186, 0.0
      %vm1219 = vcmp.ge.f32.partialorder %v1187, 0.0
      %vm1220 = vcmp.ge.f32.partialorder %v1188, 0.0
      %vm1221 = vcmp.ge.f32.partialorder %v1189, 0.0
      %vm1222 = vcmp.ge.f32.partialorder %v1190, 0.0
      %vm1223 = vcmp.ge.f32.partialorder %v1191, 0.0
      %vm1224 = vcmp.ge.f32.partialorder %v1192, 0.0
      %vm1225 = vcmp.ge.f32.partialorder %v1193, 0.0
      %vm1226 = vcmp.ge.f32.partialorder %v1194, 0.0
      %vm1227 = vcmp.ge.f32.partialorder %v1195, 0.0
      %vm1228 = vcmp.ge.f32.partialorder %v1196, 0.0
      %vm1229 = vcmp.ge.f32.partialorder %v1197, 0.0
      %vm1230 = vcmp.ge.f32.partialorder %v1198, 0.0
      %vm1231 = vcmp.ge.f32.partialorder %v1199, 0.0
      %vm1232 = vcmp.ge.f32.partialorder %v1200, 0.0
      %vm1233 = vcmp.ge.f32.partialorder %v1201, 0.0
      %vm1234 = vcmp.ge.f32.partialorder %v1202, 0.0
      %vm1235 = vcmp.ge.f32.partialorder %v1203, 0.0
      %vm1236 = vcmp.ge.f32.partialorder %v1204, 0.0
      %vm1237 = vcmp.ge.f32.partialorder %v1205, 0.0
      %vm1238 = vcmp.ge.f32.partialorder %v1206, 0.0
      %vm1239 = vcmp.ge.f32.partialorder %v1207, 0.0
      %vm1240 = vcmp.ge.f32.partialorder %v1208, 0.0
      %vm1241 = vcmp.ge.f32.partialorder %v1209, 0.0
      %vm1242 = vcmp.ge.f32.partialorder %v1210, 0.0
      %vm1243 = vcmp.ge.f32.partialorder %v1211, 0.0
      %vm1244 = vcmp.ge.f32.partialorder %v1212, 0.0
      %v1245 = vmul.f32 %v1181, 0.2
      %v1246 = vmul.f32 %v1182, 0.2
      %v1247 = vmul.f32 %v1183, 0.2
      %v1248 = vmul.f32 %v1184, 0.2
      %v1249 = vmul.f32 %v1185, 0.2
      %v1250 = vmul.f32 %v1186, 0.2
      %v1251 = vmul.f32 %v1187, 0.2
      %v1252 = vmul.f32 %v1188, 0.2
      %v1253 = vmul.f32 %v1189, 0.2
      %v1254 = vmul.f32 %v1190, 0.2
      %v1255 = vmul.f32 %v1191, 0.2
      %v1256 = vmul.f32 %v1192, 0.2
      %v1257 = vmul.f32 %v1193, 0.2
      %v1258 = vmul.f32 %v1194, 0.2
      %v1259 = vmul.f32 %v1195, 0.2
      %v1260 = vmul.f32 %v1196, 0.2
      %v1261 = vmul.f32 %v1197, 0.2
      %v1262 = vmul.f32 %v1198, 0.2
      %v1263 = vmul.f32 %v1199, 0.2
      %v1264 = vmul.f32 %v1200, 0.2
      %v1265 = vmul.f32 %v1201, 0.2
      %v1266 = vmul.f32 %v1202, 0.2
      %v1267 = vmul.f32 %v1203, 0.2
      %v1268 = vmul.f32 %v1204, 0.2
      %v1269 = vmul.f32 %v1205, 0.2
      %v1270 = vmul.f32 %v1206, 0.2
      %v1271 = vmul.f32 %v1207, 0.2
      %v1272 = vmul.f32 %v1208, 0.2
      %v1273 = vmul.f32 %v1209, 0.2
      %v1274 = vmul.f32 %v1210, 0.2
      %v1275 = vmul.f32 %v1211, 0.2
      %v1276 = vmul.f32 %v1212, 0.2
      %v1277 = vsel %vm1213, %v1181, %v1245
      %v1278 = vsel %vm1214, %v1182, %v1246
      %v1279 = vsel %vm1215, %v1183, %v1247
      %v1280 = vsel %vm1216, %v1184, %v1248
      %v1281 = vsel %vm1217, %v1185, %v1249
      %v1282 = vsel %vm1218, %v1186, %v1250
      %v1283 = vsel %vm1219, %v1187, %v1251
      %v1284 = vsel %vm1220, %v1188, %v1252
      %v1285 = vsel %vm1221, %v1189, %v1253
      %v1286 = vsel %vm1222, %v1190, %v1254
      %v1287 = vsel %vm1223, %v1191, %v1255
      %v1288 = vsel %vm1224, %v1192, %v1256
      %v1289 = vsel %vm1225, %v1193, %v1257
      %v1290 = vsel %vm1226, %v1194, %v1258
      %v1291 = vsel %vm1227, %v1195, %v1259
      %v1292 = vsel %vm1228, %v1196, %v1260
      %v1293 = vsel %vm1229, %v1197, %v1261
      %v1294 = vsel %vm1230, %v1198, %v1262
      %v1295 = vsel %vm1231, %v1199, %v1263
      %v1296 = vsel %vm1232, %v1200, %v1264
      %v1297 = vsel %vm1233, %v1201, %v1265
      %v1298 = vsel %vm1234, %v1202, %v1266
      %v1299 = vsel %vm1235, %v1203, %v1267
      %v1300 = vsel %vm1236, %v1204, %v1268
      %v1301 = vsel %vm1237, %v1205, %v1269
      %v1302 = vsel %vm1238, %v1206, %v1270
      %v1303 = vsel %vm1239, %v1207, %v1271
      %v1304 = vsel %vm1240, %v1208, %v1272
      %v1305 = vsel %vm1241, %v1209, %v1273
      %v1306 = vsel %vm1242, %v1210, %v1274
      %v1307 = vsel %vm1243, %v1211, %v1275
      %v1308 = vsel %vm1244, %v1212, %v1276
      %v1309 = vsel %vm326, %v1277, -1e+30
      %v1310 = vsel %vm327, %v1278, -1e+30
      %v1311 = vsel %vm328, %v1279, -1e+30
      %v1312 = vsel %vm329, %v1280, -1e+30
      %v1313 = vsel %vm330, %v1281, -1e+30
      %v1314 = vsel %vm331, %v1282, -1e+30
      %v1315 = vsel %vm332, %v1283, -1e+30
      %v1316 = vsel %vm333, %v1284, -1e+30
      %v1317 = vsel %vm334, %v1285, -1e+30
      %v1318 = vsel %vm335, %v1286, -1e+30
      %v1319 = vsel %vm336, %v1287, -1e+30
      %v1320 = vsel %vm337, %v1288, -1e+30
      %v1321 = vsel %vm338, %v1289, -1e+30
      %v1322 = vsel %vm339, %v1290, -1e+30
      %v1323 = vsel %vm340, %v1291, -1e+30
      %v1324 = vsel %vm341, %v1292, -1e+30
      %v1325 = vsel %vm342, %v1293, -1e+30
      %v1326 = vsel %vm343, %v1294, -1e+30
      %v1327 = vsel %vm344, %v1295, -1e+30
      %v1328 = vsel %vm345, %v1296, -1e+30
      %v1329 = vsel %vm346, %v1297, -1e+30
      %v1330 = vsel %vm347, %v1298, -1e+30
      %v1331 = vsel %vm348, %v1299, -1e+30
      %v1332 = vsel %vm349, %v1300, -1e+30
      %v1333 = vsel %vm350, %v1301, -1e+30
      %v1334 = vsel %vm351, %v1302, -1e+30
      %v1335 = vsel %vm352, %v1303, -1e+30
      %v1336 = vsel %vm353, %v1304, -1e+30
      %v1337 = vsel %vm354, %v1305, -1e+30
      %v1338 = vsel %vm355, %v1306, -1e+30
      %v1339 = vsel %vm356, %v1307, -1e+30
      %v1340 = vsel %vm357, %v1308, -1e+30
      %v1341 = vmax.f32 %v1309, %v1310
      %1342 = vmax.xlane.f32.xlu0 %v1341
      %v1343 = vpop.xlane.xlu0 %1342
      %v1344 = vmax.f32 %v1311, %v1312
      %1345 = vmax.xlane.f32.xlu0 %v1344
      %v1346 = vpop.xlane.xlu0 %1345
      %v1347 = vmax.f32 %v1313, %v1314
      %1348 = vmax.xlane.f32.xlu0 %v1347
      %v1349 = vpop.xlane.xlu0 %1348
      %v1350 = vmax.f32 %v1315, %v1316
      %1351 = vmax.xlane.f32.xlu0 %v1350
      %v1352 = vpop.xlane.xlu0 %1351
      %v1353 = vmax.f32 %v1317, %v1318
      %1354 = vmax.xlane.f32.xlu0 %v1353
      %v1355 = vpop.xlane.xlu0 %1354
      %v1356 = vmax.f32 %v1319, %v1320
      %1357 = vmax.xlane.f32.xlu0 %v1356
      %v1358 = vpop.xlane.xlu0 %1357
      %v1359 = vmax.f32 %v1321, %v1322
      %1360 = vmax.xlane.f32.xlu0 %v1359
      %v1361 = vpop.xlane.xlu0 %1360
      %v1362 = vmax.f32 %v1323, %v1324
      %1363 = vmax.xlane.f32.xlu0 %v1362
      %v1364 = vpop.xlane.xlu0 %1363
      %v1365 = vmax.f32 %v1325, %v1326
      %1366 = vmax.xlane.f32.xlu0 %v1365
      %v1367 = vpop.xlane.xlu0 %1366
      %v1368 = vmax.f32 %v1327, %v1328
      %1369 = vmax.xlane.f32.xlu0 %v1368
      %v1370 = vpop.xlane.xlu0 %1369
      %v1371 = vmax.f32 %v1329, %v1330
      %1372 = vmax.xlane.f32.xlu0 %v1371
      %v1373 = vpop.xlane.xlu0 %1372
      %v1374 = vmax.f32 %v1331, %v1332
      %1375 = vmax.xlane.f32.xlu0 %v1374
      %v1376 = vpop.xlane.xlu0 %1375
      %v1377 = vmax.f32 %v1333, %v1334
      %1378 = vmax.xlane.f32.xlu0 %v1377
      %v1379 = vpop.xlane.xlu0 %1378
      %v1380 = vmax.f32 %v1335, %v1336
      %1381 = vmax.xlane.f32.xlu0 %v1380
      %v1382 = vpop.xlane.xlu0 %1381
      %v1383 = vmax.f32 %v1337, %v1338
      %1384 = vmax.xlane.f32.xlu0 %v1383
      %v1385 = vpop.xlane.xlu0 %1384
      %v1386 = vmax.f32 %v1339, %v1340
      %1387 = vmax.xlane.f32.xlu0 %v1386
      %v1388 = vpop.xlane.xlu0 %1387
      %v1389 = vsub.f32 %v1309, %v1343
      %v1390 = vsub.f32 %v1310, %v1343
      %v1391 = vsub.f32 %v1311, %v1346
      %v1392 = vsub.f32 %v1312, %v1346
      %v1393 = vsub.f32 %v1313, %v1349
      %v1394 = vsub.f32 %v1314, %v1349
      %v1395 = vsub.f32 %v1315, %v1352
      %v1396 = vsub.f32 %v1316, %v1352
      %v1397 = vsub.f32 %v1317, %v1355
      %v1398 = vsub.f32 %v1318, %v1355
      %v1399 = vsub.f32 %v1319, %v1358
      %v1400 = vsub.f32 %v1320, %v1358
      %v1401 = vsub.f32 %v1321, %v1361
      %v1402 = vsub.f32 %v1322, %v1361
      %v1403 = vsub.f32 %v1323, %v1364
      %v1404 = vsub.f32 %v1324, %v1364
      %v1405 = vsub.f32 %v1325, %v1367
      %v1406 = vsub.f32 %v1326, %v1367
      %v1407 = vsub.f32 %v1327, %v1370
      %v1408 = vsub.f32 %v1328, %v1370
      %v1409 = vsub.f32 %v1329, %v1373
      %v1410 = vsub.f32 %v1330, %v1373
      %v1411 = vsub.f32 %v1331, %v1376
      %v1412 = vsub.f32 %v1332, %v1376
      %v1413 = vsub.f32 %v1333, %v1379
      %v1414 = vsub.f32 %v1334, %v1379
      %v1415 = vsub.f32 %v1335, %v1382
      %v1416 = vsub.f32 %v1336, %v1382
      %v1417 = vsub.f32 %v1337, %v1385
      %v1418 = vsub.f32 %v1338, %v1385
      %v1419 = vsub.f32 %v1339, %v1388
      %v1420 = vsub.f32 %v1340, %v1388
      %v1421 = vmul.f32 %v1389, 1.442695
      %v1422 = vpow.pop %v1421
      %v1423 = vmul.f32 %v1390, 1.442695
      %v1424 = vpow.pop %v1423
      %v1425 = vmul.f32 %v1391, 1.442695
      %v1426 = vpow.pop %v1425
      %v1427 = vmul.f32 %v1392, 1.442695
      %v1428 = vpow.pop %v1427
      %v1429 = vmul.f32 %v1393, 1.442695
      %v1430 = vpow.pop %v1429
      %v1431 = vmul.f32 %v1394, 1.442695
      %v1432 = vpow.pop %v1431
      %v1433 = vmul.f32 %v1395, 1.442695
      %v1434 = vpow.pop %v1433
      %v1435 = vmul.f32 %v1396, 1.442695
      %v1436 = vpow.pop %v1435
      %v1437 = vmul.f32 %v1397, 1.442695
      %v1438 = vpow.pop %v1437
      %v1439 = vmul.f32 %v1398, 1.442695
      %v1440 = vpow.pop %v1439
      %v1441 = vmul.f32 %v1399, 1.442695
      %v1442 = vpow.pop %v1441
      %v1443 = vmul.f32 %v1400, 1.442695
      %v1444 = vpow.pop %v1443
      %v1445 = vmul.f32 %v1401, 1.442695
      %v1446 = vpow.pop %v1445
      %v1447 = vmul.f32 %v1402, 1.442695
      %v1448 = vpow.pop %v1447
      %v1449 = vmul.f32 %v1403, 1.442695
      %v1450 = vpow.pop %v1449
      %v1451 = vmul.f32 %v1404, 1.442695
      %v1452 = vpow.pop %v1451
      %v1453 = vmul.f32 %v1405, 1.442695
      %v1454 = vpow.pop %v1453
      %v1455 = vmul.f32 %v1406, 1.442695
      %v1456 = vpow.pop %v1455
      %v1457 = vmul.f32 %v1407, 1.442695
      %v1458 = vpow.pop %v1457
      %v1459 = vmul.f32 %v1408, 1.442695
      %v1460 = vpow.pop %v1459
      %v1461 = vmul.f32 %v1409, 1.442695
      %v1462 = vpow.pop %v1461
      %v1463 = vmul.f32 %v1410, 1.442695
      %v1464 = vpow.pop %v1463
      %v1465 = vmul.f32 %v1411, 1.442695
      %v1466 = vpow.pop %v1465
      %v1467 = vmul.f32 %v1412, 1.442695
      %v1468 = vpow.pop %v1467
      %v1469 = vmul.f32 %v1413, 1.442695
      %v1470 = vpow.pop %v1469
      %v1471 = vmul.f32 %v1414, 1.442695
      %v1472 = vpow.pop %v1471
      %v1473 = vmul.f32 %v1415, 1.442695
      %v1474 = vpow.pop %v1473
      %v1475 = vmul.f32 %v1416, 1.442695
      %v1476 = vpow.pop %v1475
      %v1477 = vmul.f32 %v1417, 1.442695
      %v1478 = vpow.pop %v1477
      %v1479 = vmul.f32 %v1418, 1.442695
      %v1480 = vpow.pop %v1479
      %v1481 = vmul.f32 %v1419, 1.442695
      %v1482 = vpow.pop %v1481
      %v1483 = vmul.f32 %v1420, 1.442695
      %v1484 = vpow.pop %v1483
      %v1485 = vadd.f32 %v1422, %v1424
      %1486 = vadd.xlane.f32.xlu0 %v1485
      %v1487 = vpop.xlane.xlu0 %1486
      %v1488 = vadd.f32 %v1426, %v1428
      %1489 = vadd.xlane.f32.xlu0 %v1488
      %v1490 = vpop.xlane.xlu0 %1489
      %v1491 = vadd.f32 %v1430, %v1432
      %1492 = vadd.xlane.f32.xlu0 %v1491
      %v1493 = vpop.xlane.xlu0 %1492
      %v1494 = vadd.f32 %v1434, %v1436
      %1495 = vadd.xlane.f32.xlu0 %v1494
      %v1496 = vpop.xlane.xlu0 %1495
      %v1497 = vadd.f32 %v1438, %v1440
      %1498 = vadd.xlane.f32.xlu0 %v1497
      %v1499 = vpop.xlane.xlu0 %1498
      %v1500 = vadd.f32 %v1442, %v1444
      %1501 = vadd.xlane.f32.xlu0 %v1500
      %v1502 = vpop.xlane.xlu0 %1501
      %v1503 = vadd.f32 %v1446, %v1448
      %1504 = vadd.xlane.f32.xlu0 %v1503
      %v1505 = vpop.xlane.xlu0 %1504
      %v1506 = vadd.f32 %v1450, %v1452
      %1507 = vadd.xlane.f32.xlu0 %v1506
      %v1508 = vpop.xlane.xlu0 %1507
      %v1509 = vadd.f32 %v1454, %v1456
      %1510 = vadd.xlane.f32.xlu0 %v1509
      %v1511 = vpop.xlane.xlu0 %1510
      %v1512 = vadd.f32 %v1458, %v1460
      %1513 = vadd.xlane.f32.xlu0 %v1512
      %v1514 = vpop.xlane.xlu0 %1513
      %v1515 = vadd.f32 %v1462, %v1464
      %1516 = vadd.xlane.f32.xlu0 %v1515
      %v1517 = vpop.xlane.xlu0 %1516
      %v1518 = vadd.f32 %v1466, %v1468
      %1519 = vadd.xlane.f32.xlu0 %v1518
      %v1520 = vpop.xlane.xlu0 %1519
      %v1521 = vadd.f32 %v1470, %v1472
      %1522 = vadd.xlane.f32.xlu0 %v1521
      %v1523 = vpop.xlane.xlu0 %1522
      %v1524 = vadd.f32 %v1474, %v1476
      %1525 = vadd.xlane.f32.xlu0 %v1524
      %v1526 = vpop.xlane.xlu0 %1525
      %v1527 = vadd.f32 %v1478, %v1480
      %1528 = vadd.xlane.f32.xlu0 %v1527
      %v1529 = vpop.xlane.xlu0 %1528
      %v1530 = vadd.f32 %v1482, %v1484
      %1531 = vadd.xlane.f32.xlu0 %v1530
      %v1532 = vpop.xlane.xlu0 %1531
      %v1533 = vpack.c.bf16 %v1426, %v1422
      %v1534 = vpack.c.bf16 %v1428, %v1424
      %v1535 = vpack.c.bf16 %v1434, %v1430
      %v1536 = vpack.c.bf16 %v1436, %v1432
      %v1537 = vpack.c.bf16 %v1442, %v1438
      %v1538 = vpack.c.bf16 %v1444, %v1440
      %v1539 = vpack.c.bf16 %v1450, %v1446
      %v1540 = vpack.c.bf16 %v1452, %v1448
      %v1541 = vpack.c.bf16 %v1458, %v1454
      %v1542 = vpack.c.bf16 %v1460, %v1456
      %v1543 = vpack.c.bf16 %v1466, %v1462
      %v1544 = vpack.c.bf16 %v1468, %v1464
      %v1545 = vpack.c.bf16 %v1474, %v1470
      %v1546 = vpack.c.bf16 %v1476, %v1472
      %v1547 = vpack.c.bf16 %v1482, %v1478
      %v1548 = vpack.c.bf16 %v1484, %v1480
      %1549 = vrot.lane.b32.xlu0 %v938, 112
      %v1550 = vpop.permute.xlu0 %1549
      %1551 = vrot.lane.b32.xlu0 %v939, 112
      %v1552 = vpop.permute.xlu0 %1551
      %1553 = vrot.lane.b32.xlu0 %v940, 112
      %v1554 = vpop.permute.xlu0 %1553
      %1555 = vrot.lane.b32.xlu0 %v941, 112
      %v1556 = vpop.permute.xlu0 %1555
      %1557 = vrot.lane.b32.xlu0 %v942, 112
      %v1558 = vpop.permute.xlu0 %1557
      %1559 = vrot.lane.b32.xlu0 %v943, 112
      %v1560 = vpop.permute.xlu0 %1559
      %1561 = vrot.lane.b32.xlu0 %v944, 112
      %v1562 = vpop.permute.xlu0 %1561
      %1563 = vrot.lane.b32.xlu0 %v945, 112
      %v1564 = vpop.permute.xlu0 %1563
      %1565 = vrot.lane.b32.xlu0 %v946, 112
      %v1566 = vpop.permute.xlu0 %1565
      %1567 = vrot.lane.b32.xlu0 %v947, 112
      %v1568 = vpop.permute.xlu0 %1567
      %1569 = vrot.lane.b32.xlu0 %v948, 112
      %v1570 = vpop.permute.xlu0 %1569
      %1571 = vrot.lane.b32.xlu0 %v949, 112
      %v1572 = vpop.permute.xlu0 %1571
      %1573 = vrot.lane.b32.xlu0 %v950, 112
      %v1574 = vpop.permute.xlu0 %1573
      %1575 = vrot.lane.b32.xlu0 %v951, 112
      %v1576 = vpop.permute.xlu0 %1575
      %1577 = vrot.lane.b32.xlu0 %v952, 112
      %v1578 = vpop.permute.xlu0 %1577
      %1579 = vrot.lane.b32.xlu0 %v953, 112
      %v1580 = vpop.permute.xlu0 %1579
      %1597 = vmatprep.subr.bf16.mxu0 0
      %1598 = vmatpush1.bf16.msra.mxu0 %v1564
      %1599 = vmatprep.subr.bf16.mxu0 0
      %1600 = vmatpush1.bf16.msra.mxu0 %v1562
      %1601 = vmatprep.subr.bf16.mxu0 0
      %1602 = vmatpush1.bf16.msra.mxu0 %v1560
      %1603 = vmatprep.subr.bf16.mxu0 0
      %1604 = vmatpush1.bf16.msra.mxu0 %v1558
      %1605 = vmatprep.subr.bf16.mxu0 0
      %1606 = vmatpush1.bf16.msra.mxu0 %v1556
      %1607 = vmatprep.subr.bf16.mxu0 0
      %1608 = vmatpush1.bf16.msra.mxu0 %v1554
      %1609 = vmatprep.subr.bf16.mxu0 0
      %1610 = vmatpush1.bf16.msra.mxu0 %v1552
      %1611 = vmatprep.subr.bf16.mxu0 0
      %1612 = vmatpush1.bf16.msra.mxu0 %v1550
      %1613 = vmatprep.subr.bf16.mxu0 0
      %1614 = vmatpush2.bf16.msra.mxu0 %v1580
      %1615 = vmatprep.subr.bf16.mxu0 0
      %1616 = vmatpush2.bf16.msra.mxu0 %v1578
      %1617 = vmatprep.subr.bf16.mxu0 0
      %1618 = vmatpush2.bf16.msra.mxu0 %v1576
      %1619 = vmatprep.subr.bf16.mxu0 0
      %1620 = vmatpush2.bf16.msra.mxu0 %v1574
      %1621 = vmatprep.subr.bf16.mxu0 0
      %1622 = vmatpush2.bf16.msra.mxu0 %v1572
      %1623 = vmatprep.subr.bf16.mxu0 0
      %1624 = vmatpush2.bf16.msra.mxu0 %v1570
      %1625 = vmatprep.subr.bf16.mxu0 0
      %1626 = vmatpush2.bf16.msra.mxu0 %v1568
      %1627 = vmatprep.subr.bf16.mxu0 0
      %1628 = vmatpush2.bf16.msra.mxu0 %v1566
      %1629 = vmatprep.mubr.bf16.mxu0 %v1534
      %1630 = vmatmul.mubr.bf16.gmra.mxu0 %v1533
      %v1631 = vpop.f32.mrf.mxu0
      %v1632 = vadd.f32 0.0, %v1631
      %v1633 = vpop.f32.mrf.mxu0
      %v1634 = vpop.f32.mrf.mxu0
      %v1635 = vadd.f32 0.0, %v1634
      %v1636 = vpop.f32.mrf.mxu0
      %1637 = vmatprep.mubr.bf16.mxu0 %v1536
      %1638 = vmatmul.mubr.bf16.gmra.mxu0 %v1535
      %v1639 = vpop.f32.mrf.mxu0
      %v1640 = vadd.f32 0.0, %v1639
      %v1641 = vpop.f32.mrf.mxu0
      %v1642 = vpop.f32.mrf.mxu0
      %v1643 = vadd.f32 0.0, %v1642
      %v1644 = vpop.f32.mrf.mxu0
      %1645 = vmatprep.mubr.bf16.mxu0 %v1538
      %1646 = vmatmul.mubr.bf16.gmra.mxu0 %v1537
      %v1647 = vpop.f32.mrf.mxu0
      %v1648 = vadd.f32 0.0, %v1647
      %v1649 = vpop.f32.mrf.mxu0
      %v1650 = vpop.f32.mrf.mxu0
      %v1651 = vadd.f32 0.0, %v1650
      %v1652 = vpop.f32.mrf.mxu0
      %1653 = vmatprep.mubr.bf16.mxu0 %v1540
      %1654 = vmatmul.mubr.bf16.gmra.mxu0 %v1539
      %v1655 = vpop.f32.mrf.mxu0
      %v1656 = vadd.f32 0.0, %v1655
      %v1657 = vpop.f32.mrf.mxu0
      %v1658 = vpop.f32.mrf.mxu0
      %v1659 = vadd.f32 0.0, %v1658
      %v1660 = vpop.f32.mrf.mxu0
      %1661 = vmatprep.mubr.bf16.mxu0 %v1542
      %1662 = vmatmul.mubr.bf16.gmra.mxu0 %v1541
      %v1663 = vpop.f32.mrf.mxu0
      %v1664 = vadd.f32 0.0, %v1663
      %v1665 = vpop.f32.mrf.mxu0
      %v1666 = vpop.f32.mrf.mxu0
      %v1667 = vadd.f32 0.0, %v1666
      %v1668 = vpop.f32.mrf.mxu0
      %1669 = vmatprep.mubr.bf16.mxu0 %v1544
      %1670 = vmatmul.mubr.bf16.gmra.mxu0 %v1543
      %v1671 = vpop.f32.mrf.mxu0
      %v1672 = vadd.f32 0.0, %v1671
      %v1673 = vpop.f32.mrf.mxu0
      %v1674 = vpop.f32.mrf.mxu0
      %v1675 = vadd.f32 0.0, %v1674
      %v1676 = vpop.f32.mrf.mxu0
      %1677 = vmatprep.mubr.bf16.mxu0 %v1546
      %1678 = vmatmul.mubr.bf16.gmra.mxu0 %v1545
      %v1679 = vpop.f32.mrf.mxu0
      %v1680 = vadd.f32 0.0, %v1679
      %v1681 = vpop.f32.mrf.mxu0
      %v1682 = vpop.f32.mrf.mxu0
      %v1683 = vadd.f32 0.0, %v1682
      %v1684 = vpop.f32.mrf.mxu0
      %1685 = vmatprep.mubr.bf16.mxu0 %v1548
      %1686 = vmatmul.mubr.bf16.gmra.mxu0 %v1547
      %v1687 = vpop.f32.mrf.mxu0
      %v1688 = vadd.f32 0.0, %v1687
      %v1689 = vpop.f32.mrf.mxu0
      %v1690 = vpop.f32.mrf.mxu0
      %v1691 = vadd.f32 0.0, %v1690
      %v1692 = vpop.f32.mrf.mxu0
      %1693 = vdwg.mxu0
      %v1694 = vrcp.pop %v1487
      %v1695 = vrcp.pop %v1490
      %v1696 = vrcp.pop %v1493
      %v1697 = vrcp.pop %v1496
      %v1698 = vrcp.pop %v1499
      %v1699 = vrcp.pop %v1502
      %v1700 = vrcp.pop %v1505
      %v1701 = vrcp.pop %v1508
      %v1702 = vrcp.pop %v1511
      %v1703 = vrcp.pop %v1514
      %v1704 = vrcp.pop %v1517
      %v1705 = vrcp.pop %v1520
      %v1706 = vrcp.pop %v1523
      %v1707 = vrcp.pop %v1526
      %v1708 = vrcp.pop %v1529
      %v1709 = vrcp.pop %v1532
      %v1710 = vmul.f32 %v1632, %v1694
      %v1711 = vmul.f32 %v1635, %v1695
      %v1712 = vmul.f32 %v1640, %v1696
      %v1713 = vmul.f32 %v1643, %v1697
      %v1714 = vmul.f32 %v1648, %v1698
      %v1715 = vmul.f32 %v1651, %v1699
      %v1716 = vmul.f32 %v1656, %v1700
      %v1717 = vmul.f32 %v1659, %v1701
      %v1718 = vmul.f32 %v1664, %v1702
      %v1719 = vmul.f32 %v1667, %v1703
      %v1720 = vmul.f32 %v1672, %v1704
      %v1721 = vmul.f32 %v1675, %v1705
      %v1722 = vmul.f32 %v1680, %v1706
      %v1723 = vmul.f32 %v1683, %v1707
      %v1724 = vmul.f32 %v1688, %v1708
      %v1725 = vmul.f32 %v1691, %v1709
      %1726 = vset.pattern.permute.xlu0 2
      %1727 = vperm.xlu0 %1726, %v358
      %v1728 = vpop.permute.xlu0 %1727
      %1730 = vset.pattern.permute.xlu0 2
      %1731 = vperm.xlu0 %1730, %v359
      %v1732 = vpop.permute.xlu0 %1731
      %1734 = vset.pattern.permute.xlu0 2
      %1735 = vperm.xlu0 %1734, %v360
      %v1736 = vpop.permute.xlu0 %1735
      %1738 = vset.pattern.permute.xlu0 2
      %1739 = vperm.xlu0 %1738, %v361
      %v1740 = vpop.permute.xlu0 %1739
      %1742 = vset.pattern.permute.xlu0 2
      %1743 = vperm.xlu0 %1742, %v362
      %v1744 = vpop.permute.xlu0 %1743
      %1746 = vset.pattern.permute.xlu0 2
      %1747 = vperm.xlu0 %1746, %v363
      %v1748 = vpop.permute.xlu0 %1747
      %1750 = vset.pattern.permute.xlu0 2
      %1751 = vperm.xlu0 %1750, %v364
      %v1752 = vpop.permute.xlu0 %1751
      %1754 = vset.pattern.permute.xlu0 2
      %1755 = vperm.xlu0 %1754, %v365
      %v1756 = vpop.permute.xlu0 %1755
      %1758 = vset.pattern.permute.xlu0 2
      %1759 = vperm.xlu0 %1758, %v366
      %v1760 = vpop.permute.xlu0 %1759
      %1762 = vset.pattern.permute.xlu0 2
      %1763 = vperm.xlu0 %1762, %v367
      %v1764 = vpop.permute.xlu0 %1763
      %1766 = vset.pattern.permute.xlu0 2
      %1767 = vperm.xlu0 %1766, %v368
      %v1768 = vpop.permute.xlu0 %1767
      %1770 = vset.pattern.permute.xlu0 2
      %1771 = vperm.xlu0 %1770, %v369
      %v1772 = vpop.permute.xlu0 %1771
      %1774 = vset.pattern.permute.xlu0 2
      %1775 = vperm.xlu0 %1774, %v370
      %v1776 = vpop.permute.xlu0 %1775
      %1778 = vset.pattern.permute.xlu0 2
      %1779 = vperm.xlu0 %1778, %v371
      %v1780 = vpop.permute.xlu0 %1779
      %1782 = vset.pattern.permute.xlu0 2
      %1783 = vperm.xlu0 %1782, %v372
      %v1784 = vpop.permute.xlu0 %1783
      %1786 = vset.pattern.permute.xlu0 2
      %1787 = vperm.xlu0 %1786, %v373
      %v1788 = vpop.permute.xlu0 %1787
      %v1790 = vlaneseq
      %v1791 = vshrl.u32 %v1790, 7
      %v1792 = vsub.s32 2, %v1791
      %v1793 = vrot.slane %v374, %v1792
      %v1794 = vlaneseq
      %v1795 = vshrl.u32 %v1794, 7
      %v1796 = vsub.s32 6, %v1795
      %v1797 = vrot.slane %v374, %v1796
      %v1800 = vlaneseq
      %v1801 = vshrl.u32 %v1800, 7
      %v1802 = vsub.s32 2, %v1801
      %v1803 = vrot.slane %v1793, %v1802
      %v1804 = vlaneseq
      %v1805 = vshrl.u32 %v1804, 7
      %v1806 = vsub.s32 2, %v1805
      %v1807 = vrot.slane %v1797, %v1806
      %v1808 = vadd.f32 %v1728, %v1803
      %v1809 = vadd.f32 %v1728, %v1807
      %v1810 = vadd.f32 %v1732, %v1803
      %v1811 = vadd.f32 %v1732, %v1807
      %v1812 = vadd.f32 %v1736, %v1803
      %v1813 = vadd.f32 %v1736, %v1807
      %v1814 = vadd.f32 %v1740, %v1803
      %v1815 = vadd.f32 %v1740, %v1807
      %v1816 = vadd.f32 %v1744, %v1803
      %v1817 = vadd.f32 %v1744, %v1807
      %v1818 = vadd.f32 %v1748, %v1803
      %v1819 = vadd.f32 %v1748, %v1807
      %v1820 = vadd.f32 %v1752, %v1803
      %v1821 = vadd.f32 %v1752, %v1807
      %v1822 = vadd.f32 %v1756, %v1803
      %v1823 = vadd.f32 %v1756, %v1807
      %v1824 = vadd.f32 %v1760, %v1803
      %v1825 = vadd.f32 %v1760, %v1807
      %v1826 = vadd.f32 %v1764, %v1803
      %v1827 = vadd.f32 %v1764, %v1807
      %v1828 = vadd.f32 %v1768, %v1803
      %v1829 = vadd.f32 %v1768, %v1807
      %v1830 = vadd.f32 %v1772, %v1803
      %v1831 = vadd.f32 %v1772, %v1807
      %v1832 = vadd.f32 %v1776, %v1803
      %v1833 = vadd.f32 %v1776, %v1807
      %v1834 = vadd.f32 %v1780, %v1803
      %v1835 = vadd.f32 %v1780, %v1807
      %v1836 = vadd.f32 %v1784, %v1803
      %v1837 = vadd.f32 %v1784, %v1807
      %v1838 = vadd.f32 %v1788, %v1803
      %v1839 = vadd.f32 %v1788, %v1807
      %vm1840 = vcmp.ge.f32.partialorder %v1808, 0.0
      %vm1841 = vcmp.ge.f32.partialorder %v1809, 0.0
      %vm1842 = vcmp.ge.f32.partialorder %v1810, 0.0
      %vm1843 = vcmp.ge.f32.partialorder %v1811, 0.0
      %vm1844 = vcmp.ge.f32.partialorder %v1812, 0.0
      %vm1845 = vcmp.ge.f32.partialorder %v1813, 0.0
      %vm1846 = vcmp.ge.f32.partialorder %v1814, 0.0
      %vm1847 = vcmp.ge.f32.partialorder %v1815, 0.0
      %vm1848 = vcmp.ge.f32.partialorder %v1816, 0.0
      %vm1849 = vcmp.ge.f32.partialorder %v1817, 0.0
      %vm1850 = vcmp.ge.f32.partialorder %v1818, 0.0
      %vm1851 = vcmp.ge.f32.partialorder %v1819, 0.0
      %vm1852 = vcmp.ge.f32.partialorder %v1820, 0.0
      %vm1853 = vcmp.ge.f32.partialorder %v1821, 0.0
      %vm1854 = vcmp.ge.f32.partialorder %v1822, 0.0
      %vm1855 = vcmp.ge.f32.partialorder %v1823, 0.0
      %vm1856 = vcmp.ge.f32.partialorder %v1824, 0.0
      %vm1857 = vcmp.ge.f32.partialorder %v1825, 0.0
      %vm1858 = vcmp.ge.f32.partialorder %v1826, 0.0
      %vm1859 = vcmp.ge.f32.partialorder %v1827, 0.0
      %vm1860 = vcmp.ge.f32.partialorder %v1828, 0.0
      %vm1861 = vcmp.ge.f32.partialorder %v1829, 0.0
      %vm1862 = vcmp.ge.f32.partialorder %v1830, 0.0
      %vm1863 = vcmp.ge.f32.partialorder %v1831, 0.0
      %vm1864 = vcmp.ge.f32.partialorder %v1832, 0.0
      %vm1865 = vcmp.ge.f32.partialorder %v1833, 0.0
      %vm1866 = vcmp.ge.f32.partialorder %v1834, 0.0
      %vm1867 = vcmp.ge.f32.partialorder %v1835, 0.0
      %vm1868 = vcmp.ge.f32.partialorder %v1836, 0.0
      %vm1869 = vcmp.ge.f32.partialorder %v1837, 0.0
      %vm1870 = vcmp.ge.f32.partialorder %v1838, 0.0
      %vm1871 = vcmp.ge.f32.partialorder %v1839, 0.0
      %v1872 = vmul.f32 %v1808, 0.2
      %v1873 = vmul.f32 %v1809, 0.2
      %v1874 = vmul.f32 %v1810, 0.2
      %v1875 = vmul.f32 %v1811, 0.2
      %v1876 = vmul.f32 %v1812, 0.2
      %v1877 = vmul.f32 %v1813, 0.2
      %v1878 = vmul.f32 %v1814, 0.2
      %v1879 = vmul.f32 %v1815, 0.2
      %v1880 = vmul.f32 %v1816, 0.2
      %v1881 = vmul.f32 %v1817, 0.2
      %v1882 = vmul.f32 %v1818, 0.2
      %v1883 = vmul.f32 %v1819, 0.2
      %v1884 = vmul.f32 %v1820, 0.2
      %v1885 = vmul.f32 %v1821, 0.2
      %v1886 = vmul.f32 %v1822, 0.2
      %v1887 = vmul.f32 %v1823, 0.2
      %v1888 = vmul.f32 %v1824, 0.2
      %v1889 = vmul.f32 %v1825, 0.2
      %v1890 = vmul.f32 %v1826, 0.2
      %v1891 = vmul.f32 %v1827, 0.2
      %v1892 = vmul.f32 %v1828, 0.2
      %v1893 = vmul.f32 %v1829, 0.2
      %v1894 = vmul.f32 %v1830, 0.2
      %v1895 = vmul.f32 %v1831, 0.2
      %v1896 = vmul.f32 %v1832, 0.2
      %v1897 = vmul.f32 %v1833, 0.2
      %v1898 = vmul.f32 %v1834, 0.2
      %v1899 = vmul.f32 %v1835, 0.2
      %v1900 = vmul.f32 %v1836, 0.2
      %v1901 = vmul.f32 %v1837, 0.2
      %v1902 = vmul.f32 %v1838, 0.2
      %v1903 = vmul.f32 %v1839, 0.2
      %v1904 = vsel %vm1840, %v1808, %v1872
      %v1905 = vsel %vm1841, %v1809, %v1873
      %v1906 = vsel %vm1842, %v1810, %v1874
      %v1907 = vsel %vm1843, %v1811, %v1875
      %v1908 = vsel %vm1844, %v1812, %v1876
      %v1909 = vsel %vm1845, %v1813, %v1877
      %v1910 = vsel %vm1846, %v1814, %v1878
      %v1911 = vsel %vm1847, %v1815, %v1879
      %v1912 = vsel %vm1848, %v1816, %v1880
      %v1913 = vsel %vm1849, %v1817, %v1881
      %v1914 = vsel %vm1850, %v1818, %v1882
      %v1915 = vsel %vm1851, %v1819, %v1883
      %v1916 = vsel %vm1852, %v1820, %v1884
      %v1917 = vsel %vm1853, %v1821, %v1885
      %v1918 = vsel %vm1854, %v1822, %v1886
      %v1919 = vsel %vm1855, %v1823, %v1887
      %v1920 = vsel %vm1856, %v1824, %v1888
      %v1921 = vsel %vm1857, %v1825, %v1889
      %v1922 = vsel %vm1858, %v1826, %v1890
      %v1923 = vsel %vm1859, %v1827, %v1891
      %v1924 = vsel %vm1860, %v1828, %v1892
      %v1925 = vsel %vm1861, %v1829, %v1893
      %v1926 = vsel %vm1862, %v1830, %v1894
      %v1927 = vsel %vm1863, %v1831, %v1895
      %v1928 = vsel %vm1864, %v1832, %v1896
      %v1929 = vsel %vm1865, %v1833, %v1897
      %v1930 = vsel %vm1866, %v1834, %v1898
      %v1931 = vsel %vm1867, %v1835, %v1899
      %v1932 = vsel %vm1868, %v1836, %v1900
      %v1933 = vsel %vm1869, %v1837, %v1901
      %v1934 = vsel %vm1870, %v1838, %v1902
      %v1935 = vsel %vm1871, %v1839, %v1903
      %v1936 = vsel %vm326, %v1904, -1e+30
      %v1937 = vsel %vm327, %v1905, -1e+30
      %v1938 = vsel %vm328, %v1906, -1e+30
      %v1939 = vsel %vm329, %v1907, -1e+30
      %v1940 = vsel %vm330, %v1908, -1e+30
      %v1941 = vsel %vm331, %v1909, -1e+30
      %v1942 = vsel %vm332, %v1910, -1e+30
      %v1943 = vsel %vm333, %v1911, -1e+30
      %v1944 = vsel %vm334, %v1912, -1e+30
      %v1945 = vsel %vm335, %v1913, -1e+30
      %v1946 = vsel %vm336, %v1914, -1e+30
      %v1947 = vsel %vm337, %v1915, -1e+30
      %v1948 = vsel %vm338, %v1916, -1e+30
      %v1949 = vsel %vm339, %v1917, -1e+30
      %v1950 = vsel %vm340, %v1918, -1e+30
      %v1951 = vsel %vm341, %v1919, -1e+30
      %v1952 = vsel %vm342, %v1920, -1e+30
      %v1953 = vsel %vm343, %v1921, -1e+30
      %v1954 = vsel %vm344, %v1922, -1e+30
      %v1955 = vsel %vm345, %v1923, -1e+30
      %v1956 = vsel %vm346, %v1924, -1e+30
      %v1957 = vsel %vm347, %v1925, -1e+30
      %v1958 = vsel %vm348, %v1926, -1e+30
      %v1959 = vsel %vm349, %v1927, -1e+30
      %v1960 = vsel %vm350, %v1928, -1e+30
      %v1961 = vsel %vm351, %v1929, -1e+30
      %v1962 = vsel %vm352, %v1930, -1e+30
      %v1963 = vsel %vm353, %v1931, -1e+30
      %v1964 = vsel %vm354, %v1932, -1e+30
      %v1965 = vsel %vm355, %v1933, -1e+30
      %v1966 = vsel %vm356, %v1934, -1e+30
      %v1967 = vsel %vm357, %v1935, -1e+30
      %v1968 = vmax.f32 %v1936, %v1937
      %1969 = vmax.xlane.f32.xlu0 %v1968
      %v1970 = vpop.xlane.xlu0 %1969
      %v1971 = vmax.f32 %v1938, %v1939
      %1972 = vmax.xlane.f32.xlu0 %v1971
      %v1973 = vpop.xlane.xlu0 %1972
      %v1974 = vmax.f32 %v1940, %v1941
      %1975 = vmax.xlane.f32.xlu0 %v1974
      %v1976 = vpop.xlane.xlu0 %1975
      %v1977 = vmax.f32 %v1942, %v1943
      %1978 = vmax.xlane.f32.xlu0 %v1977
      %v1979 = vpop.xlane.xlu0 %1978
      %v1980 = vmax.f32 %v1944, %v1945
      %1981 = vmax.xlane.f32.xlu0 %v1980
      %v1982 = vpop.xlane.xlu0 %1981
      %v1983 = vmax.f32 %v1946, %v1947
      %1984 = vmax.xlane.f32.xlu0 %v1983
      %v1985 = vpop.xlane.xlu0 %1984
      %v1986 = vmax.f32 %v1948, %v1949
      %1987 = vmax.xlane.f32.xlu0 %v1986
      %v1988 = vpop.xlane.xlu0 %1987
      %v1989 = vmax.f32 %v1950, %v1951
      %1990 = vmax.xlane.f32.xlu0 %v1989
      %v1991 = vpop.xlane.xlu0 %1990
      %v1992 = vmax.f32 %v1952, %v1953
      %1993 = vmax.xlane.f32.xlu0 %v1992
      %v1994 = vpop.xlane.xlu0 %1993
      %v1995 = vmax.f32 %v1954, %v1955
      %1996 = vmax.xlane.f32.xlu0 %v1995
      %v1997 = vpop.xlane.xlu0 %1996
      %v1998 = vmax.f32 %v1956, %v1957
      %1999 = vmax.xlane.f32.xlu0 %v1998
      %v2000 = vpop.xlane.xlu0 %1999
      %v2001 = vmax.f32 %v1958, %v1959
      %2002 = vmax.xlane.f32.xlu0 %v2001
      %v2003 = vpop.xlane.xlu0 %2002
      %v2004 = vmax.f32 %v1960, %v1961
      %2005 = vmax.xlane.f32.xlu0 %v2004
      %v2006 = vpop.xlane.xlu0 %2005
      %v2007 = vmax.f32 %v1962, %v1963
      %2008 = vmax.xlane.f32.xlu0 %v2007
      %v2009 = vpop.xlane.xlu0 %2008
      %v2010 = vmax.f32 %v1964, %v1965
      %2011 = vmax.xlane.f32.xlu0 %v2010
      %v2012 = vpop.xlane.xlu0 %2011
      %v2013 = vmax.f32 %v1966, %v1967
      %2014 = vmax.xlane.f32.xlu0 %v2013
      %v2015 = vpop.xlane.xlu0 %2014
      %v2016 = vsub.f32 %v1936, %v1970
      %v2017 = vsub.f32 %v1937, %v1970
      %v2018 = vsub.f32 %v1938, %v1973
      %v2019 = vsub.f32 %v1939, %v1973
      %v2020 = vsub.f32 %v1940, %v1976
      %v2021 = vsub.f32 %v1941, %v1976
      %v2022 = vsub.f32 %v1942, %v1979
      %v2023 = vsub.f32 %v1943, %v1979
      %v2024 = vsub.f32 %v1944, %v1982
      %v2025 = vsub.f32 %v1945, %v1982
      %v2026 = vsub.f32 %v1946, %v1985
      %v2027 = vsub.f32 %v1947, %v1985
      %v2028 = vsub.f32 %v1948, %v1988
      %v2029 = vsub.f32 %v1949, %v1988
      %v2030 = vsub.f32 %v1950, %v1991
      %v2031 = vsub.f32 %v1951, %v1991
      %v2032 = vsub.f32 %v1952, %v1994
      %v2033 = vsub.f32 %v1953, %v1994
      %v2034 = vsub.f32 %v1954, %v1997
      %v2035 = vsub.f32 %v1955, %v1997
      %v2036 = vsub.f32 %v1956, %v2000
      %v2037 = vsub.f32 %v1957, %v2000
      %v2038 = vsub.f32 %v1958, %v2003
      %v2039 = vsub.f32 %v1959, %v2003
      %v2040 = vsub.f32 %v1960, %v2006
      %v2041 = vsub.f32 %v1961, %v2006
      %v2042 = vsub.f32 %v1962, %v2009
      %v2043 = vsub.f32 %v1963, %v2009
      %v2044 = vsub.f32 %v1964, %v2012
      %v2045 = vsub.f32 %v1965, %v2012
      %v2046 = vsub.f32 %v1966, %v2015
      %v2047 = vsub.f32 %v1967, %v2015
      %v2048 = vmul.f32 %v2016, 1.442695
      %v2049 = vpow.pop %v2048
      %v2050 = vmul.f32 %v2017, 1.442695
      %v2051 = vpow.pop %v2050
      %v2052 = vmul.f32 %v2018, 1.442695
      %v2053 = vpow.pop %v2052
      %v2054 = vmul.f32 %v2019, 1.442695
      %v2055 = vpow.pop %v2054
      %v2056 = vmul.f32 %v2020, 1.442695
      %v2057 = vpow.pop %v2056
      %v2058 = vmul.f32 %v2021, 1.442695
      %v2059 = vpow.pop %v2058
      %v2060 = vmul.f32 %v2022, 1.442695
      %v2061 = vpow.pop %v2060
      %v2062 = vmul.f32 %v2023, 1.442695
      %v2063 = vpow.pop %v2062
      %v2064 = vmul.f32 %v2024, 1.442695
      %v2065 = vpow.pop %v2064
      %v2066 = vmul.f32 %v2025, 1.442695
      %v2067 = vpow.pop %v2066
      %v2068 = vmul.f32 %v2026, 1.442695
      %v2069 = vpow.pop %v2068
      %v2070 = vmul.f32 %v2027, 1.442695
      %v2071 = vpow.pop %v2070
      %v2072 = vmul.f32 %v2028, 1.442695
      %v2073 = vpow.pop %v2072
      %v2074 = vmul.f32 %v2029, 1.442695
      %v2075 = vpow.pop %v2074
      %v2076 = vmul.f32 %v2030, 1.442695
      %v2077 = vpow.pop %v2076
      %v2078 = vmul.f32 %v2031, 1.442695
      %v2079 = vpow.pop %v2078
      %v2080 = vmul.f32 %v2032, 1.442695
      %v2081 = vpow.pop %v2080
      %v2082 = vmul.f32 %v2033, 1.442695
      %v2083 = vpow.pop %v2082
      %v2084 = vmul.f32 %v2034, 1.442695
      %v2085 = vpow.pop %v2084
      %v2086 = vmul.f32 %v2035, 1.442695
      %v2087 = vpow.pop %v2086
      %v2088 = vmul.f32 %v2036, 1.442695
      %v2089 = vpow.pop %v2088
      %v2090 = vmul.f32 %v2037, 1.442695
      %v2091 = vpow.pop %v2090
      %v2092 = vmul.f32 %v2038, 1.442695
      %v2093 = vpow.pop %v2092
      %v2094 = vmul.f32 %v2039, 1.442695
      %v2095 = vpow.pop %v2094
      %v2096 = vmul.f32 %v2040, 1.442695
      %v2097 = vpow.pop %v2096
      %v2098 = vmul.f32 %v2041, 1.442695
      %v2099 = vpow.pop %v2098
      %v2100 = vmul.f32 %v2042, 1.442695
      %v2101 = vpow.pop %v2100
      %v2102 = vmul.f32 %v2043, 1.442695
      %v2103 = vpow.pop %v2102
      %v2104 = vmul.f32 %v2044, 1.442695
      %v2105 = vpow.pop %v2104
      %v2106 = vmul.f32 %v2045, 1.442695
      %v2107 = vpow.pop %v2106
      %v2108 = vmul.f32 %v2046, 1.442695
      %v2109 = vpow.pop %v2108
      %v2110 = vmul.f32 %v2047, 1.442695
      %v2111 = vpow.pop %v2110
      %v2112 = vadd.f32 %v2049, %v2051
      %2113 = vadd.xlane.f32.xlu0 %v2112
      %v2114 = vpop.xlane.xlu0 %2113
      %v2115 = vadd.f32 %v2053, %v2055
      %2116 = vadd.xlane.f32.xlu0 %v2115
      %v2117 = vpop.xlane.xlu0 %2116
      %v2118 = vadd.f32 %v2057, %v2059
      %2119 = vadd.xlane.f32.xlu0 %v2118
      %v2120 = vpop.xlane.xlu0 %2119
      %v2121 = vadd.f32 %v2061, %v2063
      %2122 = vadd.xlane.f32.xlu0 %v2121
      %v2123 = vpop.xlane.xlu0 %2122
      %v2124 = vadd.f32 %v2065, %v2067
      %2125 = vadd.xlane.f32.xlu0 %v2124
      %v2126 = vpop.xlane.xlu0 %2125
      %v2127 = vadd.f32 %v2069, %v2071
      %2128 = vadd.xlane.f32.xlu0 %v2127
      %v2129 = vpop.xlane.xlu0 %2128
      %v2130 = vadd.f32 %v2073, %v2075
      %2131 = vadd.xlane.f32.xlu0 %v2130
      %v2132 = vpop.xlane.xlu0 %2131
      %v2133 = vadd.f32 %v2077, %v2079
      %2134 = vadd.xlane.f32.xlu0 %v2133
      %v2135 = vpop.xlane.xlu0 %2134
      %v2136 = vadd.f32 %v2081, %v2083
      %2137 = vadd.xlane.f32.xlu0 %v2136
      %v2138 = vpop.xlane.xlu0 %2137
      %v2139 = vadd.f32 %v2085, %v2087
      %2140 = vadd.xlane.f32.xlu0 %v2139
      %v2141 = vpop.xlane.xlu0 %2140
      %v2142 = vadd.f32 %v2089, %v2091
      %2143 = vadd.xlane.f32.xlu0 %v2142
      %v2144 = vpop.xlane.xlu0 %2143
      %v2145 = vadd.f32 %v2093, %v2095
      %2146 = vadd.xlane.f32.xlu0 %v2145
      %v2147 = vpop.xlane.xlu0 %2146
      %v2148 = vadd.f32 %v2097, %v2099
      %2149 = vadd.xlane.f32.xlu0 %v2148
      %v2150 = vpop.xlane.xlu0 %2149
      %v2151 = vadd.f32 %v2101, %v2103
      %2152 = vadd.xlane.f32.xlu0 %v2151
      %v2153 = vpop.xlane.xlu0 %2152
      %v2154 = vadd.f32 %v2105, %v2107
      %2155 = vadd.xlane.f32.xlu0 %v2154
      %v2156 = vpop.xlane.xlu0 %2155
      %v2157 = vadd.f32 %v2109, %v2111
      %2158 = vadd.xlane.f32.xlu0 %v2157
      %v2159 = vpop.xlane.xlu0 %2158
      %v2160 = vpack.c.bf16 %v2053, %v2049
      %v2161 = vpack.c.bf16 %v2055, %v2051
      %v2162 = vpack.c.bf16 %v2061, %v2057
      %v2163 = vpack.c.bf16 %v2063, %v2059
      %v2164 = vpack.c.bf16 %v2069, %v2065
      %v2165 = vpack.c.bf16 %v2071, %v2067
      %v2166 = vpack.c.bf16 %v2077, %v2073
      %v2167 = vpack.c.bf16 %v2079, %v2075
      %v2168 = vpack.c.bf16 %v2085, %v2081
      %v2169 = vpack.c.bf16 %v2087, %v2083
      %v2170 = vpack.c.bf16 %v2093, %v2089
      %v2171 = vpack.c.bf16 %v2095, %v2091
      %v2172 = vpack.c.bf16 %v2101, %v2097
      %v2173 = vpack.c.bf16 %v2103, %v2099
      %v2174 = vpack.c.bf16 %v2109, %v2105
      %v2175 = vpack.c.bf16 %v2111, %v2107
      %2176 = vrot.lane.b32.xlu0 %v938, 96
      %v2177 = vpop.permute.xlu0 %2176
      %2178 = vrot.lane.b32.xlu0 %v939, 96
      %v2179 = vpop.permute.xlu0 %2178
      %2180 = vrot.lane.b32.xlu0 %v940, 96
      %v2181 = vpop.permute.xlu0 %2180
      %2182 = vrot.lane.b32.xlu0 %v941, 96
      %v2183 = vpop.permute.xlu0 %2182
      %2184 = vrot.lane.b32.xlu0 %v942, 96
      %v2185 = vpop.permute.xlu0 %2184
      %2186 = vrot.lane.b32.xlu0 %v943, 96
      %v2187 = vpop.permute.xlu0 %2186
      %2188 = vrot.lane.b32.xlu0 %v944, 96
      %v2189 = vpop.permute.xlu0 %2188
      %2190 = vrot.lane.b32.xlu0 %v945, 96
      %v2191 = vpop.permute.xlu0 %2190
      %2192 = vrot.lane.b32.xlu0 %v946, 96
      %v2193 = vpop.permute.xlu0 %2192
      %2194 = vrot.lane.b32.xlu0 %v947, 96
      %v2195 = vpop.permute.xlu0 %2194
      %2196 = vrot.lane.b32.xlu0 %v948, 96
      %v2197 = vpop.permute.xlu0 %2196
      %2198 = vrot.lane.b32.xlu0 %v949, 96
      %v2199 = vpop.permute.xlu0 %2198
      %2200 = vrot.lane.b32.xlu0 %v950, 96
      %v2201 = vpop.permute.xlu0 %2200
      %2202 = vrot.lane.b32.xlu0 %v951, 96
      %v2203 = vpop.permute.xlu0 %2202
      %2204 = vrot.lane.b32.xlu0 %v952, 96
      %v2205 = vpop.permute.xlu0 %2204
      %2206 = vrot.lane.b32.xlu0 %v953, 96
      %v2207 = vpop.permute.xlu0 %2206
      %2224 = vmatprep.subr.bf16.mxu0 0
      %2225 = vmatpush1.bf16.msra.mxu0 %v2191
      %2226 = vmatprep.subr.bf16.mxu0 0
      %2227 = vmatpush1.bf16.msra.mxu0 %v2189
      %2228 = vmatprep.subr.bf16.mxu0 0
      %2229 = vmatpush1.bf16.msra.mxu0 %v2187
      %2230 = vmatprep.subr.bf16.mxu0 0
      %2231 = vmatpush1.bf16.msra.mxu0 %v2185
      %2232 = vmatprep.subr.bf16.mxu0 0
      %2233 = vmatpush1.bf16.msra.mxu0 %v2183
      %2234 = vmatprep.subr.bf16.mxu0 0
      %2235 = vmatpush1.bf16.msra.mxu0 %v2181
      %2236 = vmatprep.subr.bf16.mxu0 0
      %2237 = vmatpush1.bf16.msra.mxu0 %v2179
      %2238 = vmatprep.subr.bf16.mxu0 0
      %2239 = vmatpush1.bf16.msra.mxu0 %v2177
      %2240 = vmatprep.subr.bf16.mxu0 0
      %2241 = vmatpush2.bf16.msra.mxu0 %v2207
      %2242 = vmatprep.subr.bf16.mxu0 0
      %2243 = vmatpush2.bf16.msra.mxu0 %v2205
      %2244 = vmatprep.subr.bf16.mxu0 0
      %2245 = vmatpush2.bf16.msra.mxu0 %v2203
      %2246 = vmatprep.subr.bf16.mxu0 0
      %2247 = vmatpush2.bf16.msra.mxu0 %v2201
      %2248 = vmatprep.subr.bf16.mxu0 0
      %2249 = vmatpush2.bf16.msra.mxu0 %v2199
      %2250 = vmatprep.subr.bf16.mxu0 0
      %2251 = vmatpush2.bf16.msra.mxu0 %v2197
      %2252 = vmatprep.subr.bf16.mxu0 0
      %2253 = vmatpush2.bf16.msra.mxu0 %v2195
      %2254 = vmatprep.subr.bf16.mxu0 0
      %2255 = vmatpush2.bf16.msra.mxu0 %v2193
      %2256 = vmatprep.mubr.bf16.mxu0 %v2161
      %2257 = vmatmul.mubr.bf16.gmra.mxu0 %v2160
      %v2258 = vpop.f32.mrf.mxu0
      %v2259 = vadd.f32 0.0, %v2258
      %v2260 = vpop.f32.mrf.mxu0
      %v2261 = vpop.f32.mrf.mxu0
      %v2262 = vadd.f32 0.0, %v2261
      %v2263 = vpop.f32.mrf.mxu0
      %2264 = vmatprep.mubr.bf16.mxu0 %v2163
      %2265 = vmatmul.mubr.bf16.gmra.mxu0 %v2162
      %v2266 = vpop.f32.mrf.mxu0
      %v2267 = vadd.f32 0.0, %v2266
      %v2268 = vpop.f32.mrf.mxu0
      %v2269 = vpop.f32.mrf.mxu0
      %v2270 = vadd.f32 0.0, %v2269
      %v2271 = vpop.f32.mrf.mxu0
      %2272 = vmatprep.mubr.bf16.mxu0 %v2165
      %2273 = vmatmul.mubr.bf16.gmra.mxu0 %v2164
      %v2274 = vpop.f32.mrf.mxu0
      %v2275 = vadd.f32 0.0, %v2274
      %v2276 = vpop.f32.mrf.mxu0
      %v2277 = vpop.f32.mrf.mxu0
      %v2278 = vadd.f32 0.0, %v2277
      %v2279 = vpop.f32.mrf.mxu0
      %2280 = vmatprep.mubr.bf16.mxu0 %v2167
      %2281 = vmatmul.mubr.bf16.gmra.mxu0 %v2166
      %v2282 = vpop.f32.mrf.mxu0
      %v2283 = vadd.f32 0.0, %v2282
      %v2284 = vpop.f32.mrf.mxu0
      %v2285 = vpop.f32.mrf.mxu0
      %v2286 = vadd.f32 0.0, %v2285
      %v2287 = vpop.f32.mrf.mxu0
      %2288 = vmatprep.mubr.bf16.mxu0 %v2169
      %2289 = vmatmul.mubr.bf16.gmra.mxu0 %v2168
      %v2290 = vpop.f32.mrf.mxu0
      %v2291 = vadd.f32 0.0, %v2290
      %v2292 = vpop.f32.mrf.mxu0
      %v2293 = vpop.f32.mrf.mxu0
      %v2294 = vadd.f32 0.0, %v2293
      %v2295 = vpop.f32.mrf.mxu0
      %2296 = vmatprep.mubr.bf16.mxu0 %v2171
      %2297 = vmatmul.mubr.bf16.gmra.mxu0 %v2170
      %v2298 = vpop.f32.mrf.mxu0
      %v2299 = vadd.f32 0.0, %v2298
      %v2300 = vpop.f32.mrf.mxu0
      %v2301 = vpop.f32.mrf.mxu0
      %v2302 = vadd.f32 0.0, %v2301
      %v2303 = vpop.f32.mrf.mxu0
      %2304 = vmatprep.mubr.bf16.mxu0 %v2173
      %2305 = vmatmul.mubr.bf16.gmra.mxu0 %v2172
      %v2306 = vpop.f32.mrf.mxu0
      %v2307 = vadd.f32 0.0, %v2306
      %v2308 = vpop.f32.mrf.mxu0
      %v2309 = vpop.f32.mrf.mxu0
      %v2310 = vadd.f32 0.0, %v2309
      %v2311 = vpop.f32.mrf.mxu0
      %2312 = vmatprep.mubr.bf16.mxu0 %v2175
      %2313 = vmatmul.mubr.bf16.gmra.mxu0 %v2174
      %v2314 = vpop.f32.mrf.mxu0
      %v2315 = vadd.f32 0.0, %v2314
      %v2316 = vpop.f32.mrf.mxu0
      %v2317 = vpop.f32.mrf.mxu0
      %v2318 = vadd.f32 0.0, %v2317
      %v2319 = vpop.f32.mrf.mxu0
      %2320 = vdwg.mxu0
      %v2321 = vrcp.pop %v2114
      %v2322 = vrcp.pop %v2117
      %v2323 = vrcp.pop %v2120
      %v2324 = vrcp.pop %v2123
      %v2325 = vrcp.pop %v2126
      %v2326 = vrcp.pop %v2129
      %v2327 = vrcp.pop %v2132
      %v2328 = vrcp.pop %v2135
      %v2329 = vrcp.pop %v2138
      %v2330 = vrcp.pop %v2141
      %v2331 = vrcp.pop %v2144
      %v2332 = vrcp.pop %v2147
      %v2333 = vrcp.pop %v2150
      %v2334 = vrcp.pop %v2153
      %v2335 = vrcp.pop %v2156
      %v2336 = vrcp.pop %v2159
      %v2337 = vmul.f32 %v2259, %v2321
      %v2338 = vmul.f32 %v2262, %v2322
      %v2339 = vmul.f32 %v2267, %v2323
      %v2340 = vmul.f32 %v2270, %v2324
      %v2341 = vmul.f32 %v2275, %v2325
      %v2342 = vmul.f32 %v2278, %v2326
      %v2343 = vmul.f32 %v2283, %v2327
      %v2344 = vmul.f32 %v2286, %v2328
      %v2345 = vmul.f32 %v2291, %v2329
      %v2346 = vmul.f32 %v2294, %v2330
      %v2347 = vmul.f32 %v2299, %v2331
      %v2348 = vmul.f32 %v2302, %v2332
      %v2349 = vmul.f32 %v2307, %v2333
      %v2350 = vmul.f32 %v2310, %v2334
      %v2351 = vmul.f32 %v2315, %v2335
      %v2352 = vmul.f32 %v2318, %v2336
      %2353 = vset.pattern.permute.xlu0 3
      %2354 = vperm.xlu0 %2353, %v358
      %v2355 = vpop.permute.xlu0 %2354
      %2357 = vset.pattern.permute.xlu0 3
      %2358 = vperm.xlu0 %2357, %v359
      %v2359 = vpop.permute.xlu0 %2358
      %2361 = vset.pattern.permute.xlu0 3
      %2362 = vperm.xlu0 %2361, %v360
      %v2363 = vpop.permute.xlu0 %2362
      %2365 = vset.pattern.permute.xlu0 3
      %2366 = vperm.xlu0 %2365, %v361
      %v2367 = vpop.permute.xlu0 %2366
      %2369 = vset.pattern.permute.xlu0 3
      %2370 = vperm.xlu0 %2369, %v362
      %v2371 = vpop.permute.xlu0 %2370
      %2373 = vset.pattern.permute.xlu0 3
      %2374 = vperm.xlu0 %2373, %v363
      %v2375 = vpop.permute.xlu0 %2374
      %2377 = vset.pattern.permute.xlu0 3
      %2378 = vperm.xlu0 %2377, %v364
      %v2379 = vpop.permute.xlu0 %2378
      %2381 = vset.pattern.permute.xlu0 3
      %2382 = vperm.xlu0 %2381, %v365
      %v2383 = vpop.permute.xlu0 %2382
      %2385 = vset.pattern.permute.xlu0 3
      %2386 = vperm.xlu0 %2385, %v366
      %v2387 = vpop.permute.xlu0 %2386
      %2389 = vset.pattern.permute.xlu0 3
      %2390 = vperm.xlu0 %2389, %v367
      %v2391 = vpop.permute.xlu0 %2390
      %2393 = vset.pattern.permute.xlu0 3
      %2394 = vperm.xlu0 %2393, %v368
      %v2395 = vpop.permute.xlu0 %2394
      %2397 = vset.pattern.permute.xlu0 3
      %2398 = vperm.xlu0 %2397, %v369
      %v2399 = vpop.permute.xlu0 %2398
      %2401 = vset.pattern.permute.xlu0 3
      %2402 = vperm.xlu0 %2401, %v370
      %v2403 = vpop.permute.xlu0 %2402
      %2405 = vset.pattern.permute.xlu0 3
      %2406 = vperm.xlu0 %2405, %v371
      %v2407 = vpop.permute.xlu0 %2406
      %2409 = vset.pattern.permute.xlu0 3
      %2410 = vperm.xlu0 %2409, %v372
      %v2411 = vpop.permute.xlu0 %2410
      %2413 = vset.pattern.permute.xlu0 3
      %2414 = vperm.xlu0 %2413, %v373
      %v2415 = vpop.permute.xlu0 %2414
      %v2417 = vlaneseq
      %v2418 = vshrl.u32 %v2417, 7
      %v2419 = vsub.s32 3, %v2418
      %v2420 = vrot.slane %v374, %v2419
      %v2421 = vlaneseq
      %v2422 = vshrl.u32 %v2421, 7
      %v2423 = vsub.s32 7, %v2422
      %v2424 = vrot.slane %v374, %v2423
      %v2427 = vlaneseq
      %v2428 = vshrl.u32 %v2427, 7
      %v2429 = vsub.s32 3, %v2428
      %v2430 = vrot.slane %v2420, %v2429
      %v2431 = vlaneseq
      %v2432 = vshrl.u32 %v2431, 7
      %v2433 = vsub.s32 3, %v2432
      %v2434 = vrot.slane %v2424, %v2433
      %v2435 = vadd.f32 %v2355, %v2430
      %v2436 = vadd.f32 %v2355, %v2434
      %v2437 = vadd.f32 %v2359, %v2430
      %v2438 = vadd.f32 %v2359, %v2434
      %v2439 = vadd.f32 %v2363, %v2430
      %v2440 = vadd.f32 %v2363, %v2434
      %v2441 = vadd.f32 %v2367, %v2430
      %v2442 = vadd.f32 %v2367, %v2434
      %v2443 = vadd.f32 %v2371, %v2430
      %v2444 = vadd.f32 %v2371, %v2434
      %v2445 = vadd.f32 %v2375, %v2430
      %v2446 = vadd.f32 %v2375, %v2434
      %v2447 = vadd.f32 %v2379, %v2430
      %v2448 = vadd.f32 %v2379, %v2434
      %v2449 = vadd.f32 %v2383, %v2430
      %v2450 = vadd.f32 %v2383, %v2434
      %v2451 = vadd.f32 %v2387, %v2430
      %v2452 = vadd.f32 %v2387, %v2434
      %v2453 = vadd.f32 %v2391, %v2430
      %v2454 = vadd.f32 %v2391, %v2434
      %v2455 = vadd.f32 %v2395, %v2430
      %v2456 = vadd.f32 %v2395, %v2434
      %v2457 = vadd.f32 %v2399, %v2430
      %v2458 = vadd.f32 %v2399, %v2434
      %v2459 = vadd.f32 %v2403, %v2430
      %v2460 = vadd.f32 %v2403, %v2434
      %v2461 = vadd.f32 %v2407, %v2430
      %v2462 = vadd.f32 %v2407, %v2434
      %v2463 = vadd.f32 %v2411, %v2430
      %v2464 = vadd.f32 %v2411, %v2434
      %v2465 = vadd.f32 %v2415, %v2430
      %v2466 = vadd.f32 %v2415, %v2434
      %vm2467 = vcmp.ge.f32.partialorder %v2435, 0.0
      %vm2468 = vcmp.ge.f32.partialorder %v2436, 0.0
      %vm2469 = vcmp.ge.f32.partialorder %v2437, 0.0
      %vm2470 = vcmp.ge.f32.partialorder %v2438, 0.0
      %vm2471 = vcmp.ge.f32.partialorder %v2439, 0.0
      %vm2472 = vcmp.ge.f32.partialorder %v2440, 0.0
      %vm2473 = vcmp.ge.f32.partialorder %v2441, 0.0
      %vm2474 = vcmp.ge.f32.partialorder %v2442, 0.0
      %vm2475 = vcmp.ge.f32.partialorder %v2443, 0.0
      %vm2476 = vcmp.ge.f32.partialorder %v2444, 0.0
      %vm2477 = vcmp.ge.f32.partialorder %v2445, 0.0
      %vm2478 = vcmp.ge.f32.partialorder %v2446, 0.0
      %vm2479 = vcmp.ge.f32.partialorder %v2447, 0.0
      %vm2480 = vcmp.ge.f32.partialorder %v2448, 0.0
      %vm2481 = vcmp.ge.f32.partialorder %v2449, 0.0
      %vm2482 = vcmp.ge.f32.partialorder %v2450, 0.0
      %vm2483 = vcmp.ge.f32.partialorder %v2451, 0.0
      %vm2484 = vcmp.ge.f32.partialorder %v2452, 0.0
      %vm2485 = vcmp.ge.f32.partialorder %v2453, 0.0
      %vm2486 = vcmp.ge.f32.partialorder %v2454, 0.0
      %vm2487 = vcmp.ge.f32.partialorder %v2455, 0.0
      %vm2488 = vcmp.ge.f32.partialorder %v2456, 0.0
      %vm2489 = vcmp.ge.f32.partialorder %v2457, 0.0
      %vm2490 = vcmp.ge.f32.partialorder %v2458, 0.0
      %vm2491 = vcmp.ge.f32.partialorder %v2459, 0.0
      %vm2492 = vcmp.ge.f32.partialorder %v2460, 0.0
      %vm2493 = vcmp.ge.f32.partialorder %v2461, 0.0
      %vm2494 = vcmp.ge.f32.partialorder %v2462, 0.0
      %vm2495 = vcmp.ge.f32.partialorder %v2463, 0.0
      %vm2496 = vcmp.ge.f32.partialorder %v2464, 0.0
      %vm2497 = vcmp.ge.f32.partialorder %v2465, 0.0
      %vm2498 = vcmp.ge.f32.partialorder %v2466, 0.0
      %v2499 = vmul.f32 %v2435, 0.2
      %v2500 = vmul.f32 %v2436, 0.2
      %v2501 = vmul.f32 %v2437, 0.2
      %v2502 = vmul.f32 %v2438, 0.2
      %v2503 = vmul.f32 %v2439, 0.2
      %v2504 = vmul.f32 %v2440, 0.2
      %v2505 = vmul.f32 %v2441, 0.2
      %v2506 = vmul.f32 %v2442, 0.2
      %v2507 = vmul.f32 %v2443, 0.2
      %v2508 = vmul.f32 %v2444, 0.2
      %v2509 = vmul.f32 %v2445, 0.2
      %v2510 = vmul.f32 %v2446, 0.2
      %v2511 = vmul.f32 %v2447, 0.2
      %v2512 = vmul.f32 %v2448, 0.2
      %v2513 = vmul.f32 %v2449, 0.2
      %v2514 = vmul.f32 %v2450, 0.2
      %v2515 = vmul.f32 %v2451, 0.2
      %v2516 = vmul.f32 %v2452, 0.2
      %v2517 = vmul.f32 %v2453, 0.2
      %v2518 = vmul.f32 %v2454, 0.2
      %v2519 = vmul.f32 %v2455, 0.2
      %v2520 = vmul.f32 %v2456, 0.2
      %v2521 = vmul.f32 %v2457, 0.2
      %v2522 = vmul.f32 %v2458, 0.2
      %v2523 = vmul.f32 %v2459, 0.2
      %v2524 = vmul.f32 %v2460, 0.2
      %v2525 = vmul.f32 %v2461, 0.2
      %v2526 = vmul.f32 %v2462, 0.2
      %v2527 = vmul.f32 %v2463, 0.2
      %v2528 = vmul.f32 %v2464, 0.2
      %v2529 = vmul.f32 %v2465, 0.2
      %v2530 = vmul.f32 %v2466, 0.2
      %v2531 = vsel %vm2467, %v2435, %v2499
      %v2532 = vsel %vm2468, %v2436, %v2500
      %v2533 = vsel %vm2469, %v2437, %v2501
      %v2534 = vsel %vm2470, %v2438, %v2502
      %v2535 = vsel %vm2471, %v2439, %v2503
      %v2536 = vsel %vm2472, %v2440, %v2504
      %v2537 = vsel %vm2473, %v2441, %v2505
      %v2538 = vsel %vm2474, %v2442, %v2506
      %v2539 = vsel %vm2475, %v2443, %v2507
      %v2540 = vsel %vm2476, %v2444, %v2508
      %v2541 = vsel %vm2477, %v2445, %v2509
      %v2542 = vsel %vm2478, %v2446, %v2510
      %v2543 = vsel %vm2479, %v2447, %v2511
      %v2544 = vsel %vm2480, %v2448, %v2512
      %v2545 = vsel %vm2481, %v2449, %v2513
      %v2546 = vsel %vm2482, %v2450, %v2514
      %v2547 = vsel %vm2483, %v2451, %v2515
      %v2548 = vsel %vm2484, %v2452, %v2516
      %v2549 = vsel %vm2485, %v2453, %v2517
      %v2550 = vsel %vm2486, %v2454, %v2518
      %v2551 = vsel %vm2487, %v2455, %v2519
      %v2552 = vsel %vm2488, %v2456, %v2520
      %v2553 = vsel %vm2489, %v2457, %v2521
      %v2554 = vsel %vm2490, %v2458, %v2522
      %v2555 = vsel %vm2491, %v2459, %v2523
      %v2556 = vsel %vm2492, %v2460, %v2524
      %v2557 = vsel %vm2493, %v2461, %v2525
      %v2558 = vsel %vm2494, %v2462, %v2526
      %v2559 = vsel %vm2495, %v2463, %v2527
      %v2560 = vsel %vm2496, %v2464, %v2528
      %v2561 = vsel %vm2497, %v2465, %v2529
      %v2562 = vsel %vm2498, %v2466, %v2530
      %v2563 = vsel %vm326, %v2531, -1e+30
      %v2564 = vsel %vm327, %v2532, -1e+30
      %v2565 = vsel %vm328, %v2533, -1e+30
      %v2566 = vsel %vm329, %v2534, -1e+30
      %v2567 = vsel %vm330, %v2535, -1e+30
      %v2568 = vsel %vm331, %v2536, -1e+30
      %v2569 = vsel %vm332, %v2537, -1e+30
      %v2570 = vsel %vm333, %v2538, -1e+30
      %v2571 = vsel %vm334, %v2539, -1e+30
      %v2572 = vsel %vm335, %v2540, -1e+30
      %v2573 = vsel %vm336, %v2541, -1e+30
      %v2574 = vsel %vm337, %v2542, -1e+30
      %v2575 = vsel %vm338, %v2543, -1e+30
      %v2576 = vsel %vm339, %v2544, -1e+30
      %v2577 = vsel %vm340, %v2545, -1e+30
      %v2578 = vsel %vm341, %v2546, -1e+30
      %v2579 = vsel %vm342, %v2547, -1e+30
      %v2580 = vsel %vm343, %v2548, -1e+30
      %v2581 = vsel %vm344, %v2549, -1e+30
      %v2582 = vsel %vm345, %v2550, -1e+30
      %v2583 = vsel %vm346, %v2551, -1e+30
      %v2584 = vsel %vm347, %v2552, -1e+30
      %v2585 = vsel %vm348, %v2553, -1e+30
      %v2586 = vsel %vm349, %v2554, -1e+30
      %v2587 = vsel %vm350, %v2555, -1e+30
      %v2588 = vsel %vm351, %v2556, -1e+30
      %v2589 = vsel %vm352, %v2557, -1e+30
      %v2590 = vsel %vm353, %v2558, -1e+30
      %v2591 = vsel %vm354, %v2559, -1e+30
      %v2592 = vsel %vm355, %v2560, -1e+30
      %v2593 = vsel %vm356, %v2561, -1e+30
      %v2594 = vsel %vm357, %v2562, -1e+30
      %v2595 = vmax.f32 %v2563, %v2564
      %2596 = vmax.xlane.f32.xlu0 %v2595
      %v2597 = vpop.xlane.xlu0 %2596
      %v2598 = vmax.f32 %v2565, %v2566
      %2599 = vmax.xlane.f32.xlu0 %v2598
      %v2600 = vpop.xlane.xlu0 %2599
      %v2601 = vmax.f32 %v2567, %v2568
      %2602 = vmax.xlane.f32.xlu0 %v2601
      %v2603 = vpop.xlane.xlu0 %2602
      %v2604 = vmax.f32 %v2569, %v2570
      %2605 = vmax.xlane.f32.xlu0 %v2604
      %v2606 = vpop.xlane.xlu0 %2605
      %v2607 = vmax.f32 %v2571, %v2572
      %2608 = vmax.xlane.f32.xlu0 %v2607
      %v2609 = vpop.xlane.xlu0 %2608
      %v2610 = vmax.f32 %v2573, %v2574
      %2611 = vmax.xlane.f32.xlu0 %v2610
      %v2612 = vpop.xlane.xlu0 %2611
      %v2613 = vmax.f32 %v2575, %v2576
      %2614 = vmax.xlane.f32.xlu0 %v2613
      %v2615 = vpop.xlane.xlu0 %2614
      %v2616 = vmax.f32 %v2577, %v2578
      %2617 = vmax.xlane.f32.xlu0 %v2616
      %v2618 = vpop.xlane.xlu0 %2617
      %v2619 = vmax.f32 %v2579, %v2580
      %2620 = vmax.xlane.f32.xlu0 %v2619
      %v2621 = vpop.xlane.xlu0 %2620
      %v2622 = vmax.f32 %v2581, %v2582
      %2623 = vmax.xlane.f32.xlu0 %v2622
      %v2624 = vpop.xlane.xlu0 %2623
      %v2625 = vmax.f32 %v2583, %v2584
      %2626 = vmax.xlane.f32.xlu0 %v2625
      %v2627 = vpop.xlane.xlu0 %2626
      %v2628 = vmax.f32 %v2585, %v2586
      %2629 = vmax.xlane.f32.xlu0 %v2628
      %v2630 = vpop.xlane.xlu0 %2629
      %v2631 = vmax.f32 %v2587, %v2588
      %2632 = vmax.xlane.f32.xlu0 %v2631
      %v2633 = vpop.xlane.xlu0 %2632
      %v2634 = vmax.f32 %v2589, %v2590
      %2635 = vmax.xlane.f32.xlu0 %v2634
      %v2636 = vpop.xlane.xlu0 %2635
      %v2637 = vmax.f32 %v2591, %v2592
      %2638 = vmax.xlane.f32.xlu0 %v2637
      %v2639 = vpop.xlane.xlu0 %2638
      %v2640 = vmax.f32 %v2593, %v2594
      %2641 = vmax.xlane.f32.xlu0 %v2640
      %v2642 = vpop.xlane.xlu0 %2641
      %v2643 = vsub.f32 %v2563, %v2597
      %v2644 = vsub.f32 %v2564, %v2597
      %v2645 = vsub.f32 %v2565, %v2600
      %v2646 = vsub.f32 %v2566, %v2600
      %v2647 = vsub.f32 %v2567, %v2603
      %v2648 = vsub.f32 %v2568, %v2603
      %v2649 = vsub.f32 %v2569, %v2606
      %v2650 = vsub.f32 %v2570, %v2606
      %v2651 = vsub.f32 %v2571, %v2609
      %v2652 = vsub.f32 %v2572, %v2609
      %v2653 = vsub.f32 %v2573, %v2612
      %v2654 = vsub.f32 %v2574, %v2612
      %v2655 = vsub.f32 %v2575, %v2615
      %v2656 = vsub.f32 %v2576, %v2615
      %v2657 = vsub.f32 %v2577, %v2618
      %v2658 = vsub.f32 %v2578, %v2618
      %v2659 = vsub.f32 %v2579, %v2621
      %v2660 = vsub.f32 %v2580, %v2621
      %v2661 = vsub.f32 %v2581, %v2624
      %v2662 = vsub.f32 %v2582, %v2624
      %v2663 = vsub.f32 %v2583, %v2627
      %v2664 = vsub.f32 %v2584, %v2627
      %v2665 = vsub.f32 %v2585, %v2630
      %v2666 = vsub.f32 %v2586, %v2630
      %v2667 = vsub.f32 %v2587, %v2633
      %v2668 = vsub.f32 %v2588, %v2633
      %v2669 = vsub.f32 %v2589, %v2636
      %v2670 = vsub.f32 %v2590, %v2636
      %v2671 = vsub.f32 %v2591, %v2639
      %v2672 = vsub.f32 %v2592, %v2639
      %v2673 = vsub.f32 %v2593, %v2642
      %v2674 = vsub.f32 %v2594, %v2642
      %v2675 = vmul.f32 %v2643, 1.442695
      %v2676 = vpow.pop %v2675
      %v2677 = vmul.f32 %v2644, 1.442695
      %v2678 = vpow.pop %v2677
      %v2679 = vmul.f32 %v2645, 1.442695
      %v2680 = vpow.pop %v2679
      %v2681 = vmul.f32 %v2646, 1.442695
      %v2682 = vpow.pop %v2681
      %v2683 = vmul.f32 %v2647, 1.442695
      %v2684 = vpow.pop %v2683
      %v2685 = vmul.f32 %v2648, 1.442695
      %v2686 = vpow.pop %v2685
      %v2687 = vmul.f32 %v2649, 1.442695
      %v2688 = vpow.pop %v2687
      %v2689 = vmul.f32 %v2650, 1.442695
      %v2690 = vpow.pop %v2689
      %v2691 = vmul.f32 %v2651, 1.442695
      %v2692 = vpow.pop %v2691
      %v2693 = vmul.f32 %v2652, 1.442695
      %v2694 = vpow.pop %v2693
      %v2695 = vmul.f32 %v2653, 1.442695
      %v2696 = vpow.pop %v2695
      %v2697 = vmul.f32 %v2654, 1.442695
      %v2698 = vpow.pop %v2697
      %v2699 = vmul.f32 %v2655, 1.442695
      %v2700 = vpow.pop %v2699
      %v2701 = vmul.f32 %v2656, 1.442695
      %v2702 = vpow.pop %v2701
      %v2703 = vmul.f32 %v2657, 1.442695
      %v2704 = vpow.pop %v2703
      %v2705 = vmul.f32 %v2658, 1.442695
      %v2706 = vpow.pop %v2705
      %v2707 = vmul.f32 %v2659, 1.442695
      %v2708 = vpow.pop %v2707
      %v2709 = vmul.f32 %v2660, 1.442695
      %v2710 = vpow.pop %v2709
      %v2711 = vmul.f32 %v2661, 1.442695
      %v2712 = vpow.pop %v2711
      %v2713 = vmul.f32 %v2662, 1.442695
      %v2714 = vpow.pop %v2713
      %v2715 = vmul.f32 %v2663, 1.442695
      %v2716 = vpow.pop %v2715
      %v2717 = vmul.f32 %v2664, 1.442695
      %v2718 = vpow.pop %v2717
      %v2719 = vmul.f32 %v2665, 1.442695
      %v2720 = vpow.pop %v2719
      %v2721 = vmul.f32 %v2666, 1.442695
      %v2722 = vpow.pop %v2721
      %v2723 = vmul.f32 %v2667, 1.442695
      %v2724 = vpow.pop %v2723
      %v2725 = vmul.f32 %v2668, 1.442695
      %v2726 = vpow.pop %v2725
      %v2727 = vmul.f32 %v2669, 1.442695
      %v2728 = vpow.pop %v2727
      %v2729 = vmul.f32 %v2670, 1.442695
      %v2730 = vpow.pop %v2729
      %v2731 = vmul.f32 %v2671, 1.442695
      %v2732 = vpow.pop %v2731
      %v2733 = vmul.f32 %v2672, 1.442695
      %v2734 = vpow.pop %v2733
      %v2735 = vmul.f32 %v2673, 1.442695
      %v2736 = vpow.pop %v2735
      %v2737 = vmul.f32 %v2674, 1.442695
      %v2738 = vpow.pop %v2737
      %v2739 = vadd.f32 %v2676, %v2678
      %2740 = vadd.xlane.f32.xlu0 %v2739
      %v2741 = vpop.xlane.xlu0 %2740
      %v2742 = vadd.f32 %v2680, %v2682
      %2743 = vadd.xlane.f32.xlu0 %v2742
      %v2744 = vpop.xlane.xlu0 %2743
      %v2745 = vadd.f32 %v2684, %v2686
      %2746 = vadd.xlane.f32.xlu0 %v2745
      %v2747 = vpop.xlane.xlu0 %2746
      %v2748 = vadd.f32 %v2688, %v2690
      %2749 = vadd.xlane.f32.xlu0 %v2748
      %v2750 = vpop.xlane.xlu0 %2749
      %v2751 = vadd.f32 %v2692, %v2694
      %2752 = vadd.xlane.f32.xlu0 %v2751
      %v2753 = vpop.xlane.xlu0 %2752
      %v2754 = vadd.f32 %v2696, %v2698
      %2755 = vadd.xlane.f32.xlu0 %v2754
      %v2756 = vpop.xlane.xlu0 %2755
      %v2757 = vadd.f32 %v2700, %v2702
      %2758 = vadd.xlane.f32.xlu0 %v2757
      %v2759 = vpop.xlane.xlu0 %2758
      %v2760 = vadd.f32 %v2704, %v2706
      %2761 = vadd.xlane.f32.xlu0 %v2760
      %v2762 = vpop.xlane.xlu0 %2761
      %v2763 = vadd.f32 %v2708, %v2710
      %2764 = vadd.xlane.f32.xlu0 %v2763
      %v2765 = vpop.xlane.xlu0 %2764
      %v2766 = vadd.f32 %v2712, %v2714
      %2767 = vadd.xlane.f32.xlu0 %v2766
      %v2768 = vpop.xlane.xlu0 %2767
      %v2769 = vadd.f32 %v2716, %v2718
      %2770 = vadd.xlane.f32.xlu0 %v2769
      %v2771 = vpop.xlane.xlu0 %2770
      %v2772 = vadd.f32 %v2720, %v2722
      %2773 = vadd.xlane.f32.xlu0 %v2772
      %v2774 = vpop.xlane.xlu0 %2773
      %v2775 = vadd.f32 %v2724, %v2726
      %2776 = vadd.xlane.f32.xlu0 %v2775
      %v2777 = vpop.xlane.xlu0 %2776
      %v2778 = vadd.f32 %v2728, %v2730
      %2779 = vadd.xlane.f32.xlu0 %v2778
      %v2780 = vpop.xlane.xlu0 %2779
      %v2781 = vadd.f32 %v2732, %v2734
      %2782 = vadd.xlane.f32.xlu0 %v2781
      %v2783 = vpop.xlane.xlu0 %2782
      %v2784 = vadd.f32 %v2736, %v2738
      %2785 = vadd.xlane.f32.xlu0 %v2784
      %v2786 = vpop.xlane.xlu0 %2785
      %v2787 = vpack.c.bf16 %v2680, %v2676
      %v2788 = vpack.c.bf16 %v2682, %v2678
      %v2789 = vpack.c.bf16 %v2688, %v2684
      %v2790 = vpack.c.bf16 %v2690, %v2686
      %v2791 = vpack.c.bf16 %v2696, %v2692
      %v2792 = vpack.c.bf16 %v2698, %v2694
      %v2793 = vpack.c.bf16 %v2704, %v2700
      %v2794 = vpack.c.bf16 %v2706, %v2702
      %v2795 = vpack.c.bf16 %v2712, %v2708
      %v2796 = vpack.c.bf16 %v2714, %v2710
      %v2797 = vpack.c.bf16 %v2720, %v2716
      %v2798 = vpack.c.bf16 %v2722, %v2718
      %v2799 = vpack.c.bf16 %v2728, %v2724
      %v2800 = vpack.c.bf16 %v2730, %v2726
      %v2801 = vpack.c.bf16 %v2736, %v2732
      %v2802 = vpack.c.bf16 %v2738, %v2734
      %2803 = vrot.lane.b32.xlu0 %v938, 80
      %v2804 = vpop.permute.xlu0 %2803
      %2805 = vrot.lane.b32.xlu0 %v939, 80
      %v2806 = vpop.permute.xlu0 %2805
      %2807 = vrot.lane.b32.xlu0 %v940, 80
      %v2808 = vpop.permute.xlu0 %2807
      %2809 = vrot.lane.b32.xlu0 %v941, 80
      %v2810 = vpop.permute.xlu0 %2809
      %2811 = vrot.lane.b32.xlu0 %v942, 80
      %v2812 = vpop.permute.xlu0 %2811
      %2813 = vrot.lane.b32.xlu0 %v943, 80
      %v2814 = vpop.permute.xlu0 %2813
      %2815 = vrot.lane.b32.xlu0 %v944, 80
      %v2816 = vpop.permute.xlu0 %2815
      %2817 = vrot.lane.b32.xlu0 %v945, 80
      %v2818 = vpop.permute.xlu0 %2817
      %2819 = vrot.lane.b32.xlu0 %v946, 80
      %v2820 = vpop.permute.xlu0 %2819
      %2821 = vrot.lane.b32.xlu0 %v947, 80
      %v2822 = vpop.permute.xlu0 %2821
      %2823 = vrot.lane.b32.xlu0 %v948, 80
      %v2824 = vpop.permute.xlu0 %2823
      %2825 = vrot.lane.b32.xlu0 %v949, 80
      %v2826 = vpop.permute.xlu0 %2825
      %2827 = vrot.lane.b32.xlu0 %v950, 80
      %v2828 = vpop.permute.xlu0 %2827
      %2829 = vrot.lane.b32.xlu0 %v951, 80
      %v2830 = vpop.permute.xlu0 %2829
      %2831 = vrot.lane.b32.xlu0 %v952, 80
      %v2832 = vpop.permute.xlu0 %2831
      %2833 = vrot.lane.b32.xlu0 %v953, 80
      %v2834 = vpop.permute.xlu0 %2833
      %2851 = vmatprep.subr.bf16.mxu0 0
      %2852 = vmatpush1.bf16.msra.mxu0 %v2818
      %2853 = vmatprep.subr.bf16.mxu0 0
      %2854 = vmatpush1.bf16.msra.mxu0 %v2816
      %2855 = vmatprep.subr.bf16.mxu0 0
      %2856 = vmatpush1.bf16.msra.mxu0 %v2814
      %2857 = vmatprep.subr.bf16.mxu0 0
      %2858 = vmatpush1.bf16.msra.mxu0 %v2812
      %2859 = vmatprep.subr.bf16.mxu0 0
      %2860 = vmatpush1.bf16.msra.mxu0 %v2810
      %2861 = vmatprep.subr.bf16.mxu0 0
      %2862 = vmatpush1.bf16.msra.mxu0 %v2808
      %2863 = vmatprep.subr.bf16.mxu0 0
      %2864 = vmatpush1.bf16.msra.mxu0 %v2806
      %2865 = vmatprep.subr.bf16.mxu0 0
      %2866 = vmatpush1.bf16.msra.mxu0 %v2804
      %2867 = vmatprep.subr.bf16.mxu0 0
      %2868 = vmatpush2.bf16.msra.mxu0 %v2834
      %2869 = vmatprep.subr.bf16.mxu0 0
      %2870 = vmatpush2.bf16.msra.mxu0 %v2832
      %2871 = vmatprep.subr.bf16.mxu0 0
      %2872 = vmatpush2.bf16.msra.mxu0 %v2830
      %2873 = vmatprep.subr.bf16.mxu0 0
      %2874 = vmatpush2.bf16.msra.mxu0 %v2828
      %2875 = vmatprep.subr.bf16.mxu0 0
      %2876 = vmatpush2.bf16.msra.mxu0 %v2826
      %2877 = vmatprep.subr.bf16.mxu0 0
      %2878 = vmatpush2.bf16.msra.mxu0 %v2824
      %2879 = vmatprep.subr.bf16.mxu0 0
      %2880 = vmatpush2.bf16.msra.mxu0 %v2822
      %2881 = vmatprep.subr.bf16.mxu0 0
      %2882 = vmatpush2.bf16.msra.mxu0 %v2820
      %2883 = vmatprep.mubr.bf16.mxu0 %v2788
      %2884 = vmatmul.mubr.bf16.gmra.mxu0 %v2787
      %v2885 = vpop.f32.mrf.mxu0
      %v2886 = vadd.f32 0.0, %v2885
      %v2887 = vpop.f32.mrf.mxu0
      %v2888 = vpop.f32.mrf.mxu0
      %v2889 = vadd.f32 0.0, %v2888
      %v2890 = vpop.f32.mrf.mxu0
      %2891 = vmatprep.mubr.bf16.mxu0 %v2790
      %2892 = vmatmul.mubr.bf16.gmra.mxu0 %v2789
      %v2893 = vpop.f32.mrf.mxu0
      %v2894 = vadd.f32 0.0, %v2893
      %v2895 = vpop.f32.mrf.mxu0
      %v2896 = vpop.f32.mrf.mxu0
      %v2897 = vadd.f32 0.0, %v2896
      %v2898 = vpop.f32.mrf.mxu0
      %2899 = vmatprep.mubr.bf16.mxu0 %v2792
      %2900 = vmatmul.mubr.bf16.gmra.mxu0 %v2791
      %v2901 = vpop.f32.mrf.mxu0
      %v2902 = vadd.f32 0.0, %v2901
      %v2903 = vpop.f32.mrf.mxu0
      %v2904 = vpop.f32.mrf.mxu0
      %v2905 = vadd.f32 0.0, %v2904
      %v2906 = vpop.f32.mrf.mxu0
      %2907 = vmatprep.mubr.bf16.mxu0 %v2794
      %2908 = vmatmul.mubr.bf16.gmra.mxu0 %v2793
      %v2909 = vpop.f32.mrf.mxu0
      %v2910 = vadd.f32 0.0, %v2909
      %v2911 = vpop.f32.mrf.mxu0
      %v2912 = vpop.f32.mrf.mxu0
      %v2913 = vadd.f32 0.0, %v2912
      %v2914 = vpop.f32.mrf.mxu0
      %2915 = vmatprep.mubr.bf16.mxu0 %v2796
      %2916 = vmatmul.mubr.bf16.gmra.mxu0 %v2795
      %v2917 = vpop.f32.mrf.mxu0
      %v2918 = vadd.f32 0.0, %v2917
      %v2919 = vpop.f32.mrf.mxu0
      %v2920 = vpop.f32.mrf.mxu0
      %v2921 = vadd.f32 0.0, %v2920
      %v2922 = vpop.f32.mrf.mxu0
      %2923 = vmatprep.mubr.bf16.mxu0 %v2798
      %2924 = vmatmul.mubr.bf16.gmra.mxu0 %v2797
      %v2925 = vpop.f32.mrf.mxu0
      %v2926 = vadd.f32 0.0, %v2925
      %v2927 = vpop.f32.mrf.mxu0
      %v2928 = vpop.f32.mrf.mxu0
      %v2929 = vadd.f32 0.0, %v2928
      %v2930 = vpop.f32.mrf.mxu0
      %2931 = vmatprep.mubr.bf16.mxu0 %v2800
      %2932 = vmatmul.mubr.bf16.gmra.mxu0 %v2799
      %v2933 = vpop.f32.mrf.mxu0
      %v2934 = vadd.f32 0.0, %v2933
      %v2935 = vpop.f32.mrf.mxu0
      %v2936 = vpop.f32.mrf.mxu0
      %v2937 = vadd.f32 0.0, %v2936
      %v2938 = vpop.f32.mrf.mxu0
      %2939 = vmatprep.mubr.bf16.mxu0 %v2802
      %2940 = vmatmul.mubr.bf16.gmra.mxu0 %v2801
      %v2941 = vpop.f32.mrf.mxu0
      %v2942 = vadd.f32 0.0, %v2941
      %v2943 = vpop.f32.mrf.mxu0
      %v2944 = vpop.f32.mrf.mxu0
      %v2945 = vadd.f32 0.0, %v2944
      %v2946 = vpop.f32.mrf.mxu0
      %2947 = vdwg.mxu0
      %v2948 = vrcp.pop %v2741
      %v2949 = vrcp.pop %v2744
      %v2950 = vrcp.pop %v2747
      %v2951 = vrcp.pop %v2750
      %v2952 = vrcp.pop %v2753
      %v2953 = vrcp.pop %v2756
      %v2954 = vrcp.pop %v2759
      %v2955 = vrcp.pop %v2762
      %v2956 = vrcp.pop %v2765
      %v2957 = vrcp.pop %v2768
      %v2958 = vrcp.pop %v2771
      %v2959 = vrcp.pop %v2774
      %v2960 = vrcp.pop %v2777
      %v2961 = vrcp.pop %v2780
      %v2962 = vrcp.pop %v2783
      %v2963 = vrcp.pop %v2786
      %v2964 = vmul.f32 %v2886, %v2948
      %v2965 = vmul.f32 %v2889, %v2949
      %v2966 = vmul.f32 %v2894, %v2950
      %v2967 = vmul.f32 %v2897, %v2951
      %v2968 = vmul.f32 %v2902, %v2952
      %v2969 = vmul.f32 %v2905, %v2953
      %v2970 = vmul.f32 %v2910, %v2954
      %v2971 = vmul.f32 %v2913, %v2955
      %v2972 = vmul.f32 %v2918, %v2956
      %v2973 = vmul.f32 %v2921, %v2957
      %v2974 = vmul.f32 %v2926, %v2958
      %v2975 = vmul.f32 %v2929, %v2959
      %v2976 = vmul.f32 %v2934, %v2960
      %v2977 = vmul.f32 %v2937, %v2961
      %v2978 = vmul.f32 %v2942, %v2962
      %v2979 = vmul.f32 %v2945, %v2963
      %2996 = vrot.lane.b32.xlu0 %v1710, 16
      %v2997 = vpop.permute.xlu0 %2996
      %2998 = vrot.lane.b32.xlu0 %v1711, 16
      %v2999 = vpop.permute.xlu0 %2998
      %3000 = vrot.lane.b32.xlu0 %v1712, 16
      %v3001 = vpop.permute.xlu0 %3000
      %3002 = vrot.lane.b32.xlu0 %v1713, 16
      %v3003 = vpop.permute.xlu0 %3002
      %3004 = vrot.lane.b32.xlu0 %v1714, 16
      %v3005 = vpop.permute.xlu0 %3004
      %3006 = vrot.lane.b32.xlu0 %v1715, 16
      %v3007 = vpop.permute.xlu0 %3006
      %3008 = vrot.lane.b32.xlu0 %v1716, 16
      %v3009 = vpop.permute.xlu0 %3008
      %3010 = vrot.lane.b32.xlu0 %v1717, 16
      %v3011 = vpop.permute.xlu0 %3010
      %3012 = vrot.lane.b32.xlu0 %v1718, 16
      %v3013 = vpop.permute.xlu0 %3012
      %3014 = vrot.lane.b32.xlu0 %v1719, 16
      %v3015 = vpop.permute.xlu0 %3014
      %3016 = vrot.lane.b32.xlu0 %v1720, 16
      %v3017 = vpop.permute.xlu0 %3016
      %3018 = vrot.lane.b32.xlu0 %v1721, 16
      %v3019 = vpop.permute.xlu0 %3018
      %3020 = vrot.lane.b32.xlu0 %v1722, 16
      %v3021 = vpop.permute.xlu0 %3020
      %3022 = vrot.lane.b32.xlu0 %v1723, 16
      %v3023 = vpop.permute.xlu0 %3022
      %3024 = vrot.lane.b32.xlu0 %v1724, 16
      %v3025 = vpop.permute.xlu0 %3024
      %3026 = vrot.lane.b32.xlu0 %v1725, 16
      %v3027 = vpop.permute.xlu0 %3026
      %3060 = vrot.lane.b32.xlu0 %v2337, 32
      %v3061 = vpop.permute.xlu0 %3060
      %3062 = vrot.lane.b32.xlu0 %v2338, 32
      %v3063 = vpop.permute.xlu0 %3062
      %3064 = vrot.lane.b32.xlu0 %v2339, 32
      %v3065 = vpop.permute.xlu0 %3064
      %3066 = vrot.lane.b32.xlu0 %v2340, 32
      %v3067 = vpop.permute.xlu0 %3066
      %3068 = vrot.lane.b32.xlu0 %v2341, 32
      %v3069 = vpop.permute.xlu0 %3068
      %3070 = vrot.lane.b32.xlu0 %v2342, 32
      %v3071 = vpop.permute.xlu0 %3070
      %3072 = vrot.lane.b32.xlu0 %v2343, 32
      %v3073 = vpop.permute.xlu0 %3072
      %3074 = vrot.lane.b32.xlu0 %v2344, 32
      %v3075 = vpop.permute.xlu0 %3074
      %3076 = vrot.lane.b32.xlu0 %v2345, 32
      %v3077 = vpop.permute.xlu0 %3076
      %3078 = vrot.lane.b32.xlu0 %v2346, 32
      %v3079 = vpop.permute.xlu0 %3078
      %3080 = vrot.lane.b32.xlu0 %v2347, 32
      %v3081 = vpop.permute.xlu0 %3080
      %3082 = vrot.lane.b32.xlu0 %v2348, 32
      %v3083 = vpop.permute.xlu0 %3082
      %3084 = vrot.lane.b32.xlu0 %v2349, 32
      %v3085 = vpop.permute.xlu0 %3084
      %3086 = vrot.lane.b32.xlu0 %v2350, 32
      %v3087 = vpop.permute.xlu0 %3086
      %3088 = vrot.lane.b32.xlu0 %v2351, 32
      %v3089 = vpop.permute.xlu0 %3088
      %3090 = vrot.lane.b32.xlu0 %v2352, 32
      %v3091 = vpop.permute.xlu0 %3090
      %3124 = vrot.lane.b32.xlu0 %v2964, 48
      %v3125 = vpop.permute.xlu0 %3124
      %3126 = vrot.lane.b32.xlu0 %v2965, 48
      %v3127 = vpop.permute.xlu0 %3126
      %3128 = vrot.lane.b32.xlu0 %v2966, 48
      %v3129 = vpop.permute.xlu0 %3128
      %3130 = vrot.lane.b32.xlu0 %v2967, 48
      %v3131 = vpop.permute.xlu0 %3130
      %3132 = vrot.lane.b32.xlu0 %v2968, 48
      %v3133 = vpop.permute.xlu0 %3132
      %3134 = vrot.lane.b32.xlu0 %v2969, 48
      %v3135 = vpop.permute.xlu0 %3134
      %3136 = vrot.lane.b32.xlu0 %v2970, 48
      %v3137 = vpop.permute.xlu0 %3136
      %3138 = vrot.lane.b32.xlu0 %v2971, 48
      %v3139 = vpop.permute.xlu0 %3138
      %3140 = vrot.lane.b32.xlu0 %v2972, 48
      %v3141 = vpop.permute.xlu0 %3140
      %3142 = vrot.lane.b32.xlu0 %v2973, 48
      %v3143 = vpop.permute.xlu0 %3142
      %3144 = vrot.lane.b32.xlu0 %v2974, 48
      %v3145 = vpop.permute.xlu0 %3144
      %3146 = vrot.lane.b32.xlu0 %v2975, 48
      %v3147 = vpop.permute.xlu0 %3146
      %3148 = vrot.lane.b32.xlu0 %v2976, 48
      %v3149 = vpop.permute.xlu0 %3148
      %3150 = vrot.lane.b32.xlu0 %v2977, 48
      %v3151 = vpop.permute.xlu0 %3150
      %3152 = vrot.lane.b32.xlu0 %v2978, 48
      %v3153 = vpop.permute.xlu0 %3152
      %3154 = vrot.lane.b32.xlu0 %v2979, 48
      %v3155 = vpop.permute.xlu0 %3154
      %vm3172 = vcmask 130048
      %v3173 = vsel %vm3172, %v1083, %v2997
      %v3174 = vsel %vm3172, %v1084, %v2999
      %v3175 = vsel %vm3172, %v1085, %v3001
      %v3176 = vsel %vm3172, %v1086, %v3003
      %v3177 = vsel %vm3172, %v1087, %v3005
      %v3178 = vsel %vm3172, %v1088, %v3007
      %v3179 = vsel %vm3172, %v1089, %v3009
      %v3180 = vsel %vm3172, %v1090, %v3011
      %v3181 = vsel %vm3172, %v1091, %v3013
      %v3182 = vsel %vm3172, %v1092, %v3015
      %v3183 = vsel %vm3172, %v1093, %v3017
      %v3184 = vsel %vm3172, %v1094, %v3019
      %v3185 = vsel %vm3172, %v1095, %v3021
      %v3186 = vsel %vm3172, %v1096, %v3023
      %v3187 = vsel %vm3172, %v1097, %v3025
      %v3188 = vsel %vm3172, %v1098, %v3027
      %vm3189 = vcmask 261120
      %v3190 = vsel %vm3189, %v3173, %v3061
      %v3191 = vsel %vm3189, %v3174, %v3063
      %v3192 = vsel %vm3189, %v3175, %v3065
      %v3193 = vsel %vm3189, %v3176, %v3067
      %v3194 = vsel %vm3189, %v3177, %v3069
      %v3195 = vsel %vm3189, %v3178, %v3071
      %v3196 = vsel %vm3189, %v3179, %v3073
      %v3197 = vsel %vm3189, %v3180, %v3075
      %v3198 = vsel %vm3189, %v3181, %v3077
      %v3199 = vsel %vm3189, %v3182, %v3079
      %v3200 = vsel %vm3189, %v3183, %v3081
      %v3201 = vsel %vm3189, %v3184, %v3083
      %v3202 = vsel %vm3189, %v3185, %v3085
      %v3203 = vsel %vm3189, %v3186, %v3087
      %v3204 = vsel %vm3189, %v3187, %v3089
      %v3205 = vsel %vm3189, %v3188, %v3091
      %vm3206 = vcmask 392192
      %v3207 = vsel %vm3206, %v3190, %v3125
      %v3208 = vsel %vm3206, %v3191, %v3127
      %v3209 = vsel %vm3206, %v3192, %v3129
      %v3210 = vsel %vm3206, %v3193, %v3131
      %v3211 = vsel %vm3206, %v3194, %v3133
      %v3212 = vsel %vm3206, %v3195, %v3135
      %v3213 = vsel %vm3206, %v3196, %v3137
      %v3214 = vsel %vm3206, %v3197, %v3139
      %v3215 = vsel %vm3206, %v3198, %v3141
      %v3216 = vsel %vm3206, %v3199, %v3143
      %v3217 = vsel %vm3206, %v3200, %v3145
      %v3218 = vsel %vm3206, %v3201, %v3147
      %v3219 = vsel %vm3206, %v3202, %v3149
      %v3220 = vsel %vm3206, %v3203, %v3151
      %v3221 = vsel %vm3206, %v3204, %v3153
      %v3222 = vsel %vm3206, %v3205, %v3155
      %v3223 = vld [vmem:[%s4] sm:$0x1]
      %v3225 = vlaneseq
      %v3226 = vshrl.u32 %v3225, 7
      %v3227 = vsub.s32 0, %v3226
      %v3228 = vrot.slane %v3223, %v3227
      %v3230 = vadd.f32 %v3207, %v3228
      %v3231 = vadd.f32 %v3208, %v3228
      %v3232 = vadd.f32 %v3209, %v3228
      %v3233 = vadd.f32 %v3210, %v3228
      %v3234 = vadd.f32 %v3211, %v3228
      %v3235 = vadd.f32 %v3212, %v3228
      %v3236 = vadd.f32 %v3213, %v3228
      %v3237 = vadd.f32 %v3214, %v3228
      %v3238 = vadd.f32 %v3215, %v3228
      %v3239 = vadd.f32 %v3216, %v3228
      %v3240 = vadd.f32 %v3217, %v3228
      %v3241 = vadd.f32 %v3218, %v3228
      %v3242 = vadd.f32 %v3219, %v3228
      %v3243 = vadd.f32 %v3220, %v3228
      %v3244 = vadd.f32 %v3221, %v3228
      %v3245 = vadd.f32 %v3222, %v3228
      %vm3246 = vcmask 523264
      %3247 = vst.msk [vmem:[%s251] sm:$0xff] %vm3246, %v3230
      %3248 = vst.msk [vmem:[%s251 + $0x8] sm:$0xff] %vm3246, %v3231
      %3249 = vst.msk [vmem:[%s251 + $0x10] sm:$0xff] %vm3246, %v3232
      %3250 = vst.msk [vmem:[%s251 + $0x18] sm:$0xff] %vm3246, %v3233
      %3251 = vst.msk [vmem:[%s251 + $0x20] sm:$0xff] %vm3246, %v3234
      %3252 = vst.msk [vmem:[%s251 + $0x28] sm:$0xff] %vm3246, %v3235
      %3253 = vst.msk [vmem:[%s251 + $0x30] sm:$0xff] %vm3246, %v3236
      %3254 = vst.msk [vmem:[%s251 + $0x38] sm:$0xff] %vm3246, %v3237
      %3255 = vst.msk [vmem:[%s251 + $0x40] sm:$0xff] %vm3246, %v3238
      %3256 = vst.msk [vmem:[%s251 + $0x48] sm:$0xff] %vm3246, %v3239
      %3257 = vst.msk [vmem:[%s251 + $0x50] sm:$0xff] %vm3246, %v3240
      %3258 = vst.msk [vmem:[%s251 + $0x58] sm:$0xff] %vm3246, %v3241
      %3259 = vst.msk [vmem:[%s251 + $0x60] sm:$0xff] %vm3246, %v3242
      %3260 = vst.msk [vmem:[%s251 + $0x68] sm:$0xff] %vm3246, %v3243
      %3261 = vst.msk [vmem:[%s251 + $0x70] sm:$0xff] %vm3246, %v3244
      %3262 = vst.msk [vmem:[%s251 + $0x78] sm:$0xff] %vm3246, %v3245
      %s3263 = smul.u32 16, %s16
      %p3264 = scmp.lt.s32.totalorder %s3263, 31
      %s3265 = scalar_select %p3264, %s3263, 31
      %s3266 = smul.addr %s3265, 8
      %s3267 = scalar_lea.vmem %s5, %s3266
      // Predicated region
      $region41: #{gat_conv_forward.3} parent=39 // pred_check
        %p3268 = pneg %p149
      $region42: #{gat_conv_forward.3} parent=39 // pred_check_branch
        %3270 = sbr.rel (%p3268) target = $region44
      $region43: #{gat_conv_forward.3} parent=39 // pred_region
        %s3271 = smul.u32 16, %s16
      $region44: #{gat_conv_forward.3} parent=39 // pred_fallthru
        _
    $region40: #{gat_conv_forward.3} parent=5 // pred_fallthru
      _
    %p3272 = scmp.le.s32.totalorder 2, %s11
    // Predicated region
    $region45: #{gat_conv_forward.3} parent=5 // pred_check
      %p3273 = pneg %p3272
    $region46: #{gat_conv_forward.3} parent=5 // pred_check_branch
      %3275 = sbr.rel (%p3273) target = $region48
    $region47: #{gat_conv_forward.3} parent=5 // pred_region
      %s3276 = ssub.s32 %s11, 2
      // Predicated region
      $region49: #{gat_conv_forward.3} parent=47 // pred_check
        %p3277 = pneg %p155
      $region50: #{gat_conv_forward.3} parent=47 // pred_check_branch
        %3279 = sbr.rel (%p3277) target = $region52
      $region51: #{gat_conv_forward.3} parent=47 // pred_region
        %s3280 = smul.u32 16, %s17
        %p3281 = scmp.lt.s32.totalorder %s3280, 31
        %s3282 = scalar_select %p3281, %s3280, 31
        %s3283 = smul.addr %s3282, 8
        %s3284 = scalar_lea.vmem %s5, %s3283
      $region52: #{gat_conv_forward.3} parent=47 // pred_fallthru
        _
    $region48: #{gat_conv_forward.3} parent=5 // pred_fallthru
      _
  $region6: #{gat_conv_forward.3} parent=0 // loop_footer
    %s15 = sadd.s32 1, %s11
  $region7: #{gat_conv_forward.3} parent=0 // loop_footer_branch
    %10 = sbr.rel target = $region3
  $region8: #{gat_conv_forward.3} parent=0 // loop_exit
    _

</llo_original>
